<compile_context>
chip_gen: v7x
topology: tpu7x:2x2x1
jax: 0.10.0
libtpu: 0.0.40
codegen_flags: <defaults>
</compile_context>

<pallas_src>
import jax
import jax.numpy as jnp
from jax import lax
from jax.experimental import pallas as pl
from jax.experimental.pallas import tpu as pltpu


def add_conv1x1_kernel(a_ref, b_ref, w_ref, o_ref):
    # a_ref, b_ref: (Cin, M) f32 (grid-invariant, channel-major = free NCHW view)
    # w_ref:        (Cin, TN) bf16 weight tile
    # o_ref:        (M, TN)  f32, lane-dense output tile
    x = (a_ref[...] + b_ref[...]).astype(jnp.bfloat16)
    o_ref[...] = lax.dot_general(
        x,
        w_ref[...],
        dimension_numbers=(((0,), (0,)), ((), ())),  # contract Cin on both
        preferred_element_type=jnp.float32,
    ).astype(o_ref.dtype)


def prepare_weight(weight):
    """One-time init step: PyTorch Conv2d 1x1 weight (Cout, Cin) f32 -> (Cin, Cout) bf16."""
    return jnp.transpose(weight, (1, 0)).astype(jnp.bfloat16)


def add_conv1x1(x1036, x1021, w_t_bf16, *, tn=1920):
    """x1036, x1021: (1, Cin, H, W) f32; w_t_bf16: (Cin, Cout) bf16 (pre-materialized)."""
    N, Cin, H, W = x1036.shape
    Cin_w, Cout = w_t_bf16.shape
    assert N == 1, "kernel written for N == 1 (as in the reference module)"
    assert Cin == Cin_w, f"channel mismatch: {Cin} vs {Cin_w}"
    assert Cout % tn == 0, f"tn={tn} must evenly divide Cout={Cout}"
    M = H * W
    grid = (Cout // tn,)

    # Free views: NCHW with N==1 is already channel-major.
    a = x1036.reshape(Cin, M)
    b = x1021.reshape(Cin, M)

    flops = 2 * M * Cin * Cout
    bytes_accessed = (
        a.size * a.dtype.itemsize
        + b.size * b.dtype.itemsize
        + w_t_bf16.size * w_t_bf16.dtype.itemsize
        + M * Cout * x1036.dtype.itemsize
    )

    out = pl.pallas_call(
        add_conv1x1_kernel,
        out_shape=jax.ShapeDtypeStruct((M, Cout), x1036.dtype),
        grid_spec=pltpu.PrefetchScalarGridSpec(
            num_scalar_prefetch=0,
            grid=grid,
            in_specs=[
                pl.BlockSpec((Cin, M), lambda j: (0, 0)),   # full a, grid-invariant
                pl.BlockSpec((Cin, M), lambda j: (0, 0)),   # full b, grid-invariant
                pl.BlockSpec((Cin, tn), lambda j: (0, j)),  # weight column tile
            ],
            out_specs=pl.BlockSpec((M, tn), lambda j: (0, j)),
        ),
        compiler_params=pltpu.CompilerParams(
            dimension_semantics=("parallel",),
        ),
        cost_estimate=pl.CostEstimate(
            flops=flops, transcendentals=0, bytes_accessed=bytes_accessed
        ),
    )(a, b, w_t_bf16)

    # (M, Cout) -> (1, Cout, H, W)  (only the small output gets re-laid-out)
    return jnp.transpose(out.reshape(H, W, Cout), (2, 0, 1)).reshape(N, Cout, H, W)


if __name__ == "__main__":
    key = jax.random.PRNGKey(0)
    k1, k2, k3 = jax.random.split(key, 3)

    N, Cin, H, W, Cout = 1, 640, 7, 7, 3840

    x1036 = jax.random.normal(k1, (N, Cin, H, W), dtype=jnp.float32)
    x1021 = jax.random.normal(k2, (N, Cin, H, W), dtype=jnp.float32)
    # Conv2d(640, 3840, kernel_size=1, bias=False) weight (Cout, Cin), kaiming-like init.
    fan_in = float(Cin)
    weight = jax.random.uniform(
        k3, (Cout, Cin), dtype=jnp.float32,
        minval=-(fan_in ** -0.5), maxval=(fan_in ** -0.5),
    )

    # Done once at "module init": transpose + bf16 cast of the parameter.
    w_prepped = jax.block_until_ready(prepare_weight(weight))

    out = add_conv1x1(x1036, x1021, w_prepped)
    out = jax.block_until_ready(out)

    # Reference in plain f32 JAX (1x1 conv == channel matmul). bf16 weights/activations
    # in the kernel => loosen tolerance vs the f32 reference.
    x_sum = x1036 + x1021
    ref = jnp.einsum("nchw,oc->nohw", x_sum, weight)
    assert out.shape == (N, Cout, H, W)
    max_err = float(jnp.max(jnp.abs(out - ref)))
    assert jnp.allclose(out, ref, atol=5e-2, rtol=5e-2), f"max abs err {max_err}"

    print("KERNEL_OK")
</pallas_src>

<mosaic_0001>
module attributes {stable_mosaic.version = 11 : i64} {
  func.func @add_conv1x1_kernel(%arg0: i32, %arg1: memref<640x49xf32, #tpu.memory_space<vmem>>, %arg2: memref<640x49xf32, #tpu.memory_space<vmem>>, %arg3: memref<640x1920xbf16, #tpu.memory_space<vmem>>, %arg4: memref<49x1920xf32, #tpu.memory_space<vmem>>) attributes {dimension_semantics = [#tpu.dimension_semantics<parallel>], iteration_bounds = array<i64: 2>, scalar_prefetch = 0 : i64, scratch_operands = 0 : i64, tpu.core_type = #tpu.core_type<tc>, window_params = [{pipeline_mode = #tpu.pipeline_mode<synchronous>, transform_indices = @transform_0, window_bounds = array<i64: 640, 49>}, {pipeline_mode = #tpu.pipeline_mode<synchronous>, transform_indices = @transform_1, window_bounds = array<i64: 640, 49>}, {transform_indices = @transform_2, window_bounds = array<i64: 640, 1920>}, {transform_indices = @transform_3, window_bounds = array<i64: 49, 1920>}]} {
    %c0 = arith.constant 0 : index
    %c0_0 = arith.constant 0 : index
    %0 = vector.load %arg1[%c0, %c0_0] : memref<640x49xf32, #tpu.memory_space<vmem>>, vector<640x49xf32>
    %c0_1 = arith.constant 0 : index
    %c0_2 = arith.constant 0 : index
    %1 = vector.load %arg2[%c0_1, %c0_2] : memref<640x49xf32, #tpu.memory_space<vmem>>, vector<640x49xf32>
    %2 = arith.addf %0, %1 : vector<640x49xf32>
    %3 = arith.truncf %2 : vector<640x49xf32> to vector<640x49xbf16>
    %c0_3 = arith.constant 0 : index
    %c0_4 = arith.constant 0 : index
    %4 = vector.load %arg3[%c0_3, %c0_4] : memref<640x1920xbf16, #tpu.memory_space<vmem>>, vector<640x1920xbf16>
    %cst = arith.constant dense<0.000000e+00> : vector<49x1920xf32>
    %5 = tpu.matmul %3, %4, %cst {dimension_numbers = #tpu.dot_dimension_numbers<[0], [0], [1], [1], [0, 1, 1, 1], [], []>} : vector<640x49xbf16>, vector<640x1920xbf16>, vector<49x1920xf32> -> vector<49x1920xf32>
    %c0_5 = arith.constant 0 : index
    %c0_6 = arith.constant 0 : index
    %6 = vector.load %arg4[%c0_5, %c0_6] : memref<49x1920xf32, #tpu.memory_space<vmem>>, vector<49x1920xf32>
    tpu.vector_store %arg4[%c0_5, %c0_6], %5 {strides = array<i32>} : memref<49x1920xf32, #tpu.memory_space<vmem>>, vector<49x1920xf32>,
    return
  }
  func.func @transform_0(%arg0: i32) -> (i32, i32) {
    %c0_i32 = arith.constant 0 : i32
    %c0_i32_0 = arith.constant 0 : i32
    %c0_i32_1 = arith.constant 0 : i32
    return %c0_i32, %c0_i32_0 : i32, i32
  }
  func.func @transform_1(%arg0: i32) -> (i32, i32) {
    %c0_i32 = arith.constant 0 : i32
    %c0_i32_0 = arith.constant 0 : i32
    %c0_i32_1 = arith.constant 0 : i32
    return %c0_i32, %c0_i32_0 : i32, i32
  }
  func.func @transform_2(%arg0: i32) -> (i32, i32) {
    %c0_i32 = arith.constant 0 : i32
    %c0_i32_0 = arith.constant 0 : i32
    return %c0_i32, %arg0 : i32, i32
  }
  func.func @transform_3(%arg0: i32) -> (i32, i32) {
    %c0_i32 = arith.constant 0 : i32
    %c0_i32_0 = arith.constant 0 : i32
    return %c0_i32, %arg0 : i32, i32
  }
}

</mosaic_0001>

<llo_original>
// kernel: tpu_custom_call.1
$region0: #{tpu_custom_call.1}
  #allocation0 [shape = 'u32[]', space=smem, size = 0x4, offset = 0x4, fixed_abs, tag = 'smem constant byte address 0x4 - core index']
  #allocation1 [shape = 'u32[144,128]{1,0:T(1,128)}', space=vmem, size = 0x12000, scoped, tag = 'internal scratch']
  %s0 = inlined_call_operand.vmem [shape: f32[640,49], index: 0, kind: input, shape index: {}]
  %s1 = inlined_call_operand.vmem [shape: f32[640,49], index: 1, kind: input, shape index: {}]
  %s2 = inlined_call_operand.hbm [shape: bf16[640,3840], index: 2, kind: input, shape index: {}]
  %s3 = inlined_call_operand.hbm [shape: f32[49,3840], index: 3, kind: output, shape index: {}]
  %s4 = sld [smem:[#allocation0]]
  $region49: #{tpu_custom_call.1} parent=0
    _
  %s6 = ssub.s32 1, %s4
  %s7 = scalar_select 0, %s6, %s4
  $region1: #{tpu_custom_call.1} parent=0
    #allocation2 [shape = 'u8[4915200]{0}', space=vmem, size = 0x4b0000, scoped, tag = 'input window, operand 2']
    #allocation3 [shape = 's32[2]{0}', space=sflag, size = 0x8, scoped, tag = 'scoped memory for tpu_custom_call.1']
    #allocation4 [shape = 's32[2]{0}', space=sflag, size = 0x8, scoped, tag = 'scoped memory for tpu_custom_call.1']
    #allocation5 [shape = 'u8[860160]{0}', space=vmem, size = 0xd2000, scoped, tag = 'output window, operand 0']
    %8 = vsyncpa [#allocation3], 0
    %s9 = scalar_lea.sflag [#allocation3], 1
    %10 = vsyncpa %s9, 0
    %11 = vsyncpa [#allocation4], 0
    %s12 = scalar_lea.sflag [#allocation4], 1
    %13 = vsyncpa %s12, 0
    loop: start=0, step=1, limit=4
    $region2: #{tpu_custom_call.1} parent=1 // loop_pre_header
      _
    $region3: #{tpu_custom_call.1} parent=1 // loop_header
      %s15 = sphi 0, %s19
      %p16 = scmp.ge.s32.totalorder %s15, 4
      %s23 = sphi 0, %s23
      %s25 = sphi 0, %s23
      %s26 = sphi 0, %s25
      %s40 = sphi 0, %s26
      %s44 = sphi 0, %s44
      %s46 = sphi 0, %s44
      %s47 = sphi 0, %s46
      %s61 = sphi 0, %s47
      %s67 = sphi 0, %s69
      %s70 = sphi 0, %s67
      %s71 = sphi 0, %s70
      %s87 = sphi 0, %s71
      %s93 = sphi 0, %s95
      %s96 = sphi 0, %s93
      %s97 = sphi 0, %s96
      %s113 = sphi 0, %s97
    $region4: #{tpu_custom_call.1} parent=1 // loop_header_branch
      %18 = sbr.rel (%p16) target = $region8
    $region5: #{tpu_custom_call.1} parent=1 // loop_body
      %s20 = ssub.s32 %s15, 1
      %s21 = ssub.s32 %s15, 2
      %s22 = sadd.s32 %s15, 1
      %s24 = sadd.s32 %s23, 1
      %p27 = scmp.eq.s32.totalorder %s15, 1
      %p28 = scmp.ne.s32.totalorder %s23, %s25
      %p29 = scmp.eq.s32.totalorder %s15, 0
      %p30 = por %p28, %p29
      %p31 = scmp.ne.s32.totalorder %s23, %s25
      %p32 = scmp.eq.s32.totalorder %s20, 1
      %p33 = por %p31, %p32
      %p34 = scmp.ne.s32.totalorder %s25, %s26
      %p35 = scmp.eq.s32.totalorder %s20, 0
      %p36 = por %p34, %p35
      %p37 = scmp.ne.s32.totalorder %s25, %s26
      %p38 = scmp.eq.s32.totalorder %s21, 1
      %p39 = por %p37, %p38
      %p41 = scmp.ne.s32.totalorder %s26, %s40
      %p42 = scmp.eq.s32.totalorder %s21, 0
      %p43 = por %p41, %p42
      %s45 = sadd.s32 %s44, 1
      %p48 = scmp.eq.s32.totalorder %s15, 1
      %p49 = scmp.ne.s32.totalorder %s44, %s46
      %p50 = scmp.eq.s32.totalorder %s15, 0
      %p51 = por %p49, %p50
      %p52 = scmp.ne.s32.totalorder %s44, %s46
      %p53 = scmp.eq.s32.totalorder %s20, 1
      %p54 = por %p52, %p53
      %p55 = scmp.ne.s32.totalorder %s46, %s47
      %p56 = scmp.eq.s32.totalorder %s20, 0
      %p57 = por %p55, %p56
      %p58 = scmp.ne.s32.totalorder %s46, %s47
      %p59 = scmp.eq.s32.totalorder %s21, 1
      %p60 = por %p58, %p59
      %p62 = scmp.ne.s32.totalorder %s47, %s61
      %p63 = scmp.eq.s32.totalorder %s21, 0
      %p64 = por %p62, %p63
      %s65 = ssub.s32 %s15, %s22
      %p66 = scmp.eq.s32.totalorder %s65, 0
      %s68 = sadd.s32 %s67, 1
      %s69 = scalar_select %p66, %s67, %s68
      %p72 = pneg %p66
      %p73 = scmp.eq.s32.totalorder %s15, 1
      %p74 = por %p72, %p73
      %p75 = scmp.ne.s32.totalorder %s67, %s70
      %p76 = scmp.eq.s32.totalorder %s15, 0
      %p77 = por %p75, %p76
      %p78 = scmp.ne.s32.totalorder %s67, %s70
      %p79 = scmp.eq.s32.totalorder %s20, 1
      %p80 = por %p78, %p79
      %p81 = scmp.ne.s32.totalorder %s70, %s71
      %p82 = scmp.eq.s32.totalorder %s20, 0
      %p83 = por %p81, %p82
      %p84 = scmp.ne.s32.totalorder %s70, %s71
      %p85 = scmp.eq.s32.totalorder %s21, 1
      %p86 = por %p84, %p85
      %p88 = scmp.ne.s32.totalorder %s71, %s87
      %p89 = scmp.eq.s32.totalorder %s21, 0
      %p90 = por %p88, %p89
      %s91 = ssub.s32 %s15, %s22
      %p92 = scmp.eq.s32.totalorder %s91, 0
      %s94 = sadd.s32 %s93, 1
      %s95 = scalar_select %p92, %s93, %s94
      %p98 = pneg %p92
      %p99 = scmp.eq.s32.totalorder %s15, 1
      %p100 = por %p98, %p99
      %p101 = scmp.ne.s32.totalorder %s93, %s96
      %p102 = scmp.eq.s32.totalorder %s15, 0
      %p103 = por %p101, %p102
      %p104 = scmp.ne.s32.totalorder %s93, %s96
      %p105 = scmp.eq.s32.totalorder %s20, 1
      %p106 = por %p104, %p105
      %p107 = scmp.ne.s32.totalorder %s96, %s97
      %p108 = scmp.eq.s32.totalorder %s20, 0
      %p109 = por %p107, %p108
      %p110 = scmp.ne.s32.totalorder %s96, %s97
      %p111 = scmp.eq.s32.totalorder %s21, 1
      %p112 = por %p110, %p111
      %p114 = scmp.ne.s32.totalorder %s97, %s113
      %p115 = scmp.eq.s32.totalorder %s21, 0
      %p116 = por %p114, %p115
      %p117 = scmp.le.s32.totalorder 1, %s15
      %p118 = scmp.lt.s32.totalorder %s15, 3
      %p119 = pnand %p117, %p118
      %p120 = pneg %p119
      // Predicated region
      $region9: #{tpu_custom_call.1} parent=5 // pred_check
        _
      $region10: #{tpu_custom_call.1} parent=5 // pred_check_branch
        %122 = sbr.rel (%p119) target = $region12
      $region11: #{tpu_custom_call.1} parent=5 // pred_region
        %s123 = ssub.s32 %s15, 1
        // Predicated region
        $region13: #{tpu_custom_call.1} parent=11 // pred_check
          %p124 = pneg %p36
        $region14: #{tpu_custom_call.1} parent=11 // pred_check_branch
          %126 = sbr.rel (%p124) target = $region16
        $region15: #{tpu_custom_call.1} parent=11 // pred_region
          _
        $region16: #{tpu_custom_call.1} parent=11 // pred_fallthru
          _
        // Predicated region
        $region17: #{tpu_custom_call.1} parent=11 // pred_check
          %p127 = pneg %p57
        $region18: #{tpu_custom_call.1} parent=11 // pred_check_branch
          %129 = sbr.rel (%p127) target = $region20
        $region19: #{tpu_custom_call.1} parent=11 // pred_region
          _
        $region20: #{tpu_custom_call.1} parent=11 // pred_fallthru
          _
      $region12: #{tpu_custom_call.1} parent=5 // pred_fallthru
        _
      %p130 = scmp.lt.s32.totalorder %s15, 2
      // Predicated region
      $region21: #{tpu_custom_call.1} parent=5 // pred_check
        %p131 = pneg %p130
      $region22: #{tpu_custom_call.1} parent=5 // pred_check_branch
        %133 = sbr.rel (%p131) target = $region24
      $region23: #{tpu_custom_call.1} parent=5 // pred_region
        // Predicated region
        $region25: #{tpu_custom_call.1} parent=23 // pred_check
          %p134 = pneg %p77
        $region26: #{tpu_custom_call.1} parent=23 // pred_check_branch
          %136 = sbr.rel (%p134) target = $region28
        $region27: #{tpu_custom_call.1} parent=23 // pred_region
          %s137 = sand.u32 %s67, 1
          %s138 = scalar_lea.sflag [#allocation3], %s137
          %s139 = sand.u32 %s67, 1
          %s140 = smul.addr %s139, 4800
          %s141 = scalar_lea.vmem [#allocation2], %s140
          %s142 = smul.u32 15, %s15
          %s144 = ssub.s32 76800, 76800
          %145 = vsyncadd %s138, %s144
          %s146 = smul.addr %s142, 64
          %s147 = scalar_lea.hbm %s2, %s146
          %s148 = sshll.u32 %s141, 4
          %s149 = int_to_ptr.vmem [resolvable:$true] %s148
          %154 = dma.hbm_to_vmem [thread:$0]  %s147, 76800, %s149, %s138, 1920, 960, 60
        $region28: #{tpu_custom_call.1} parent=23 // pred_fallthru
          _
      $region24: #{tpu_custom_call.1} parent=5 // pred_fallthru
        _
      %p155 = scmp.le.s32.totalorder 1, %s15
      %p156 = scmp.lt.s32.totalorder %s15, 3
      %p157 = pnand %p155, %p156
      %p158 = pneg %p157
      // Predicated region
      $region29: #{tpu_custom_call.1} parent=5 // pred_check
        _
      $region30: #{tpu_custom_call.1} parent=5 // pred_check_branch
        %160 = sbr.rel (%p157) target = $region32
      $region31: #{tpu_custom_call.1} parent=5 // pred_region
        %s161 = ssub.s32 %s15, 1
        %s162 = sand.u32 %s70, 1
        %s163 = scalar_lea.sflag [#allocation3], %s162
        %s164 = sand.u32 %s70, 1
        %s165 = smul.addr %s164, 4800
        %s166 = scalar_lea.vmem [#allocation2], %s165
        // Predicated region
        $region33: #{tpu_custom_call.1} parent=31 // pred_check
          %p167 = pneg %p83
        $region34: #{tpu_custom_call.1} parent=31 // pred_check_branch
          %169 = sbr.rel (%p167) target = $region36
        $region35: #{tpu_custom_call.1} parent=31 // pred_region
          %170 = dma.done %s163, 76800
        $region36: #{tpu_custom_call.1} parent=31 // pred_fallthru
          _
        %p171 = pneg %p36
        %p172 = pneg %p33
        %p173 = pneg %p57
        %p174 = pneg %p54
        %s175 = sand.u32 %s70, 1
        %s176 = scalar_lea.sflag [#allocation3], %s175
        %s177 = sand.u32 %s70, 1
        %s178 = smul.addr %s177, 4800
        %s179 = scalar_lea.vmem [#allocation2], %s178
        %p180 = pneg %p83
        %p181 = pneg %p80
        %p182 = pneg %p109
        %p183 = pneg %p106
        %s184 = sand.u32 %s96, 1
        %s185 = scalar_lea.sflag [#allocation4], %s184
        %s186 = sand.u32 %s96, 1
        %s187 = smul.addr %s186, 840
        %s188 = scalar_lea.vmem [#allocation5], %s187
        %s189 = smul.u32 15, %s20
        %s190 = smul.u32 15, %s20
        %v192 = vld [vmem:[%s0] sm:$0xff]
        %v193 = vld [vmem:[%s0 + $0x8] sm:$0xff]
        %v194 = vld [vmem:[%s0 + $0x10] sm:$0xff]
        %v195 = vld [vmem:[%s0 + $0x18] sm:$0xff]
        %v196 = vld [vmem:[%s0 + $0x20] sm:$0xff]
        %v197 = vld [vmem:[%s0 + $0x28] sm:$0xff]
        %v198 = vld [vmem:[%s0 + $0x30] sm:$0xff]
        %v199 = vld [vmem:[%s0 + $0x38] sm:$0xff]
        %v200 = vld [vmem:[%s0 + $0x40] sm:$0xff]
        %v201 = vld [vmem:[%s0 + $0x48] sm:$0xff]
        %v202 = vld [vmem:[%s0 + $0x50] sm:$0xff]
        %v203 = vld [vmem:[%s0 + $0x58] sm:$0xff]
        %v204 = vld [vmem:[%s0 + $0x60] sm:$0xff]
        %v205 = vld [vmem:[%s0 + $0x68] sm:$0xff]
        %v206 = vld [vmem:[%s0 + $0x70] sm:$0xff]
        %v207 = vld [vmem:[%s0 + $0x78] sm:$0xff]
        %v208 = vld [vmem:[%s0 + $0x80] sm:$0xff]
        %v209 = vld [vmem:[%s0 + $0x88] sm:$0xff]
        %v210 = vld [vmem:[%s0 + $0x90] sm:$0xff]
        %v211 = vld [vmem:[%s0 + $0x98] sm:$0xff]
        %v212 = vld [vmem:[%s0 + $0xa0] sm:$0xff]
        %v213 = vld [vmem:[%s0 + $0xa8] sm:$0xff]
        %v214 = vld [vmem:[%s0 + $0xb0] sm:$0xff]
        %v215 = vld [vmem:[%s0 + $0xb8] sm:$0xff]
        %v216 = vld [vmem:[%s0 + $0xc0] sm:$0xff]
        %v217 = vld [vmem:[%s0 + $0xc8] sm:$0xff]
        %v218 = vld [vmem:[%s0 + $0xd0] sm:$0xff]
        %v219 = vld [vmem:[%s0 + $0xd8] sm:$0xff]
        %v220 = vld [vmem:[%s0 + $0xe0] sm:$0xff]
        %v221 = vld [vmem:[%s0 + $0xe8] sm:$0xff]
        %v222 = vld [vmem:[%s0 + $0xf0] sm:$0xff]
        %v223 = vld [vmem:[%s0 + $0xf8] sm:$0xff]
        %v224 = vld [vmem:[%s0 + $0x100] sm:$0xff]
        %v225 = vld [vmem:[%s0 + $0x108] sm:$0xff]
        %v226 = vld [vmem:[%s0 + $0x110] sm:$0xff]
        %v227 = vld [vmem:[%s0 + $0x118] sm:$0xff]
        %v228 = vld [vmem:[%s0 + $0x120] sm:$0xff]
        %v229 = vld [vmem:[%s0 + $0x128] sm:$0xff]
        %v230 = vld [vmem:[%s0 + $0x130] sm:$0xff]
        %v231 = vld [vmem:[%s0 + $0x138] sm:$0xff]
        %v232 = vld [vmem:[%s0 + $0x140] sm:$0xff]
        %v233 = vld [vmem:[%s0 + $0x148] sm:$0xff]
        %v234 = vld [vmem:[%s0 + $0x150] sm:$0xff]
        %v235 = vld [vmem:[%s0 + $0x158] sm:$0xff]
        %v236 = vld [vmem:[%s0 + $0x160] sm:$0xff]
        %v237 = vld [vmem:[%s0 + $0x168] sm:$0xff]
        %v238 = vld [vmem:[%s0 + $0x170] sm:$0xff]
        %v239 = vld [vmem:[%s0 + $0x178] sm:$0xff]
        %v240 = vld [vmem:[%s0 + $0x180] sm:$0xff]
        %v241 = vld [vmem:[%s0 + $0x188] sm:$0xff]
        %v242 = vld [vmem:[%s0 + $0x190] sm:$0xff]
        %v243 = vld [vmem:[%s0 + $0x198] sm:$0xff]
        %v244 = vld [vmem:[%s0 + $0x1a0] sm:$0xff]
        %v245 = vld [vmem:[%s0 + $0x1a8] sm:$0xff]
        %v246 = vld [vmem:[%s0 + $0x1b0] sm:$0xff]
        %v247 = vld [vmem:[%s0 + $0x1b8] sm:$0xff]
        %v248 = vld [vmem:[%s0 + $0x1c0] sm:$0xff]
        %v249 = vld [vmem:[%s0 + $0x1c8] sm:$0xff]
        %v250 = vld [vmem:[%s0 + $0x1d0] sm:$0xff]
        %v251 = vld [vmem:[%s0 + $0x1d8] sm:$0xff]
        %v252 = vld [vmem:[%s0 + $0x1e0] sm:$0xff]
        %v253 = vld [vmem:[%s0 + $0x1e8] sm:$0xff]
        %v254 = vld [vmem:[%s0 + $0x1f0] sm:$0xff]
        %v255 = vld [vmem:[%s0 + $0x1f8] sm:$0xff]
        %v256 = vld [vmem:[%s0 + $0x200] sm:$0xff]
        %v257 = vld [vmem:[%s0 + $0x208] sm:$0xff]
        %v258 = vld [vmem:[%s0 + $0x210] sm:$0xff]
        %v259 = vld [vmem:[%s0 + $0x218] sm:$0xff]
        %v260 = vld [vmem:[%s0 + $0x220] sm:$0xff]
        %v261 = vld [vmem:[%s0 + $0x228] sm:$0xff]
        %v262 = vld [vmem:[%s0 + $0x230] sm:$0xff]
        %v263 = vld [vmem:[%s0 + $0x238] sm:$0xff]
        %v264 = vld [vmem:[%s0 + $0x240] sm:$0xff]
        %v265 = vld [vmem:[%s0 + $0x248] sm:$0xff]
        %v266 = vld [vmem:[%s0 + $0x250] sm:$0xff]
        %v267 = vld [vmem:[%s0 + $0x258] sm:$0xff]
        %v268 = vld [vmem:[%s0 + $0x260] sm:$0xff]
        %v269 = vld [vmem:[%s0 + $0x268] sm:$0xff]
        %v270 = vld [vmem:[%s0 + $0x270] sm:$0xff]
        %v271 = vld [vmem:[%s0 + $0x278] sm:$0xff]
        %v272 = vld [vmem:[%s1] sm:$0xff]
        %v273 = vld [vmem:[%s1 + $0x8] sm:$0xff]
        %v274 = vld [vmem:[%s1 + $0x10] sm:$0xff]
        %v275 = vld [vmem:[%s1 + $0x18] sm:$0xff]
        %v276 = vld [vmem:[%s1 + $0x20] sm:$0xff]
        %v277 = vld [vmem:[%s1 + $0x28] sm:$0xff]
        %v278 = vld [vmem:[%s1 + $0x30] sm:$0xff]
        %v279 = vld [vmem:[%s1 + $0x38] sm:$0xff]
        %v280 = vld [vmem:[%s1 + $0x40] sm:$0xff]
        %v281 = vld [vmem:[%s1 + $0x48] sm:$0xff]
        %v282 = vld [vmem:[%s1 + $0x50] sm:$0xff]
        %v283 = vld [vmem:[%s1 + $0x58] sm:$0xff]
        %v284 = vld [vmem:[%s1 + $0x60] sm:$0xff]
        %v285 = vld [vmem:[%s1 + $0x68] sm:$0xff]
        %v286 = vld [vmem:[%s1 + $0x70] sm:$0xff]
        %v287 = vld [vmem:[%s1 + $0x78] sm:$0xff]
        %v288 = vld [vmem:[%s1 + $0x80] sm:$0xff]
        %v289 = vld [vmem:[%s1 + $0x88] sm:$0xff]
        %v290 = vld [vmem:[%s1 + $0x90] sm:$0xff]
        %v291 = vld [vmem:[%s1 + $0x98] sm:$0xff]
        %v292 = vld [vmem:[%s1 + $0xa0] sm:$0xff]
        %v293 = vld [vmem:[%s1 + $0xa8] sm:$0xff]
        %v294 = vld [vmem:[%s1 + $0xb0] sm:$0xff]
        %v295 = vld [vmem:[%s1 + $0xb8] sm:$0xff]
        %v296 = vld [vmem:[%s1 + $0xc0] sm:$0xff]
        %v297 = vld [vmem:[%s1 + $0xc8] sm:$0xff]
        %v298 = vld [vmem:[%s1 + $0xd0] sm:$0xff]
        %v299 = vld [vmem:[%s1 + $0xd8] sm:$0xff]
        %v300 = vld [vmem:[%s1 + $0xe0] sm:$0xff]
        %v301 = vld [vmem:[%s1 + $0xe8] sm:$0xff]
        %v302 = vld [vmem:[%s1 + $0xf0] sm:$0xff]
        %v303 = vld [vmem:[%s1 + $0xf8] sm:$0xff]
        %v304 = vld [vmem:[%s1 + $0x100] sm:$0xff]
        %v305 = vld [vmem:[%s1 + $0x108] sm:$0xff]
        %v306 = vld [vmem:[%s1 + $0x110] sm:$0xff]
        %v307 = vld [vmem:[%s1 + $0x118] sm:$0xff]
        %v308 = vld [vmem:[%s1 + $0x120] sm:$0xff]
        %v309 = vld [vmem:[%s1 + $0x128] sm:$0xff]
        %v310 = vld [vmem:[%s1 + $0x130] sm:$0xff]
        %v311 = vld [vmem:[%s1 + $0x138] sm:$0xff]
        %v312 = vld [vmem:[%s1 + $0x140] sm:$0xff]
        %v313 = vld [vmem:[%s1 + $0x148] sm:$0xff]
        %v314 = vld [vmem:[%s1 + $0x150] sm:$0xff]
        %v315 = vld [vmem:[%s1 + $0x158] sm:$0xff]
        %v316 = vld [vmem:[%s1 + $0x160] sm:$0xff]
        %v317 = vld [vmem:[%s1 + $0x168] sm:$0xff]
        %v318 = vld [vmem:[%s1 + $0x170] sm:$0xff]
        %v319 = vld [vmem:[%s1 + $0x178] sm:$0xff]
        %v320 = vld [vmem:[%s1 + $0x180] sm:$0xff]
        %v321 = vld [vmem:[%s1 + $0x188] sm:$0xff]
        %v322 = vld [vmem:[%s1 + $0x190] sm:$0xff]
        %v323 = vld [vmem:[%s1 + $0x198] sm:$0xff]
        %v324 = vld [vmem:[%s1 + $0x1a0] sm:$0xff]
        %v325 = vld [vmem:[%s1 + $0x1a8] sm:$0xff]
        %v326 = vld [vmem:[%s1 + $0x1b0] sm:$0xff]
        %v327 = vld [vmem:[%s1 + $0x1b8] sm:$0xff]
        %v328 = vld [vmem:[%s1 + $0x1c0] sm:$0xff]
        %v329 = vld [vmem:[%s1 + $0x1c8] sm:$0xff]
        %v330 = vld [vmem:[%s1 + $0x1d0] sm:$0xff]
        %v331 = vld [vmem:[%s1 + $0x1d8] sm:$0xff]
        %v332 = vld [vmem:[%s1 + $0x1e0] sm:$0xff]
        %v333 = vld [vmem:[%s1 + $0x1e8] sm:$0xff]
        %v334 = vld [vmem:[%s1 + $0x1f0] sm:$0xff]
        %v335 = vld [vmem:[%s1 + $0x1f8] sm:$0xff]
        %v336 = vld [vmem:[%s1 + $0x200] sm:$0xff]
        %v337 = vld [vmem:[%s1 + $0x208] sm:$0xff]
        %v338 = vld [vmem:[%s1 + $0x210] sm:$0xff]
        %v339 = vld [vmem:[%s1 + $0x218] sm:$0xff]
        %v340 = vld [vmem:[%s1 + $0x220] sm:$0xff]
        %v341 = vld [vmem:[%s1 + $0x228] sm:$0xff]
        %v342 = vld [vmem:[%s1 + $0x230] sm:$0xff]
        %v343 = vld [vmem:[%s1 + $0x238] sm:$0xff]
        %v344 = vld [vmem:[%s1 + $0x240] sm:$0xff]
        %v345 = vld [vmem:[%s1 + $0x248] sm:$0xff]
        %v346 = vld [vmem:[%s1 + $0x250] sm:$0xff]
        %v347 = vld [vmem:[%s1 + $0x258] sm:$0xff]
        %v348 = vld [vmem:[%s1 + $0x260] sm:$0xff]
        %v349 = vld [vmem:[%s1 + $0x268] sm:$0xff]
        %v350 = vld [vmem:[%s1 + $0x270] sm:$0xff]
        %v351 = vld [vmem:[%s1 + $0x278] sm:$0xff]
        %v352 = vadd.f32 %v192, %v272
        %v353 = vadd.f32 %v193, %v273
        %v354 = vadd.f32 %v194, %v274
        %v355 = vadd.f32 %v195, %v275
        %v356 = vadd.f32 %v196, %v276
        %v357 = vadd.f32 %v197, %v277
        %v358 = vadd.f32 %v198, %v278
        %v359 = vadd.f32 %v199, %v279
        %v360 = vadd.f32 %v200, %v280
        %v361 = vadd.f32 %v201, %v281
        %v362 = vadd.f32 %v202, %v282
        %v363 = vadd.f32 %v203, %v283
        %v364 = vadd.f32 %v204, %v284
        %v365 = vadd.f32 %v205, %v285
        %v366 = vadd.f32 %v206, %v286
        %v367 = vadd.f32 %v207, %v287
        %v368 = vadd.f32 %v208, %v288
        %v369 = vadd.f32 %v209, %v289
        %v370 = vadd.f32 %v210, %v290
        %v371 = vadd.f32 %v211, %v291
        %v372 = vadd.f32 %v212, %v292
        %v373 = vadd.f32 %v213, %v293
        %v374 = vadd.f32 %v214, %v294
        %v375 = vadd.f32 %v215, %v295
        %v376 = vadd.f32 %v216, %v296
        %v377 = vadd.f32 %v217, %v297
        %v378 = vadd.f32 %v218, %v298
        %v379 = vadd.f32 %v219, %v299
        %v380 = vadd.f32 %v220, %v300
        %v381 = vadd.f32 %v221, %v301
        %v382 = vadd.f32 %v222, %v302
        %v383 = vadd.f32 %v223, %v303
        %v384 = vadd.f32 %v224, %v304
        %v385 = vadd.f32 %v225, %v305
        %v386 = vadd.f32 %v226, %v306
        %v387 = vadd.f32 %v227, %v307
        %v388 = vadd.f32 %v228, %v308
        %v389 = vadd.f32 %v229, %v309
        %v390 = vadd.f32 %v230, %v310
        %v391 = vadd.f32 %v231, %v311
        %v392 = vadd.f32 %v232, %v312
        %v393 = vadd.f32 %v233, %v313
        %v394 = vadd.f32 %v234, %v314
        %v395 = vadd.f32 %v235, %v315
        %v396 = vadd.f32 %v236, %v316
        %v397 = vadd.f32 %v237, %v317
        %v398 = vadd.f32 %v238, %v318
        %v399 = vadd.f32 %v239, %v319
        %v400 = vadd.f32 %v240, %v320
        %v401 = vadd.f32 %v241, %v321
        %v402 = vadd.f32 %v242, %v322
        %v403 = vadd.f32 %v243, %v323
        %v404 = vadd.f32 %v244, %v324
        %v405 = vadd.f32 %v245, %v325
        %v406 = vadd.f32 %v246, %v326
        %v407 = vadd.f32 %v247, %v327
        %v408 = vadd.f32 %v248, %v328
        %v409 = vadd.f32 %v249, %v329
        %v410 = vadd.f32 %v250, %v330
        %v411 = vadd.f32 %v251, %v331
        %v412 = vadd.f32 %v252, %v332
        %v413 = vadd.f32 %v253, %v333
        %v414 = vadd.f32 %v254, %v334
        %v415 = vadd.f32 %v255, %v335
        %v416 = vadd.f32 %v256, %v336
        %v417 = vadd.f32 %v257, %v337
        %v418 = vadd.f32 %v258, %v338
        %v419 = vadd.f32 %v259, %v339
        %v420 = vadd.f32 %v260, %v340
        %v421 = vadd.f32 %v261, %v341
        %v422 = vadd.f32 %v262, %v342
        %v423 = vadd.f32 %v263, %v343
        %v424 = vadd.f32 %v264, %v344
        %v425 = vadd.f32 %v265, %v345
        %v426 = vadd.f32 %v266, %v346
        %v427 = vadd.f32 %v267, %v347
        %v428 = vadd.f32 %v268, %v348
        %v429 = vadd.f32 %v269, %v349
        %v430 = vadd.f32 %v270, %v350
        %v431 = vadd.f32 %v271, %v351
        %v432 = vpack.c.bf16 %v353, %v352
        %v433 = vpack.c.bf16 %v355, %v354
        %v434 = vpack.c.bf16 %v357, %v356
        %v435 = vpack.c.bf16 %v359, %v358
        %v436 = vpack.c.bf16 %v361, %v360
        %v437 = vpack.c.bf16 %v363, %v362
        %v438 = vpack.c.bf16 %v365, %v364
        %v439 = vpack.c.bf16 %v367, %v366
        %v440 = vpack.c.bf16 %v369, %v368
        %v441 = vpack.c.bf16 %v371, %v370
        %v442 = vpack.c.bf16 %v373, %v372
        %v443 = vpack.c.bf16 %v375, %v374
        %v444 = vpack.c.bf16 %v377, %v376
        %v445 = vpack.c.bf16 %v379, %v378
        %v446 = vpack.c.bf16 %v381, %v380
        %v447 = vpack.c.bf16 %v383, %v382
        %v448 = vpack.c.bf16 %v385, %v384
        %v449 = vpack.c.bf16 %v387, %v386
        %v450 = vpack.c.bf16 %v389, %v388
        %v451 = vpack.c.bf16 %v391, %v390
        %v452 = vpack.c.bf16 %v393, %v392
        %v453 = vpack.c.bf16 %v395, %v394
        %v454 = vpack.c.bf16 %v397, %v396
        %v455 = vpack.c.bf16 %v399, %v398
        %v456 = vpack.c.bf16 %v401, %v400
        %v457 = vpack.c.bf16 %v403, %v402
        %v458 = vpack.c.bf16 %v405, %v404
        %v459 = vpack.c.bf16 %v407, %v406
        %v460 = vpack.c.bf16 %v409, %v408
        %v461 = vpack.c.bf16 %v411, %v410
        %v462 = vpack.c.bf16 %v413, %v412
        %v463 = vpack.c.bf16 %v415, %v414
        %v464 = vpack.c.bf16 %v417, %v416
        %v465 = vpack.c.bf16 %v419, %v418
        %v466 = vpack.c.bf16 %v421, %v420
        %v467 = vpack.c.bf16 %v423, %v422
        %v468 = vpack.c.bf16 %v425, %v424
        %v469 = vpack.c.bf16 %v427, %v426
        %v470 = vpack.c.bf16 %v429, %v428
        %v471 = vpack.c.bf16 %v431, %v430
        %v472 = vld [vmem:[%s166] sm:$0xff]
        %v473 = vld [vmem:[%s166 + $0x8] sm:$0xff]
        %v474 = vld [vmem:[%s166 + $0x10] sm:$0xff]
        %v475 = vld [vmem:[%s166 + $0x18] sm:$0xff]
        %v476 = vld [vmem:[%s166 + $0x20] sm:$0xff]
        %v477 = vld [vmem:[%s166 + $0x28] sm:$0xff]
        %v478 = vld [vmem:[%s166 + $0x30] sm:$0xff]
        %v479 = vld [vmem:[%s166 + $0x38] sm:$0xf]
        %v480 = vld [vmem:[%s166 + $0x3c] sm:$0xff]
        %v481 = vld [vmem:[%s166 + $0x44] sm:$0xff]
        %v482 = vld [vmem:[%s166 + $0x4c] sm:$0xff]
        %v483 = vld [vmem:[%s166 + $0x54] sm:$0xff]
        %v484 = vld [vmem:[%s166 + $0x5c] sm:$0xff]
        %v485 = vld [vmem:[%s166 + $0x64] sm:$0xff]
        %v486 = vld [vmem:[%s166 + $0x6c] sm:$0xff]
        %v487 = vld [vmem:[%s166 + $0x74] sm:$0xf]
        %v488 = vld [vmem:[%s166 + $0x78] sm:$0xff]
        %v489 = vld [vmem:[%s166 + $0x80] sm:$0xff]
        %v490 = vld [vmem:[%s166 + $0x88] sm:$0xff]
        %v491 = vld [vmem:[%s166 + $0x90] sm:$0xff]
        %v492 = vld [vmem:[%s166 + $0x98] sm:$0xff]
        %v493 = vld [vmem:[%s166 + $0xa0] sm:$0xff]
        %v494 = vld [vmem:[%s166 + $0xa8] sm:$0xff]
        %v495 = vld [vmem:[%s166 + $0xb0] sm:$0xf]
        %v496 = vld [vmem:[%s166 + $0xb4] sm:$0xff]
        %v497 = vld [vmem:[%s166 + $0xbc] sm:$0xff]
        %v498 = vld [vmem:[%s166 + $0xc4] sm:$0xff]
        %v499 = vld [vmem:[%s166 + $0xcc] sm:$0xff]
        %v500 = vld [vmem:[%s166 + $0xd4] sm:$0xff]
        %v501 = vld [vmem:[%s166 + $0xdc] sm:$0xff]
        %v502 = vld [vmem:[%s166 + $0xe4] sm:$0xff]
        %v503 = vld [vmem:[%s166 + $0xec] sm:$0xf]
        %v504 = vld [vmem:[%s166 + $0xf0] sm:$0xff]
        %v505 = vld [vmem:[%s166 + $0xf8] sm:$0xff]
        %v506 = vld [vmem:[%s166 + $0x100] sm:$0xff]
        %v507 = vld [vmem:[%s166 + $0x108] sm:$0xff]
        %v508 = vld [vmem:[%s166 + $0x110] sm:$0xff]
        %v509 = vld [vmem:[%s166 + $0x118] sm:$0xff]
        %v510 = vld [vmem:[%s166 + $0x120] sm:$0xff]
        %v511 = vld [vmem:[%s166 + $0x128] sm:$0xf]
        %v512 = vld [vmem:[%s166 + $0x12c] sm:$0xff]
        %v513 = vld [vmem:[%s166 + $0x134] sm:$0xff]
        %v514 = vld [vmem:[%s166 + $0x13c] sm:$0xff]
        %v515 = vld [vmem:[%s166 + $0x144] sm:$0xff]
        %v516 = vld [vmem:[%s166 + $0x14c] sm:$0xff]
        %v517 = vld [vmem:[%s166 + $0x154] sm:$0xff]
        %v518 = vld [vmem:[%s166 + $0x15c] sm:$0xff]
        %v519 = vld [vmem:[%s166 + $0x164] sm:$0xf]
        %v520 = vld [vmem:[%s166 + $0x168] sm:$0xff]
        %v521 = vld [vmem:[%s166 + $0x170] sm:$0xff]
        %v522 = vld [vmem:[%s166 + $0x178] sm:$0xff]
        %v523 = vld [vmem:[%s166 + $0x180] sm:$0xff]
        %v524 = vld [vmem:[%s166 + $0x188] sm:$0xff]
        %v525 = vld [vmem:[%s166 + $0x190] sm:$0xff]
        %v526 = vld [vmem:[%s166 + $0x198] sm:$0xff]
        %v527 = vld [vmem:[%s166 + $0x1a0] sm:$0xf]
        %v528 = vld [vmem:[%s166 + $0x1a4] sm:$0xff]
        %v529 = vld [vmem:[%s166 + $0x1ac] sm:$0xff]
        %v530 = vld [vmem:[%s166 + $0x1b4] sm:$0xff]
        %v531 = vld [vmem:[%s166 + $0x1bc] sm:$0xff]
        %v532 = vld [vmem:[%s166 + $0x1c4] sm:$0xff]
        %v533 = vld [vmem:[%s166 + $0x1cc] sm:$0xff]
        %v534 = vld [vmem:[%s166 + $0x1d4] sm:$0xff]
        %v535 = vld [vmem:[%s166 + $0x1dc] sm:$0xf]
        %v536 = vld [vmem:[%s166 + $0x1e0] sm:$0xff]
        %v537 = vld [vmem:[%s166 + $0x1e8] sm:$0xff]
        %v538 = vld [vmem:[%s166 + $0x1f0] sm:$0xff]
        %v539 = vld [vmem:[%s166 + $0x1f8] sm:$0xff]
        %v540 = vld [vmem:[%s166 + $0x200] sm:$0xff]
        %v541 = vld [vmem:[%s166 + $0x208] sm:$0xff]
        %v542 = vld [vmem:[%s166 + $0x210] sm:$0xff]
        %v543 = vld [vmem:[%s166 + $0x218] sm:$0xf]
        %v544 = vld [vmem:[%s166 + $0x21c] sm:$0xff]
        %v545 = vld [vmem:[%s166 + $0x224] sm:$0xff]
        %v546 = vld [vmem:[%s166 + $0x22c] sm:$0xff]
        %v547 = vld [vmem:[%s166 + $0x234] sm:$0xff]
        %v548 = vld [vmem:[%s166 + $0x23c] sm:$0xff]
        %v549 = vld [vmem:[%s166 + $0x244] sm:$0xff]
        %v550 = vld [vmem:[%s166 + $0x24c] sm:$0xff]
        %v551 = vld [vmem:[%s166 + $0x254] sm:$0xf]
        %v552 = vld [vmem:[%s166 + $0x258] sm:$0xff]
        %v553 = vld [vmem:[%s166 + $0x260] sm:$0xff]
        %v554 = vld [vmem:[%s166 + $0x268] sm:$0xff]
        %v555 = vld [vmem:[%s166 + $0x270] sm:$0xff]
        %v556 = vld [vmem:[%s166 + $0x278] sm:$0xff]
        %v557 = vld [vmem:[%s166 + $0x280] sm:$0xff]
        %v558 = vld [vmem:[%s166 + $0x288] sm:$0xff]
        %v559 = vld [vmem:[%s166 + $0x290] sm:$0xf]
        %v560 = vld [vmem:[%s166 + $0x294] sm:$0xff]
        %v561 = vld [vmem:[%s166 + $0x29c] sm:$0xff]
        %v562 = vld [vmem:[%s166 + $0x2a4] sm:$0xff]
        %v563 = vld [vmem:[%s166 + $0x2ac] sm:$0xff]
        %v564 = vld [vmem:[%s166 + $0x2b4] sm:$0xff]
        %v565 = vld [vmem:[%s166 + $0x2bc] sm:$0xff]
        %v566 = vld [vmem:[%s166 + $0x2c4] sm:$0xff]
        %v567 = vld [vmem:[%s166 + $0x2cc] sm:$0xf]
        %v568 = vld [vmem:[%s166 + $0x2d0] sm:$0xff]
        %v569 = vld [vmem:[%s166 + $0x2d8] sm:$0xff]
        %v570 = vld [vmem:[%s166 + $0x2e0] sm:$0xff]
        %v571 = vld [vmem:[%s166 + $0x2e8] sm:$0xff]
        %v572 = vld [vmem:[%s166 + $0x2f0] sm:$0xff]
        %v573 = vld [vmem:[%s166 + $0x2f8] sm:$0xff]
        %v574 = vld [vmem:[%s166 + $0x300] sm:$0xff]
        %v575 = vld [vmem:[%s166 + $0x308] sm:$0xf]
        %v576 = vld [vmem:[%s166 + $0x30c] sm:$0xff]
        %v577 = vld [vmem:[%s166 + $0x314] sm:$0xff]
        %v578 = vld [vmem:[%s166 + $0x31c] sm:$0xff]
        %v579 = vld [vmem:[%s166 + $0x324] sm:$0xff]
        %v580 = vld [vmem:[%s166 + $0x32c] sm:$0xff]
        %v581 = vld [vmem:[%s166 + $0x334] sm:$0xff]
        %v582 = vld [vmem:[%s166 + $0x33c] sm:$0xff]
        %v583 = vld [vmem:[%s166 + $0x344] sm:$0xf]
        %v584 = vld [vmem:[%s166 + $0x348] sm:$0xff]
        %v585 = vld [vmem:[%s166 + $0x350] sm:$0xff]
        %v586 = vld [vmem:[%s166 + $0x358] sm:$0xff]
        %v587 = vld [vmem:[%s166 + $0x360] sm:$0xff]
        %v588 = vld [vmem:[%s166 + $0x368] sm:$0xff]
        %v589 = vld [vmem:[%s166 + $0x370] sm:$0xff]
        %v590 = vld [vmem:[%s166 + $0x378] sm:$0xff]
        %v591 = vld [vmem:[%s166 + $0x380] sm:$0xf]
        %v592 = vld [vmem:[%s166 + $0x384] sm:$0xff]
        %v593 = vld [vmem:[%s166 + $0x38c] sm:$0xff]
        %v594 = vld [vmem:[%s166 + $0x394] sm:$0xff]
        %v595 = vld [vmem:[%s166 + $0x39c] sm:$0xff]
        %v596 = vld [vmem:[%s166 + $0x3a4] sm:$0xff]
        %v597 = vld [vmem:[%s166 + $0x3ac] sm:$0xff]
        %v598 = vld [vmem:[%s166 + $0x3b4] sm:$0xff]
        %v599 = vld [vmem:[%s166 + $0x3bc] sm:$0xf]
        %v600 = vld [vmem:[%s166 + $0x3c0] sm:$0xff]
        %v601 = vld [vmem:[%s166 + $0x3c8] sm:$0xff]
        %v602 = vld [vmem:[%s166 + $0x3d0] sm:$0xff]
        %v603 = vld [vmem:[%s166 + $0x3d8] sm:$0xff]
        %v604 = vld [vmem:[%s166 + $0x3e0] sm:$0xff]
        %v605 = vld [vmem:[%s166 + $0x3e8] sm:$0xff]
        %v606 = vld [vmem:[%s166 + $0x3f0] sm:$0xff]
        %v607 = vld [vmem:[%s166 + $0x3f8] sm:$0xf]
        %v608 = vld [vmem:[%s166 + $0x3fc] sm:$0xff]
        %v609 = vld [vmem:[%s166 + $0x404] sm:$0xff]
        %v610 = vld [vmem:[%s166 + $0x40c] sm:$0xff]
        %v611 = vld [vmem:[%s166 + $0x414] sm:$0xff]
        %v612 = vld [vmem:[%s166 + $0x41c] sm:$0xff]
        %v613 = vld [vmem:[%s166 + $0x424] sm:$0xff]
        %v614 = vld [vmem:[%s166 + $0x42c] sm:$0xff]
        %v615 = vld [vmem:[%s166 + $0x434] sm:$0xf]
        %v616 = vld [vmem:[%s166 + $0x438] sm:$0xff]
        %v617 = vld [vmem:[%s166 + $0x440] sm:$0xff]
        %v618 = vld [vmem:[%s166 + $0x448] sm:$0xff]
        %v619 = vld [vmem:[%s166 + $0x450] sm:$0xff]
        %v620 = vld [vmem:[%s166 + $0x458] sm:$0xff]
        %v621 = vld [vmem:[%s166 + $0x460] sm:$0xff]
        %v622 = vld [vmem:[%s166 + $0x468] sm:$0xff]
        %v623 = vld [vmem:[%s166 + $0x470] sm:$0xf]
        %v624 = vld [vmem:[%s166 + $0x474] sm:$0xff]
        %v625 = vld [vmem:[%s166 + $0x47c] sm:$0xff]
        %v626 = vld [vmem:[%s166 + $0x484] sm:$0xff]
        %v627 = vld [vmem:[%s166 + $0x48c] sm:$0xff]
        %v628 = vld [vmem:[%s166 + $0x494] sm:$0xff]
        %v629 = vld [vmem:[%s166 + $0x49c] sm:$0xff]
        %v630 = vld [vmem:[%s166 + $0x4a4] sm:$0xff]
        %v631 = vld [vmem:[%s166 + $0x4ac] sm:$0xf]
        %v632 = vld [vmem:[%s166 + $0x4b0] sm:$0xff]
        %v633 = vld [vmem:[%s166 + $0x4b8] sm:$0xff]
        %v634 = vld [vmem:[%s166 + $0x4c0] sm:$0xff]
        %v635 = vld [vmem:[%s166 + $0x4c8] sm:$0xff]
        %v636 = vld [vmem:[%s166 + $0x4d0] sm:$0xff]
        %v637 = vld [vmem:[%s166 + $0x4d8] sm:$0xff]
        %v638 = vld [vmem:[%s166 + $0x4e0] sm:$0xff]
        %v639 = vld [vmem:[%s166 + $0x4e8] sm:$0xf]
        %v640 = vld [vmem:[%s166 + $0x4ec] sm:$0xff]
        %v641 = vld [vmem:[%s166 + $0x4f4] sm:$0xff]
        %v642 = vld [vmem:[%s166 + $0x4fc] sm:$0xff]
        %v643 = vld [vmem:[%s166 + $0x504] sm:$0xff]
        %v644 = vld [vmem:[%s166 + $0x50c] sm:$0xff]
        %v645 = vld [vmem:[%s166 + $0x514] sm:$0xff]
        %v646 = vld [vmem:[%s166 + $0x51c] sm:$0xff]
        %v647 = vld [vmem:[%s166 + $0x524] sm:$0xf]
        %v648 = vld [vmem:[%s166 + $0x528] sm:$0xff]
        %v649 = vld [vmem:[%s166 + $0x530] sm:$0xff]
        %v650 = vld [vmem:[%s166 + $0x538] sm:$0xff]
        %v651 = vld [vmem:[%s166 + $0x540] sm:$0xff]
        %v652 = vld [vmem:[%s166 + $0x548] sm:$0xff]
        %v653 = vld [vmem:[%s166 + $0x550] sm:$0xff]
        %v654 = vld [vmem:[%s166 + $0x558] sm:$0xff]
        %v655 = vld [vmem:[%s166 + $0x560] sm:$0xf]
        %v656 = vld [vmem:[%s166 + $0x564] sm:$0xff]
        %v657 = vld [vmem:[%s166 + $0x56c] sm:$0xff]
        %v658 = vld [vmem:[%s166 + $0x574] sm:$0xff]
        %v659 = vld [vmem:[%s166 + $0x57c] sm:$0xff]
        %v660 = vld [vmem:[%s166 + $0x584] sm:$0xff]
        %v661 = vld [vmem:[%s166 + $0x58c] sm:$0xff]
        %v662 = vld [vmem:[%s166 + $0x594] sm:$0xff]
        %v663 = vld [vmem:[%s166 + $0x59c] sm:$0xf]
        %v664 = vld [vmem:[%s166 + $0x5a0] sm:$0xff]
        %v665 = vld [vmem:[%s166 + $0x5a8] sm:$0xff]
        %v666 = vld [vmem:[%s166 + $0x5b0] sm:$0xff]
        %v667 = vld [vmem:[%s166 + $0x5b8] sm:$0xff]
        %v668 = vld [vmem:[%s166 + $0x5c0] sm:$0xff]
        %v669 = vld [vmem:[%s166 + $0x5c8] sm:$0xff]
        %v670 = vld [vmem:[%s166 + $0x5d0] sm:$0xff]
        %v671 = vld [vmem:[%s166 + $0x5d8] sm:$0xf]
        %v672 = vld [vmem:[%s166 + $0x5dc] sm:$0xff]
        %v673 = vld [vmem:[%s166 + $0x5e4] sm:$0xff]
        %v674 = vld [vmem:[%s166 + $0x5ec] sm:$0xff]
        %v675 = vld [vmem:[%s166 + $0x5f4] sm:$0xff]
        %v676 = vld [vmem:[%s166 + $0x5fc] sm:$0xff]
        %v677 = vld [vmem:[%s166 + $0x604] sm:$0xff]
        %v678 = vld [vmem:[%s166 + $0x60c] sm:$0xff]
        %v679 = vld [vmem:[%s166 + $0x614] sm:$0xf]
        %v680 = vld [vmem:[%s166 + $0x618] sm:$0xff]
        %v681 = vld [vmem:[%s166 + $0x620] sm:$0xff]
        %v682 = vld [vmem:[%s166 + $0x628] sm:$0xff]
        %v683 = vld [vmem:[%s166 + $0x630] sm:$0xff]
        %v684 = vld [vmem:[%s166 + $0x638] sm:$0xff]
        %v685 = vld [vmem:[%s166 + $0x640] sm:$0xff]
        %v686 = vld [vmem:[%s166 + $0x648] sm:$0xff]
        %v687 = vld [vmem:[%s166 + $0x650] sm:$0xf]
        %v688 = vld [vmem:[%s166 + $0x654] sm:$0xff]
        %v689 = vld [vmem:[%s166 + $0x65c] sm:$0xff]
        %v690 = vld [vmem:[%s166 + $0x664] sm:$0xff]
        %v691 = vld [vmem:[%s166 + $0x66c] sm:$0xff]
        %v692 = vld [vmem:[%s166 + $0x674] sm:$0xff]
        %v693 = vld [vmem:[%s166 + $0x67c] sm:$0xff]
        %v694 = vld [vmem:[%s166 + $0x684] sm:$0xff]
        %v695 = vld [vmem:[%s166 + $0x68c] sm:$0xf]
        %v696 = vld [vmem:[%s166 + $0x690] sm:$0xff]
        %v697 = vld [vmem:[%s166 + $0x698] sm:$0xff]
        %v698 = vld [vmem:[%s166 + $0x6a0] sm:$0xff]
        %v699 = vld [vmem:[%s166 + $0x6a8] sm:$0xff]
        %v700 = vld [vmem:[%s166 + $0x6b0] sm:$0xff]
        %v701 = vld [vmem:[%s166 + $0x6b8] sm:$0xff]
        %v702 = vld [vmem:[%s166 + $0x6c0] sm:$0xff]
        %v703 = vld [vmem:[%s166 + $0x6c8] sm:$0xf]
        %v704 = vld [vmem:[%s166 + $0x6cc] sm:$0xff]
        %v705 = vld [vmem:[%s166 + $0x6d4] sm:$0xff]
        %v706 = vld [vmem:[%s166 + $0x6dc] sm:$0xff]
        %v707 = vld [vmem:[%s166 + $0x6e4] sm:$0xff]
        %v708 = vld [vmem:[%s166 + $0x6ec] sm:$0xff]
        %v709 = vld [vmem:[%s166 + $0x6f4] sm:$0xff]
        %v710 = vld [vmem:[%s166 + $0x6fc] sm:$0xff]
        %v711 = vld [vmem:[%s166 + $0x704] sm:$0xf]
        %v712 = vld [vmem:[%s166 + $0x708] sm:$0xff]
        %v713 = vld [vmem:[%s166 + $0x710] sm:$0xff]
        %v714 = vld [vmem:[%s166 + $0x718] sm:$0xff]
        %v715 = vld [vmem:[%s166 + $0x720] sm:$0xff]
        %v716 = vld [vmem:[%s166 + $0x728] sm:$0xff]
        %v717 = vld [vmem:[%s166 + $0x730] sm:$0xff]
        %v718 = vld [vmem:[%s166 + $0x738] sm:$0xff]
        %v719 = vld [vmem:[%s166 + $0x740] sm:$0xf]
        %v720 = vld [vmem:[%s166 + $0x744] sm:$0xff]
        %v721 = vld [vmem:[%s166 + $0x74c] sm:$0xff]
        %v722 = vld [vmem:[%s166 + $0x754] sm:$0xff]
        %v723 = vld [vmem:[%s166 + $0x75c] sm:$0xff]
        %v724 = vld [vmem:[%s166 + $0x764] sm:$0xff]
        %v725 = vld [vmem:[%s166 + $0x76c] sm:$0xff]
        %v726 = vld [vmem:[%s166 + $0x774] sm:$0xff]
        %v727 = vld [vmem:[%s166 + $0x77c] sm:$0xf]
        %v728 = vld [vmem:[%s166 + $0x780] sm:$0xff]
        %v729 = vld [vmem:[%s166 + $0x788] sm:$0xff]
        %v730 = vld [vmem:[%s166 + $0x790] sm:$0xff]
        %v731 = vld [vmem:[%s166 + $0x798] sm:$0xff]
        %v732 = vld [vmem:[%s166 + $0x7a0] sm:$0xff]
        %v733 = vld [vmem:[%s166 + $0x7a8] sm:$0xff]
        %v734 = vld [vmem:[%s166 + $0x7b0] sm:$0xff]
        %v735 = vld [vmem:[%s166 + $0x7b8] sm:$0xf]
        %v736 = vld [vmem:[%s166 + $0x7bc] sm:$0xff]
        %v737 = vld [vmem:[%s166 + $0x7c4] sm:$0xff]
        %v738 = vld [vmem:[%s166 + $0x7cc] sm:$0xff]
        %v739 = vld [vmem:[%s166 + $0x7d4] sm:$0xff]
        %v740 = vld [vmem:[%s166 + $0x7dc] sm:$0xff]
        %v741 = vld [vmem:[%s166 + $0x7e4] sm:$0xff]
        %v742 = vld [vmem:[%s166 + $0x7ec] sm:$0xff]
        %v743 = vld [vmem:[%s166 + $0x7f4] sm:$0xf]
        %v744 = vld [vmem:[%s166 + $0x7f8] sm:$0xff]
        %v745 = vld [vmem:[%s166 + $0x800] sm:$0xff]
        %v746 = vld [vmem:[%s166 + $0x808] sm:$0xff]
        %v747 = vld [vmem:[%s166 + $0x810] sm:$0xff]
        %v748 = vld [vmem:[%s166 + $0x818] sm:$0xff]
        %v749 = vld [vmem:[%s166 + $0x820] sm:$0xff]
        %v750 = vld [vmem:[%s166 + $0x828] sm:$0xff]
        %v751 = vld [vmem:[%s166 + $0x830] sm:$0xf]
        %v752 = vld [vmem:[%s166 + $0x834] sm:$0xff]
        %v753 = vld [vmem:[%s166 + $0x83c] sm:$0xff]
        %v754 = vld [vmem:[%s166 + $0x844] sm:$0xff]
        %v755 = vld [vmem:[%s166 + $0x84c] sm:$0xff]
        %v756 = vld [vmem:[%s166 + $0x854] sm:$0xff]
        %v757 = vld [vmem:[%s166 + $0x85c] sm:$0xff]
        %v758 = vld [vmem:[%s166 + $0x864] sm:$0xff]
        %v759 = vld [vmem:[%s166 + $0x86c] sm:$0xf]
        %v760 = vld [vmem:[%s166 + $0x870] sm:$0xff]
        %v761 = vld [vmem:[%s166 + $0x878] sm:$0xff]
        %v762 = vld [vmem:[%s166 + $0x880] sm:$0xff]
        %v763 = vld [vmem:[%s166 + $0x888] sm:$0xff]
        %v764 = vld [vmem:[%s166 + $0x890] sm:$0xff]
        %v765 = vld [vmem:[%s166 + $0x898] sm:$0xff]
        %v766 = vld [vmem:[%s166 + $0x8a0] sm:$0xff]
        %v767 = vld [vmem:[%s166 + $0x8a8] sm:$0xf]
        %v768 = vld [vmem:[%s166 + $0x8ac] sm:$0xff]
        %v769 = vld [vmem:[%s166 + $0x8b4] sm:$0xff]
        %v770 = vld [vmem:[%s166 + $0x8bc] sm:$0xff]
        %v771 = vld [vmem:[%s166 + $0x8c4] sm:$0xff]
        %v772 = vld [vmem:[%s166 + $0x8cc] sm:$0xff]
        %v773 = vld [vmem:[%s166 + $0x8d4] sm:$0xff]
        %v774 = vld [vmem:[%s166 + $0x8dc] sm:$0xff]
        %v775 = vld [vmem:[%s166 + $0x8e4] sm:$0xf]
        %v776 = vld [vmem:[%s166 + $0x8e8] sm:$0xff]
        %v777 = vld [vmem:[%s166 + $0x8f0] sm:$0xff]
        %v778 = vld [vmem:[%s166 + $0x8f8] sm:$0xff]
        %v779 = vld [vmem:[%s166 + $0x900] sm:$0xff]
        %v780 = vld [vmem:[%s166 + $0x908] sm:$0xff]
        %v781 = vld [vmem:[%s166 + $0x910] sm:$0xff]
        %v782 = vld [vmem:[%s166 + $0x918] sm:$0xff]
        %v783 = vld [vmem:[%s166 + $0x920] sm:$0xf]
        %v784 = vld [vmem:[%s166 + $0x924] sm:$0xff]
        %v785 = vld [vmem:[%s166 + $0x92c] sm:$0xff]
        %v786 = vld [vmem:[%s166 + $0x934] sm:$0xff]
        %v787 = vld [vmem:[%s166 + $0x93c] sm:$0xff]
        %v788 = vld [vmem:[%s166 + $0x944] sm:$0xff]
        %v789 = vld [vmem:[%s166 + $0x94c] sm:$0xff]
        %v790 = vld [vmem:[%s166 + $0x954] sm:$0xff]
        %v791 = vld [vmem:[%s166 + $0x95c] sm:$0xf]
        %v792 = vld [vmem:[%s166 + $0x960] sm:$0xff]
        %v793 = vld [vmem:[%s166 + $0x968] sm:$0xff]
        %v794 = vld [vmem:[%s166 + $0x970] sm:$0xff]
        %v795 = vld [vmem:[%s166 + $0x978] sm:$0xff]
        %v796 = vld [vmem:[%s166 + $0x980] sm:$0xff]
        %v797 = vld [vmem:[%s166 + $0x988] sm:$0xff]
        %v798 = vld [vmem:[%s166 + $0x990] sm:$0xff]
        %v799 = vld [vmem:[%s166 + $0x998] sm:$0xf]
        %v800 = vld [vmem:[%s166 + $0x99c] sm:$0xff]
        %v801 = vld [vmem:[%s166 + $0x9a4] sm:$0xff]
        %v802 = vld [vmem:[%s166 + $0x9ac] sm:$0xff]
        %v803 = vld [vmem:[%s166 + $0x9b4] sm:$0xff]
        %v804 = vld [vmem:[%s166 + $0x9bc] sm:$0xff]
        %v805 = vld [vmem:[%s166 + $0x9c4] sm:$0xff]
        %v806 = vld [vmem:[%s166 + $0x9cc] sm:$0xff]
        %v807 = vld [vmem:[%s166 + $0x9d4] sm:$0xf]
        %v808 = vld [vmem:[%s166 + $0x9d8] sm:$0xff]
        %v809 = vld [vmem:[%s166 + $0x9e0] sm:$0xff]
        %v810 = vld [vmem:[%s166 + $0x9e8] sm:$0xff]
        %v811 = vld [vmem:[%s166 + $0x9f0] sm:$0xff]
        %v812 = vld [vmem:[%s166 + $0x9f8] sm:$0xff]
        %v813 = vld [vmem:[%s166 + $0xa00] sm:$0xff]
        %v814 = vld [vmem:[%s166 + $0xa08] sm:$0xff]
        %v815 = vld [vmem:[%s166 + $0xa10] sm:$0xf]
        %v816 = vld [vmem:[%s166 + $0xa14] sm:$0xff]
        %v817 = vld [vmem:[%s166 + $0xa1c] sm:$0xff]
        %v818 = vld [vmem:[%s166 + $0xa24] sm:$0xff]
        %v819 = vld [vmem:[%s166 + $0xa2c] sm:$0xff]
        %v820 = vld [vmem:[%s166 + $0xa34] sm:$0xff]
        %v821 = vld [vmem:[%s166 + $0xa3c] sm:$0xff]
        %v822 = vld [vmem:[%s166 + $0xa44] sm:$0xff]
        %v823 = vld [vmem:[%s166 + $0xa4c] sm:$0xf]
        %v824 = vld [vmem:[%s166 + $0xa50] sm:$0xff]
        %v825 = vld [vmem:[%s166 + $0xa58] sm:$0xff]
        %v826 = vld [vmem:[%s166 + $0xa60] sm:$0xff]
        %v827 = vld [vmem:[%s166 + $0xa68] sm:$0xff]
        %v828 = vld [vmem:[%s166 + $0xa70] sm:$0xff]
        %v829 = vld [vmem:[%s166 + $0xa78] sm:$0xff]
        %v830 = vld [vmem:[%s166 + $0xa80] sm:$0xff]
        %v831 = vld [vmem:[%s166 + $0xa88] sm:$0xf]
        %v832 = vld [vmem:[%s166 + $0xa8c] sm:$0xff]
        %v833 = vld [vmem:[%s166 + $0xa94] sm:$0xff]
        %v834 = vld [vmem:[%s166 + $0xa9c] sm:$0xff]
        %v835 = vld [vmem:[%s166 + $0xaa4] sm:$0xff]
        %v836 = vld [vmem:[%s166 + $0xaac] sm:$0xff]
        %v837 = vld [vmem:[%s166 + $0xab4] sm:$0xff]
        %v838 = vld [vmem:[%s166 + $0xabc] sm:$0xff]
        %v839 = vld [vmem:[%s166 + $0xac4] sm:$0xf]
        %v840 = vld [vmem:[%s166 + $0xac8] sm:$0xff]
        %v841 = vld [vmem:[%s166 + $0xad0] sm:$0xff]
        %v842 = vld [vmem:[%s166 + $0xad8] sm:$0xff]
        %v843 = vld [vmem:[%s166 + $0xae0] sm:$0xff]
        %v844 = vld [vmem:[%s166 + $0xae8] sm:$0xff]
        %v845 = vld [vmem:[%s166 + $0xaf0] sm:$0xff]
        %v846 = vld [vmem:[%s166 + $0xaf8] sm:$0xff]
        %v847 = vld [vmem:[%s166 + $0xb00] sm:$0xf]
        %v848 = vld [vmem:[%s166 + $0xb04] sm:$0xff]
        %v849 = vld [vmem:[%s166 + $0xb0c] sm:$0xff]
        %v850 = vld [vmem:[%s166 + $0xb14] sm:$0xff]
        %v851 = vld [vmem:[%s166 + $0xb1c] sm:$0xff]
        %v852 = vld [vmem:[%s166 + $0xb24] sm:$0xff]
        %v853 = vld [vmem:[%s166 + $0xb2c] sm:$0xff]
        %v854 = vld [vmem:[%s166 + $0xb34] sm:$0xff]
        %v855 = vld [vmem:[%s166 + $0xb3c] sm:$0xf]
        %v856 = vld [vmem:[%s166 + $0xb40] sm:$0xff]
        %v857 = vld [vmem:[%s166 + $0xb48] sm:$0xff]
        %v858 = vld [vmem:[%s166 + $0xb50] sm:$0xff]
        %v859 = vld [vmem:[%s166 + $0xb58] sm:$0xff]
        %v860 = vld [vmem:[%s166 + $0xb60] sm:$0xff]
        %v861 = vld [vmem:[%s166 + $0xb68] sm:$0xff]
        %v862 = vld [vmem:[%s166 + $0xb70] sm:$0xff]
        %v863 = vld [vmem:[%s166 + $0xb78] sm:$0xf]
        %v864 = vld [vmem:[%s166 + $0xb7c] sm:$0xff]
        %v865 = vld [vmem:[%s166 + $0xb84] sm:$0xff]
        %v866 = vld [vmem:[%s166 + $0xb8c] sm:$0xff]
        %v867 = vld [vmem:[%s166 + $0xb94] sm:$0xff]
        %v868 = vld [vmem:[%s166 + $0xb9c] sm:$0xff]
        %v869 = vld [vmem:[%s166 + $0xba4] sm:$0xff]
        %v870 = vld [vmem:[%s166 + $0xbac] sm:$0xff]
        %v871 = vld [vmem:[%s166 + $0xbb4] sm:$0xf]
        %v872 = vld [vmem:[%s166 + $0xbb8] sm:$0xff]
        %v873 = vld [vmem:[%s166 + $0xbc0] sm:$0xff]
        %v874 = vld [vmem:[%s166 + $0xbc8] sm:$0xff]
        %v875 = vld [vmem:[%s166 + $0xbd0] sm:$0xff]
        %v876 = vld [vmem:[%s166 + $0xbd8] sm:$0xff]
        %v877 = vld [vmem:[%s166 + $0xbe0] sm:$0xff]
        %v878 = vld [vmem:[%s166 + $0xbe8] sm:$0xff]
        %v879 = vld [vmem:[%s166 + $0xbf0] sm:$0xf]
        %v880 = vld [vmem:[%s166 + $0xbf4] sm:$0xff]
        %v881 = vld [vmem:[%s166 + $0xbfc] sm:$0xff]
        %v882 = vld [vmem:[%s166 + $0xc04] sm:$0xff]
        %v883 = vld [vmem:[%s166 + $0xc0c] sm:$0xff]
        %v884 = vld [vmem:[%s166 + $0xc14] sm:$0xff]
        %v885 = vld [vmem:[%s166 + $0xc1c] sm:$0xff]
        %v886 = vld [vmem:[%s166 + $0xc24] sm:$0xff]
        %v887 = vld [vmem:[%s166 + $0xc2c] sm:$0xf]
        %v888 = vld [vmem:[%s166 + $0xc30] sm:$0xff]
        %v889 = vld [vmem:[%s166 + $0xc38] sm:$0xff]
        %v890 = vld [vmem:[%s166 + $0xc40] sm:$0xff]
        %v891 = vld [vmem:[%s166 + $0xc48] sm:$0xff]
        %v892 = vld [vmem:[%s166 + $0xc50] sm:$0xff]
        %v893 = vld [vmem:[%s166 + $0xc58] sm:$0xff]
        %v894 = vld [vmem:[%s166 + $0xc60] sm:$0xff]
        %v895 = vld [vmem:[%s166 + $0xc68] sm:$0xf]
        %v896 = vld [vmem:[%s166 + $0xc6c] sm:$0xff]
        %v897 = vld [vmem:[%s166 + $0xc74] sm:$0xff]
        %v898 = vld [vmem:[%s166 + $0xc7c] sm:$0xff]
        %v899 = vld [vmem:[%s166 + $0xc84] sm:$0xff]
        %v900 = vld [vmem:[%s166 + $0xc8c] sm:$0xff]
        %v901 = vld [vmem:[%s166 + $0xc94] sm:$0xff]
        %v902 = vld [vmem:[%s166 + $0xc9c] sm:$0xff]
        %v903 = vld [vmem:[%s166 + $0xca4] sm:$0xf]
        %v904 = vld [vmem:[%s166 + $0xca8] sm:$0xff]
        %v905 = vld [vmem:[%s166 + $0xcb0] sm:$0xff]
        %v906 = vld [vmem:[%s166 + $0xcb8] sm:$0xff]
        %v907 = vld [vmem:[%s166 + $0xcc0] sm:$0xff]
        %v908 = vld [vmem:[%s166 + $0xcc8] sm:$0xff]
        %v909 = vld [vmem:[%s166 + $0xcd0] sm:$0xff]
        %v910 = vld [vmem:[%s166 + $0xcd8] sm:$0xff]
        %v911 = vld [vmem:[%s166 + $0xce0] sm:$0xf]
        %v912 = vld [vmem:[%s166 + $0xce4] sm:$0xff]
        %v913 = vld [vmem:[%s166 + $0xcec] sm:$0xff]
        %v914 = vld [vmem:[%s166 + $0xcf4] sm:$0xff]
        %v915 = vld [vmem:[%s166 + $0xcfc] sm:$0xff]
        %v916 = vld [vmem:[%s166 + $0xd04] sm:$0xff]
        %v917 = vld [vmem:[%s166 + $0xd0c] sm:$0xff]
        %v918 = vld [vmem:[%s166 + $0xd14] sm:$0xff]
        %v919 = vld [vmem:[%s166 + $0xd1c] sm:$0xf]
        %v920 = vld [vmem:[%s166 + $0xd20] sm:$0xff]
        %v921 = vld [vmem:[%s166 + $0xd28] sm:$0xff]
        %v922 = vld [vmem:[%s166 + $0xd30] sm:$0xff]
        %v923 = vld [vmem:[%s166 + $0xd38] sm:$0xff]
        %v924 = vld [vmem:[%s166 + $0xd40] sm:$0xff]
        %v925 = vld [vmem:[%s166 + $0xd48] sm:$0xff]
        %v926 = vld [vmem:[%s166 + $0xd50] sm:$0xff]
        %v927 = vld [vmem:[%s166 + $0xd58] sm:$0xf]
        %v928 = vld [vmem:[%s166 + $0xd5c] sm:$0xff]
        %v929 = vld [vmem:[%s166 + $0xd64] sm:$0xff]
        %v930 = vld [vmem:[%s166 + $0xd6c] sm:$0xff]
        %v931 = vld [vmem:[%s166 + $0xd74] sm:$0xff]
        %v932 = vld [vmem:[%s166 + $0xd7c] sm:$0xff]
        %v933 = vld [vmem:[%s166 + $0xd84] sm:$0xff]
        %v934 = vld [vmem:[%s166 + $0xd8c] sm:$0xff]
        %v935 = vld [vmem:[%s166 + $0xd94] sm:$0xf]
        %v936 = vld [vmem:[%s166 + $0xd98] sm:$0xff]
        %v937 = vld [vmem:[%s166 + $0xda0] sm:$0xff]
        %v938 = vld [vmem:[%s166 + $0xda8] sm:$0xff]
        %v939 = vld [vmem:[%s166 + $0xdb0] sm:$0xff]
        %v940 = vld [vmem:[%s166 + $0xdb8] sm:$0xff]
        %v941 = vld [vmem:[%s166 + $0xdc0] sm:$0xff]
        %v942 = vld [vmem:[%s166 + $0xdc8] sm:$0xff]
        %v943 = vld [vmem:[%s166 + $0xdd0] sm:$0xf]
        %v944 = vld [vmem:[%s166 + $0xdd4] sm:$0xff]
        %v945 = vld [vmem:[%s166 + $0xddc] sm:$0xff]
        %v946 = vld [vmem:[%s166 + $0xde4] sm:$0xff]
        %v947 = vld [vmem:[%s166 + $0xdec] sm:$0xff]
        %v948 = vld [vmem:[%s166 + $0xdf4] sm:$0xff]
        %v949 = vld [vmem:[%s166 + $0xdfc] sm:$0xff]
        %v950 = vld [vmem:[%s166 + $0xe04] sm:$0xff]
        %v951 = vld [vmem:[%s166 + $0xe0c] sm:$0xf]
        %v952 = vld [vmem:[%s166 + $0xe10] sm:$0xff]
        %v953 = vld [vmem:[%s166 + $0xe18] sm:$0xff]
        %v954 = vld [vmem:[%s166 + $0xe20] sm:$0xff]
        %v955 = vld [vmem:[%s166 + $0xe28] sm:$0xff]
        %v956 = vld [vmem:[%s166 + $0xe30] sm:$0xff]
        %v957 = vld [vmem:[%s166 + $0xe38] sm:$0xff]
        %v958 = vld [vmem:[%s166 + $0xe40] sm:$0xff]
        %v959 = vld [vmem:[%s166 + $0xe48] sm:$0xf]
        %v960 = vld [vmem:[%s166 + $0xe4c] sm:$0xff]
        %v961 = vld [vmem:[%s166 + $0xe54] sm:$0xff]
        %v962 = vld [vmem:[%s166 + $0xe5c] sm:$0xff]
        %v963 = vld [vmem:[%s166 + $0xe64] sm:$0xff]
        %v964 = vld [vmem:[%s166 + $0xe6c] sm:$0xff]
        %v965 = vld [vmem:[%s166 + $0xe74] sm:$0xff]
        %v966 = vld [vmem:[%s166 + $0xe7c] sm:$0xff]
        %v967 = vld [vmem:[%s166 + $0xe84] sm:$0xf]
        %v968 = vld [vmem:[%s166 + $0xe88] sm:$0xff]
        %v969 = vld [vmem:[%s166 + $0xe90] sm:$0xff]
        %v970 = vld [vmem:[%s166 + $0xe98] sm:$0xff]
        %v971 = vld [vmem:[%s166 + $0xea0] sm:$0xff]
        %v972 = vld [vmem:[%s166 + $0xea8] sm:$0xff]
        %v973 = vld [vmem:[%s166 + $0xeb0] sm:$0xff]
        %v974 = vld [vmem:[%s166 + $0xeb8] sm:$0xff]
        %v975 = vld [vmem:[%s166 + $0xec0] sm:$0xf]
        %v976 = vld [vmem:[%s166 + $0xec4] sm:$0xff]
        %v977 = vld [vmem:[%s166 + $0xecc] sm:$0xff]
        %v978 = vld [vmem:[%s166 + $0xed4] sm:$0xff]
        %v979 = vld [vmem:[%s166 + $0xedc] sm:$0xff]
        %v980 = vld [vmem:[%s166 + $0xee4] sm:$0xff]
        %v981 = vld [vmem:[%s166 + $0xeec] sm:$0xff]
        %v982 = vld [vmem:[%s166 + $0xef4] sm:$0xff]
        %v983 = vld [vmem:[%s166 + $0xefc] sm:$0xf]
        %v984 = vld [vmem:[%s166 + $0xf00] sm:$0xff]
        %v985 = vld [vmem:[%s166 + $0xf08] sm:$0xff]
        %v986 = vld [vmem:[%s166 + $0xf10] sm:$0xff]
        %v987 = vld [vmem:[%s166 + $0xf18] sm:$0xff]
        %v988 = vld [vmem:[%s166 + $0xf20] sm:$0xff]
        %v989 = vld [vmem:[%s166 + $0xf28] sm:$0xff]
        %v990 = vld [vmem:[%s166 + $0xf30] sm:$0xff]
        %v991 = vld [vmem:[%s166 + $0xf38] sm:$0xf]
        %v992 = vld [vmem:[%s166 + $0xf3c] sm:$0xff]
        %v993 = vld [vmem:[%s166 + $0xf44] sm:$0xff]
        %v994 = vld [vmem:[%s166 + $0xf4c] sm:$0xff]
        %v995 = vld [vmem:[%s166 + $0xf54] sm:$0xff]
        %v996 = vld [vmem:[%s166 + $0xf5c] sm:$0xff]
        %v997 = vld [vmem:[%s166 + $0xf64] sm:$0xff]
        %v998 = vld [vmem:[%s166 + $0xf6c] sm:$0xff]
        %v999 = vld [vmem:[%s166 + $0xf74] sm:$0xf]
        %v1000 = vld [vmem:[%s166 + $0xf78] sm:$0xff]
        %v1001 = vld [vmem:[%s166 + $0xf80] sm:$0xff]
        %v1002 = vld [vmem:[%s166 + $0xf88] sm:$0xff]
        %v1003 = vld [vmem:[%s166 + $0xf90] sm:$0xff]
        %v1004 = vld [vmem:[%s166 + $0xf98] sm:$0xff]
        %v1005 = vld [vmem:[%s166 + $0xfa0] sm:$0xff]
        %v1006 = vld [vmem:[%s166 + $0xfa8] sm:$0xff]
        %v1007 = vld [vmem:[%s166 + $0xfb0] sm:$0xf]
        %v1008 = vld [vmem:[%s166 + $0xfb4] sm:$0xff]
        %v1009 = vld [vmem:[%s166 + $0xfbc] sm:$0xff]
        %v1010 = vld [vmem:[%s166 + $0xfc4] sm:$0xff]
        %v1011 = vld [vmem:[%s166 + $0xfcc] sm:$0xff]
        %v1012 = vld [vmem:[%s166 + $0xfd4] sm:$0xff]
        %v1013 = vld [vmem:[%s166 + $0xfdc] sm:$0xff]
        %v1014 = vld [vmem:[%s166 + $0xfe4] sm:$0xff]
        %v1015 = vld [vmem:[%s166 + $0xfec] sm:$0xf]
        %v1016 = vld [vmem:[%s166 + $0xff0] sm:$0xff]
        %v1017 = vld [vmem:[%s166 + $0xff8] sm:$0xff]
        %v1018 = vld [vmem:[%s166 + $0x1000] sm:$0xff]
        %v1019 = vld [vmem:[%s166 + $0x1008] sm:$0xff]
        %v1020 = vld [vmem:[%s166 + $0x1010] sm:$0xff]
        %v1021 = vld [vmem:[%s166 + $0x1018] sm:$0xff]
        %v1022 = vld [vmem:[%s166 + $0x1020] sm:$0xff]
        %v1023 = vld [vmem:[%s166 + $0x1028] sm:$0xf]
        %v1024 = vld [vmem:[%s166 + $0x102c] sm:$0xff]
        %v1025 = vld [vmem:[%s166 + $0x1034] sm:$0xff]
        %v1026 = vld [vmem:[%s166 + $0x103c] sm:$0xff]
        %v1027 = vld [vmem:[%s166 + $0x1044] sm:$0xff]
        %v1028 = vld [vmem:[%s166 + $0x104c] sm:$0xff]
        %v1029 = vld [vmem:[%s166 + $0x1054] sm:$0xff]
        %v1030 = vld [vmem:[%s166 + $0x105c] sm:$0xff]
        %v1031 = vld [vmem:[%s166 + $0x1064] sm:$0xf]
        %v1032 = vld [vmem:[%s166 + $0x1068] sm:$0xff]
        %v1033 = vld [vmem:[%s166 + $0x1070] sm:$0xff]
        %v1034 = vld [vmem:[%s166 + $0x1078] sm:$0xff]
        %v1035 = vld [vmem:[%s166 + $0x1080] sm:$0xff]
        %v1036 = vld [vmem:[%s166 + $0x1088] sm:$0xff]
        %v1037 = vld [vmem:[%s166 + $0x1090] sm:$0xff]
        %v1038 = vld [vmem:[%s166 + $0x1098] sm:$0xff]
        %v1039 = vld [vmem:[%s166 + $0x10a0] sm:$0xf]
        %v1040 = vld [vmem:[%s166 + $0x10a4] sm:$0xff]
        %v1041 = vld [vmem:[%s166 + $0x10ac] sm:$0xff]
        %v1042 = vld [vmem:[%s166 + $0x10b4] sm:$0xff]
        %v1043 = vld [vmem:[%s166 + $0x10bc] sm:$0xff]
        %v1044 = vld [vmem:[%s166 + $0x10c4] sm:$0xff]
        %v1045 = vld [vmem:[%s166 + $0x10cc] sm:$0xff]
        %v1046 = vld [vmem:[%s166 + $0x10d4] sm:$0xff]
        %v1047 = vld [vmem:[%s166 + $0x10dc] sm:$0xf]
        %v1048 = vld [vmem:[%s166 + $0x10e0] sm:$0xff]
        %v1049 = vld [vmem:[%s166 + $0x10e8] sm:$0xff]
        %v1050 = vld [vmem:[%s166 + $0x10f0] sm:$0xff]
        %v1051 = vld [vmem:[%s166 + $0x10f8] sm:$0xff]
        %v1052 = vld [vmem:[%s166 + $0x1100] sm:$0xff]
        %v1053 = vld [vmem:[%s166 + $0x1108] sm:$0xff]
        %v1054 = vld [vmem:[%s166 + $0x1110] sm:$0xff]
        %v1055 = vld [vmem:[%s166 + $0x1118] sm:$0xf]
        %v1056 = vld [vmem:[%s166 + $0x111c] sm:$0xff]
        %v1057 = vld [vmem:[%s166 + $0x1124] sm:$0xff]
        %v1058 = vld [vmem:[%s166 + $0x112c] sm:$0xff]
        %v1059 = vld [vmem:[%s166 + $0x1134] sm:$0xff]
        %v1060 = vld [vmem:[%s166 + $0x113c] sm:$0xff]
        %v1061 = vld [vmem:[%s166 + $0x1144] sm:$0xff]
        %v1062 = vld [vmem:[%s166 + $0x114c] sm:$0xff]
        %v1063 = vld [vmem:[%s166 + $0x1154] sm:$0xf]
        %v1064 = vld [vmem:[%s166 + $0x1158] sm:$0xff]
        %v1065 = vld [vmem:[%s166 + $0x1160] sm:$0xff]
        %v1066 = vld [vmem:[%s166 + $0x1168] sm:$0xff]
        %v1067 = vld [vmem:[%s166 + $0x1170] sm:$0xff]
        %v1068 = vld [vmem:[%s166 + $0x1178] sm:$0xff]
        %v1069 = vld [vmem:[%s166 + $0x1180] sm:$0xff]
        %v1070 = vld [vmem:[%s166 + $0x1188] sm:$0xff]
        %v1071 = vld [vmem:[%s166 + $0x1190] sm:$0xf]
        %v1072 = vld [vmem:[%s166 + $0x1194] sm:$0xff]
        %v1073 = vld [vmem:[%s166 + $0x119c] sm:$0xff]
        %v1074 = vld [vmem:[%s166 + $0x11a4] sm:$0xff]
        %v1075 = vld [vmem:[%s166 + $0x11ac] sm:$0xff]
        %v1076 = vld [vmem:[%s166 + $0x11b4] sm:$0xff]
        %v1077 = vld [vmem:[%s166 + $0x11bc] sm:$0xff]
        %v1078 = vld [vmem:[%s166 + $0x11c4] sm:$0xff]
        %v1079 = vld [vmem:[%s166 + $0x11cc] sm:$0xf]
        %v1080 = vld [vmem:[%s166 + $0x11d0] sm:$0xff]
        %v1081 = vld [vmem:[%s166 + $0x11d8] sm:$0xff]
        %v1082 = vld [vmem:[%s166 + $0x11e0] sm:$0xff]
        %v1083 = vld [vmem:[%s166 + $0x11e8] sm:$0xff]
        %v1084 = vld [vmem:[%s166 + $0x11f0] sm:$0xff]
        %v1085 = vld [vmem:[%s166 + $0x11f8] sm:$0xff]
        %v1086 = vld [vmem:[%s166 + $0x1200] sm:$0xff]
        %v1087 = vld [vmem:[%s166 + $0x1208] sm:$0xf]
        %v1088 = vld [vmem:[%s166 + $0x120c] sm:$0xff]
        %v1089 = vld [vmem:[%s166 + $0x1214] sm:$0xff]
        %v1090 = vld [vmem:[%s166 + $0x121c] sm:$0xff]
        %v1091 = vld [vmem:[%s166 + $0x1224] sm:$0xff]
        %v1092 = vld [vmem:[%s166 + $0x122c] sm:$0xff]
        %v1093 = vld [vmem:[%s166 + $0x1234] sm:$0xff]
        %v1094 = vld [vmem:[%s166 + $0x123c] sm:$0xff]
        %v1095 = vld [vmem:[%s166 + $0x1244] sm:$0xf]
        %v1096 = vld [vmem:[%s166 + $0x1248] sm:$0xff]
        %v1097 = vld [vmem:[%s166 + $0x1250] sm:$0xff]
        %v1098 = vld [vmem:[%s166 + $0x1258] sm:$0xff]
        %v1099 = vld [vmem:[%s166 + $0x1260] sm:$0xff]
        %v1100 = vld [vmem:[%s166 + $0x1268] sm:$0xff]
        %v1101 = vld [vmem:[%s166 + $0x1270] sm:$0xff]
        %v1102 = vld [vmem:[%s166 + $0x1278] sm:$0xff]
        %v1103 = vld [vmem:[%s166 + $0x1280] sm:$0xf]
        %v1104 = vld [vmem:[%s166 + $0x1284] sm:$0xff]
        %v1105 = vld [vmem:[%s166 + $0x128c] sm:$0xff]
        %v1106 = vld [vmem:[%s166 + $0x1294] sm:$0xff]
        %v1107 = vld [vmem:[%s166 + $0x129c] sm:$0xff]
        %v1108 = vld [vmem:[%s166 + $0x12a4] sm:$0xff]
        %v1109 = vld [vmem:[%s166 + $0x12ac] sm:$0xff]
        %v1110 = vld [vmem:[%s166 + $0x12b4] sm:$0xff]
        %v1111 = vld [vmem:[%s166 + $0x12bc] sm:$0xf]
        %1112 = vxpose.xlu0.c.b16.start [1/8] %v432, 128
        %1113 = vxpose.xlu0.c.b16.cont [2/8] %v433, 128
        %1114 = vxpose.xlu0.c.b16.cont [3/8] %v434, 128
        %1115 = vxpose.xlu0.c.b16.cont [4/8] %v435, 128
        %1116 = vxpose.xlu0.c.b16.cont [5/8] %v436, 128
        %1117 = vxpose.xlu0.c.b16.cont [6/8] %v437, 128
        %1118 = vxpose.xlu0.c.b16.cont [7/8] %v438, 128
        %1119 = vxpose.xlu0.c.b16.end [8/8] %v439, 128
        %v1120 = vpop.trf.xlu0
        %v1121 = vpop.trf.xlu0
        %v1122 = vpop.trf.xlu0
        %v1123 = vpop.trf.xlu0
        %v1124 = vpop.trf.xlu0
        %v1125 = vpop.trf.xlu0
        %v1126 = vpop.trf.xlu0
        %v1127 = vpop.trf.xlu0
        %1128 = vxpose.xlu0.c.b16.start [1/8] %v440, 128
        %1129 = vxpose.xlu0.c.b16.cont [2/8] %v441, 128
        %1130 = vxpose.xlu0.c.b16.cont [3/8] %v442, 128
        %1131 = vxpose.xlu0.c.b16.cont [4/8] %v443, 128
        %1132 = vxpose.xlu0.c.b16.cont [5/8] %v444, 128
        %1133 = vxpose.xlu0.c.b16.cont [6/8] %v445, 128
        %1134 = vxpose.xlu0.c.b16.cont [7/8] %v446, 128
        %1135 = vxpose.xlu0.c.b16.end [8/8] %v447, 128
        %v1136 = vpop.trf.xlu0
        %v1137 = vpop.trf.xlu0
        %v1138 = vpop.trf.xlu0
        %v1139 = vpop.trf.xlu0
        %v1140 = vpop.trf.xlu0
        %v1141 = vpop.trf.xlu0
        %v1142 = vpop.trf.xlu0
        %v1143 = vpop.trf.xlu0
        %1144 = vxpose.xlu0.c.b16.start [1/8] %v448, 128
        %1145 = vxpose.xlu0.c.b16.cont [2/8] %v449, 128
        %1146 = vxpose.xlu0.c.b16.cont [3/8] %v450, 128
        %1147 = vxpose.xlu0.c.b16.cont [4/8] %v451, 128
        %1148 = vxpose.xlu0.c.b16.cont [5/8] %v452, 128
        %1149 = vxpose.xlu0.c.b16.cont [6/8] %v453, 128
        %1150 = vxpose.xlu0.c.b16.cont [7/8] %v454, 128
        %1151 = vxpose.xlu0.c.b16.end [8/8] %v455, 128
        %v1152 = vpop.trf.xlu0
        %v1153 = vpop.trf.xlu0
        %v1154 = vpop.trf.xlu0
        %v1155 = vpop.trf.xlu0
        %v1156 = vpop.trf.xlu0
        %v1157 = vpop.trf.xlu0
        %v1158 = vpop.trf.xlu0
        %v1159 = vpop.trf.xlu0
        %1160 = vxpose.xlu0.c.b16.start [1/8] %v456, 128
        %1161 = vxpose.xlu0.c.b16.cont [2/8] %v457, 128
        %1162 = vxpose.xlu0.c.b16.cont [3/8] %v458, 128
        %1163 = vxpose.xlu0.c.b16.cont [4/8] %v459, 128
        %1164 = vxpose.xlu0.c.b16.cont [5/8] %v460, 128
        %1165 = vxpose.xlu0.c.b16.cont [6/8] %v461, 128
        %1166 = vxpose.xlu0.c.b16.cont [7/8] %v462, 128
        %1167 = vxpose.xlu0.c.b16.end [8/8] %v463, 128
        %v1168 = vpop.trf.xlu0
        %v1169 = vpop.trf.xlu0
        %v1170 = vpop.trf.xlu0
        %v1171 = vpop.trf.xlu0
        %v1172 = vpop.trf.xlu0
        %v1173 = vpop.trf.xlu0
        %v1174 = vpop.trf.xlu0
        %v1175 = vpop.trf.xlu0
        %1176 = vxpose.xlu0.c.b16.start [1/8] %v464, 128
        %1177 = vxpose.xlu0.c.b16.cont [2/8] %v465, 128
        %1178 = vxpose.xlu0.c.b16.cont [3/8] %v466, 128
        %1179 = vxpose.xlu0.c.b16.cont [4/8] %v467, 128
        %1180 = vxpose.xlu0.c.b16.cont [5/8] %v468, 128
        %1181 = vxpose.xlu0.c.b16.cont [6/8] %v469, 128
        %1182 = vxpose.xlu0.c.b16.cont [7/8] %v470, 128
        %1183 = vxpose.xlu0.c.b16.end [8/8] %v471, 128
        %v1184 = vpop.trf.xlu0
        %v1185 = vpop.trf.xlu0
        %v1186 = vpop.trf.xlu0
        %v1187 = vpop.trf.xlu0
        %v1188 = vpop.trf.xlu0
        %v1189 = vpop.trf.xlu0
        %v1190 = vpop.trf.xlu0
        %v1191 = vpop.trf.xlu0
        %v1832 = vunpack.c.l.b16 %v472
        %v1833 = vunpack.c.h.b16 %v472
        %v1834 = vunpack.c.l.b16 %v473
        %v1835 = vunpack.c.h.b16 %v473
        %v1836 = vunpack.c.l.b16 %v474
        %v1837 = vunpack.c.h.b16 %v474
        %v1838 = vunpack.c.l.b16 %v475
        %v1839 = vunpack.c.h.b16 %v475
        %v1840 = vunpack.c.l.b16 %v476
        %v1841 = vunpack.c.h.b16 %v476
        %v1842 = vunpack.c.l.b16 %v477
        %v1843 = vunpack.c.h.b16 %v477
        %v1844 = vunpack.c.l.b16 %v478
        %v1845 = vunpack.c.h.b16 %v478
        %v1846 = vunpack.c.l.b16 %v479
        %v1847 = vunpack.c.l.b16 %v480
        %v1848 = vunpack.c.h.b16 %v480
        %v1849 = vunpack.c.l.b16 %v481
        %v1850 = vunpack.c.h.b16 %v481
        %v1851 = vunpack.c.l.b16 %v482
        %v1852 = vunpack.c.h.b16 %v482
        %v1853 = vunpack.c.l.b16 %v483
        %v1854 = vunpack.c.h.b16 %v483
        %v1855 = vunpack.c.l.b16 %v484
        %v1856 = vunpack.c.h.b16 %v484
        %v1857 = vunpack.c.l.b16 %v485
        %v1858 = vunpack.c.h.b16 %v485
        %v1859 = vunpack.c.l.b16 %v486
        %v1860 = vunpack.c.h.b16 %v486
        %v1861 = vunpack.c.l.b16 %v487
        %v1862 = vunpack.c.l.b16 %v488
        %v1863 = vunpack.c.h.b16 %v488
        %v1864 = vunpack.c.l.b16 %v489
        %v1865 = vunpack.c.h.b16 %v489
        %v1866 = vunpack.c.l.b16 %v490
        %v1867 = vunpack.c.h.b16 %v490
        %v1868 = vunpack.c.l.b16 %v491
        %v1869 = vunpack.c.h.b16 %v491
        %v1870 = vunpack.c.l.b16 %v492
        %v1871 = vunpack.c.h.b16 %v492
        %v1872 = vunpack.c.l.b16 %v493
        %v1873 = vunpack.c.h.b16 %v493
        %v1874 = vunpack.c.l.b16 %v494
        %v1875 = vunpack.c.h.b16 %v494
        %v1876 = vunpack.c.l.b16 %v495
        %v1877 = vunpack.c.l.b16 %v496
        %v1878 = vunpack.c.h.b16 %v496
        %v1879 = vunpack.c.l.b16 %v497
        %v1880 = vunpack.c.h.b16 %v497
        %v1881 = vunpack.c.l.b16 %v498
        %v1882 = vunpack.c.h.b16 %v498
        %v1883 = vunpack.c.l.b16 %v499
        %v1884 = vunpack.c.h.b16 %v499
        %v1885 = vunpack.c.l.b16 %v500
        %v1886 = vunpack.c.h.b16 %v500
        %v1887 = vunpack.c.l.b16 %v501
        %v1888 = vunpack.c.h.b16 %v501
        %v1889 = vunpack.c.l.b16 %v502
        %v1890 = vunpack.c.h.b16 %v502
        %v1891 = vunpack.c.l.b16 %v503
        %v1892 = vunpack.c.l.b16 %v504
        %v1893 = vunpack.c.h.b16 %v504
        %v1894 = vunpack.c.l.b16 %v505
        %v1895 = vunpack.c.h.b16 %v505
        %v1896 = vunpack.c.l.b16 %v506
        %v1897 = vunpack.c.h.b16 %v506
        %v1898 = vunpack.c.l.b16 %v507
        %v1899 = vunpack.c.h.b16 %v507
        %v1900 = vunpack.c.l.b16 %v508
        %v1901 = vunpack.c.h.b16 %v508
        %v1902 = vunpack.c.l.b16 %v509
        %v1903 = vunpack.c.h.b16 %v509
        %v1904 = vunpack.c.l.b16 %v510
        %v1905 = vunpack.c.h.b16 %v510
        %v1906 = vunpack.c.l.b16 %v511
        %v1907 = vunpack.c.l.b16 %v512
        %v1908 = vunpack.c.h.b16 %v512
        %v1909 = vunpack.c.l.b16 %v513
        %v1910 = vunpack.c.h.b16 %v513
        %v1911 = vunpack.c.l.b16 %v514
        %v1912 = vunpack.c.h.b16 %v514
        %v1913 = vunpack.c.l.b16 %v515
        %v1914 = vunpack.c.h.b16 %v515
        %v1915 = vunpack.c.l.b16 %v516
        %v1916 = vunpack.c.h.b16 %v516
        %v1917 = vunpack.c.l.b16 %v517
        %v1918 = vunpack.c.h.b16 %v517
        %v1919 = vunpack.c.l.b16 %v518
        %v1920 = vunpack.c.h.b16 %v518
        %v1921 = vunpack.c.l.b16 %v519
        %v1922 = vunpack.c.l.b16 %v520
        %v1923 = vunpack.c.h.b16 %v520
        %v1924 = vunpack.c.l.b16 %v521
        %v1925 = vunpack.c.h.b16 %v521
        %v1926 = vunpack.c.l.b16 %v522
        %v1927 = vunpack.c.h.b16 %v522
        %v1928 = vunpack.c.l.b16 %v523
        %v1929 = vunpack.c.h.b16 %v523
        %v1930 = vunpack.c.l.b16 %v524
        %v1931 = vunpack.c.h.b16 %v524
        %v1932 = vunpack.c.l.b16 %v525
        %v1933 = vunpack.c.h.b16 %v525
        %v1934 = vunpack.c.l.b16 %v526
        %v1935 = vunpack.c.h.b16 %v526
        %v1936 = vunpack.c.l.b16 %v527
        %v1937 = vunpack.c.l.b16 %v528
        %v1938 = vunpack.c.h.b16 %v528
        %v1939 = vunpack.c.l.b16 %v529
        %v1940 = vunpack.c.h.b16 %v529
        %v1941 = vunpack.c.l.b16 %v530
        %v1942 = vunpack.c.h.b16 %v530
        %v1943 = vunpack.c.l.b16 %v531
        %v1944 = vunpack.c.h.b16 %v531
        %v1945 = vunpack.c.l.b16 %v532
        %v1946 = vunpack.c.h.b16 %v532
        %v1947 = vunpack.c.l.b16 %v533
        %v1948 = vunpack.c.h.b16 %v533
        %v1949 = vunpack.c.l.b16 %v534
        %v1950 = vunpack.c.h.b16 %v534
        %v1951 = vunpack.c.l.b16 %v535
        %v1952 = vunpack.c.l.b16 %v536
        %v1953 = vunpack.c.h.b16 %v536
        %v1954 = vunpack.c.l.b16 %v537
        %v1955 = vunpack.c.h.b16 %v537
        %v1956 = vunpack.c.l.b16 %v538
        %v1957 = vunpack.c.h.b16 %v538
        %v1958 = vunpack.c.l.b16 %v539
        %v1959 = vunpack.c.h.b16 %v539
        %v1960 = vunpack.c.l.b16 %v540
        %v1961 = vunpack.c.h.b16 %v540
        %v1962 = vunpack.c.l.b16 %v541
        %v1963 = vunpack.c.h.b16 %v541
        %v1964 = vunpack.c.l.b16 %v542
        %v1965 = vunpack.c.h.b16 %v542
        %v1966 = vunpack.c.l.b16 %v543
        %v1967 = vunpack.c.l.b16 %v544
        %v1968 = vunpack.c.h.b16 %v544
        %v1969 = vunpack.c.l.b16 %v545
        %v1970 = vunpack.c.h.b16 %v545
        %v1971 = vunpack.c.l.b16 %v546
        %v1972 = vunpack.c.h.b16 %v546
        %v1973 = vunpack.c.l.b16 %v547
        %v1974 = vunpack.c.h.b16 %v547
        %v1975 = vunpack.c.l.b16 %v548
        %v1976 = vunpack.c.h.b16 %v548
        %v1977 = vunpack.c.l.b16 %v549
        %v1978 = vunpack.c.h.b16 %v549
        %v1979 = vunpack.c.l.b16 %v550
        %v1980 = vunpack.c.h.b16 %v550
        %v1981 = vunpack.c.l.b16 %v551
        %v1982 = vunpack.c.l.b16 %v552
        %v1983 = vunpack.c.h.b16 %v552
        %v1984 = vunpack.c.l.b16 %v553
        %v1985 = vunpack.c.h.b16 %v553
        %v1986 = vunpack.c.l.b16 %v554
        %v1987 = vunpack.c.h.b16 %v554
        %v1988 = vunpack.c.l.b16 %v555
        %v1989 = vunpack.c.h.b16 %v555
        %v1990 = vunpack.c.l.b16 %v556
        %v1991 = vunpack.c.h.b16 %v556
        %v1992 = vunpack.c.l.b16 %v557
        %v1993 = vunpack.c.h.b16 %v557
        %v1994 = vunpack.c.l.b16 %v558
        %v1995 = vunpack.c.h.b16 %v558
        %v1996 = vunpack.c.l.b16 %v559
        %v1997 = vunpack.c.l.b16 %v560
        %v1998 = vunpack.c.h.b16 %v560
        %v1999 = vunpack.c.l.b16 %v561
        %v2000 = vunpack.c.h.b16 %v561
        %v2001 = vunpack.c.l.b16 %v562
        %v2002 = vunpack.c.h.b16 %v562
        %v2003 = vunpack.c.l.b16 %v563
        %v2004 = vunpack.c.h.b16 %v563
        %v2005 = vunpack.c.l.b16 %v564
        %v2006 = vunpack.c.h.b16 %v564
        %v2007 = vunpack.c.l.b16 %v565
        %v2008 = vunpack.c.h.b16 %v565
        %v2009 = vunpack.c.l.b16 %v566
        %v2010 = vunpack.c.h.b16 %v566
        %v2011 = vunpack.c.l.b16 %v567
        %v2012 = vunpack.c.l.b16 %v568
        %v2013 = vunpack.c.h.b16 %v568
        %v2014 = vunpack.c.l.b16 %v569
        %v2015 = vunpack.c.h.b16 %v569
        %v2016 = vunpack.c.l.b16 %v570
        %v2017 = vunpack.c.h.b16 %v570
        %v2018 = vunpack.c.l.b16 %v571
        %v2019 = vunpack.c.h.b16 %v571
        %v2020 = vunpack.c.l.b16 %v572
        %v2021 = vunpack.c.h.b16 %v572
        %v2022 = vunpack.c.l.b16 %v573
        %v2023 = vunpack.c.h.b16 %v573
        %v2024 = vunpack.c.l.b16 %v574
        %v2025 = vunpack.c.h.b16 %v574
        %v2026 = vunpack.c.l.b16 %v575
        %v2027 = vunpack.c.l.b16 %v576
        %v2028 = vunpack.c.h.b16 %v576
        %v2029 = vunpack.c.l.b16 %v577
        %v2030 = vunpack.c.h.b16 %v577
        %v2031 = vunpack.c.l.b16 %v578
        %v2032 = vunpack.c.h.b16 %v578
        %v2033 = vunpack.c.l.b16 %v579
        %v2034 = vunpack.c.h.b16 %v579
        %v2035 = vunpack.c.l.b16 %v580
        %v2036 = vunpack.c.h.b16 %v580
        %v2037 = vunpack.c.l.b16 %v581
        %v2038 = vunpack.c.h.b16 %v581
        %v2039 = vunpack.c.l.b16 %v582
        %v2040 = vunpack.c.h.b16 %v582
        %v2041 = vunpack.c.l.b16 %v583
        %v2042 = vunpack.c.l.b16 %v584
        %v2043 = vunpack.c.h.b16 %v584
        %v2044 = vunpack.c.l.b16 %v585
        %v2045 = vunpack.c.h.b16 %v585
        %v2046 = vunpack.c.l.b16 %v586
        %v2047 = vunpack.c.h.b16 %v586
        %v2048 = vunpack.c.l.b16 %v587
        %v2049 = vunpack.c.h.b16 %v587
        %v2050 = vunpack.c.l.b16 %v588
        %v2051 = vunpack.c.h.b16 %v588
        %v2052 = vunpack.c.l.b16 %v589
        %v2053 = vunpack.c.h.b16 %v589
        %v2054 = vunpack.c.l.b16 %v590
        %v2055 = vunpack.c.h.b16 %v590
        %v2056 = vunpack.c.l.b16 %v591
        %v2057 = vunpack.c.l.b16 %v592
        %v2058 = vunpack.c.h.b16 %v592
        %v2059 = vunpack.c.l.b16 %v593
        %v2060 = vunpack.c.h.b16 %v593
        %v2061 = vunpack.c.l.b16 %v594
        %v2062 = vunpack.c.h.b16 %v594
        %v2063 = vunpack.c.l.b16 %v595
        %v2064 = vunpack.c.h.b16 %v595
        %v2065 = vunpack.c.l.b16 %v596
        %v2066 = vunpack.c.h.b16 %v596
        %v2067 = vunpack.c.l.b16 %v597
        %v2068 = vunpack.c.h.b16 %v597
        %v2069 = vunpack.c.l.b16 %v598
        %v2070 = vunpack.c.h.b16 %v598
        %v2071 = vunpack.c.l.b16 %v599
        %v2072 = vunpack.c.l.b16 %v600
        %v2073 = vunpack.c.h.b16 %v600
        %v2074 = vunpack.c.l.b16 %v601
        %v2075 = vunpack.c.h.b16 %v601
        %v2076 = vunpack.c.l.b16 %v602
        %v2077 = vunpack.c.h.b16 %v602
        %v2078 = vunpack.c.l.b16 %v603
        %v2079 = vunpack.c.h.b16 %v603
        %v2080 = vunpack.c.l.b16 %v604
        %v2081 = vunpack.c.h.b16 %v604
        %v2082 = vunpack.c.l.b16 %v605
        %v2083 = vunpack.c.h.b16 %v605
        %v2084 = vunpack.c.l.b16 %v606
        %v2085 = vunpack.c.h.b16 %v606
        %v2086 = vunpack.c.l.b16 %v607
        %v2087 = vunpack.c.l.b16 %v608
        %v2088 = vunpack.c.h.b16 %v608
        %v2089 = vunpack.c.l.b16 %v609
        %v2090 = vunpack.c.h.b16 %v609
        %v2091 = vunpack.c.l.b16 %v610
        %v2092 = vunpack.c.h.b16 %v610
        %v2093 = vunpack.c.l.b16 %v611
        %v2094 = vunpack.c.h.b16 %v611
        %v2095 = vunpack.c.l.b16 %v612
        %v2096 = vunpack.c.h.b16 %v612
        %v2097 = vunpack.c.l.b16 %v613
        %v2098 = vunpack.c.h.b16 %v613
        %v2099 = vunpack.c.l.b16 %v614
        %v2100 = vunpack.c.h.b16 %v614
        %v2101 = vunpack.c.l.b16 %v615
        %v2102 = vunpack.c.l.b16 %v616
        %v2103 = vunpack.c.h.b16 %v616
        %v2104 = vunpack.c.l.b16 %v617
        %v2105 = vunpack.c.h.b16 %v617
        %v2106 = vunpack.c.l.b16 %v618
        %v2107 = vunpack.c.h.b16 %v618
        %v2108 = vunpack.c.l.b16 %v619
        %v2109 = vunpack.c.h.b16 %v619
        %v2110 = vunpack.c.l.b16 %v620
        %v2111 = vunpack.c.h.b16 %v620
        %v2112 = vunpack.c.l.b16 %v621
        %v2113 = vunpack.c.h.b16 %v621
        %v2114 = vunpack.c.l.b16 %v622
        %v2115 = vunpack.c.h.b16 %v622
        %v2116 = vunpack.c.l.b16 %v623
        %v2117 = vunpack.c.l.b16 %v624
        %v2118 = vunpack.c.h.b16 %v624
        %v2119 = vunpack.c.l.b16 %v625
        %v2120 = vunpack.c.h.b16 %v625
        %v2121 = vunpack.c.l.b16 %v626
        %v2122 = vunpack.c.h.b16 %v626
        %v2123 = vunpack.c.l.b16 %v627
        %v2124 = vunpack.c.h.b16 %v627
        %v2125 = vunpack.c.l.b16 %v628
        %v2126 = vunpack.c.h.b16 %v628
        %v2127 = vunpack.c.l.b16 %v629
        %v2128 = vunpack.c.h.b16 %v629
        %v2129 = vunpack.c.l.b16 %v630
        %v2130 = vunpack.c.h.b16 %v630
        %v2131 = vunpack.c.l.b16 %v631
        %v2132 = vunpack.c.l.b16 %v632
        %v2133 = vunpack.c.h.b16 %v632
        %v2134 = vunpack.c.l.b16 %v633
        %v2135 = vunpack.c.h.b16 %v633
        %v2136 = vunpack.c.l.b16 %v634
        %v2137 = vunpack.c.h.b16 %v634
        %v2138 = vunpack.c.l.b16 %v635
        %v2139 = vunpack.c.h.b16 %v635
        %v2140 = vunpack.c.l.b16 %v636
        %v2141 = vunpack.c.h.b16 %v636
        %v2142 = vunpack.c.l.b16 %v637
        %v2143 = vunpack.c.h.b16 %v637
        %v2144 = vunpack.c.l.b16 %v638
        %v2145 = vunpack.c.h.b16 %v638
        %v2146 = vunpack.c.l.b16 %v639
        %v2147 = vunpack.c.l.b16 %v640
        %v2148 = vunpack.c.h.b16 %v640
        %v2149 = vunpack.c.l.b16 %v641
        %v2150 = vunpack.c.h.b16 %v641
        %v2151 = vunpack.c.l.b16 %v642
        %v2152 = vunpack.c.h.b16 %v642
        %v2153 = vunpack.c.l.b16 %v643
        %v2154 = vunpack.c.h.b16 %v643
        %v2155 = vunpack.c.l.b16 %v644
        %v2156 = vunpack.c.h.b16 %v644
        %v2157 = vunpack.c.l.b16 %v645
        %v2158 = vunpack.c.h.b16 %v645
        %v2159 = vunpack.c.l.b16 %v646
        %v2160 = vunpack.c.h.b16 %v646
        %v2161 = vunpack.c.l.b16 %v647
        %v2162 = vunpack.c.l.b16 %v648
        %v2163 = vunpack.c.h.b16 %v648
        %v2164 = vunpack.c.l.b16 %v649
        %v2165 = vunpack.c.h.b16 %v649
        %v2166 = vunpack.c.l.b16 %v650
        %v2167 = vunpack.c.h.b16 %v650
        %v2168 = vunpack.c.l.b16 %v651
        %v2169 = vunpack.c.h.b16 %v651
        %v2170 = vunpack.c.l.b16 %v652
        %v2171 = vunpack.c.h.b16 %v652
        %v2172 = vunpack.c.l.b16 %v653
        %v2173 = vunpack.c.h.b16 %v653
        %v2174 = vunpack.c.l.b16 %v654
        %v2175 = vunpack.c.h.b16 %v654
        %v2176 = vunpack.c.l.b16 %v655
        %v2177 = vunpack.c.l.b16 %v656
        %v2178 = vunpack.c.h.b16 %v656
        %v2179 = vunpack.c.l.b16 %v657
        %v2180 = vunpack.c.h.b16 %v657
        %v2181 = vunpack.c.l.b16 %v658
        %v2182 = vunpack.c.h.b16 %v658
        %v2183 = vunpack.c.l.b16 %v659
        %v2184 = vunpack.c.h.b16 %v659
        %v2185 = vunpack.c.l.b16 %v660
        %v2186 = vunpack.c.h.b16 %v660
        %v2187 = vunpack.c.l.b16 %v661
        %v2188 = vunpack.c.h.b16 %v661
        %v2189 = vunpack.c.l.b16 %v662
        %v2190 = vunpack.c.h.b16 %v662
        %v2191 = vunpack.c.l.b16 %v663
        %v2192 = vunpack.c.l.b16 %v664
        %v2193 = vunpack.c.h.b16 %v664
        %v2194 = vunpack.c.l.b16 %v665
        %v2195 = vunpack.c.h.b16 %v665
        %v2196 = vunpack.c.l.b16 %v666
        %v2197 = vunpack.c.h.b16 %v666
        %v2198 = vunpack.c.l.b16 %v667
        %v2199 = vunpack.c.h.b16 %v667
        %v2200 = vunpack.c.l.b16 %v668
        %v2201 = vunpack.c.h.b16 %v668
        %v2202 = vunpack.c.l.b16 %v669
        %v2203 = vunpack.c.h.b16 %v669
        %v2204 = vunpack.c.l.b16 %v670
        %v2205 = vunpack.c.h.b16 %v670
        %v2206 = vunpack.c.l.b16 %v671
        %v2207 = vunpack.c.l.b16 %v672
        %v2208 = vunpack.c.h.b16 %v672
        %v2209 = vunpack.c.l.b16 %v673
        %v2210 = vunpack.c.h.b16 %v673
        %v2211 = vunpack.c.l.b16 %v674
        %v2212 = vunpack.c.h.b16 %v674
        %v2213 = vunpack.c.l.b16 %v675
        %v2214 = vunpack.c.h.b16 %v675
        %v2215 = vunpack.c.l.b16 %v676
        %v2216 = vunpack.c.h.b16 %v676
        %v2217 = vunpack.c.l.b16 %v677
        %v2218 = vunpack.c.h.b16 %v677
        %v2219 = vunpack.c.l.b16 %v678
        %v2220 = vunpack.c.h.b16 %v678
        %v2221 = vunpack.c.l.b16 %v679
        %v2222 = vunpack.c.l.b16 %v680
        %v2223 = vunpack.c.h.b16 %v680
        %v2224 = vunpack.c.l.b16 %v681
        %v2225 = vunpack.c.h.b16 %v681
        %v2226 = vunpack.c.l.b16 %v682
        %v2227 = vunpack.c.h.b16 %v682
        %v2228 = vunpack.c.l.b16 %v683
        %v2229 = vunpack.c.h.b16 %v683
        %v2230 = vunpack.c.l.b16 %v684
        %v2231 = vunpack.c.h.b16 %v684
        %v2232 = vunpack.c.l.b16 %v685
        %v2233 = vunpack.c.h.b16 %v685
        %v2234 = vunpack.c.l.b16 %v686
        %v2235 = vunpack.c.h.b16 %v686
        %v2236 = vunpack.c.l.b16 %v687
        %v2237 = vunpack.c.l.b16 %v688
        %v2238 = vunpack.c.h.b16 %v688
        %v2239 = vunpack.c.l.b16 %v689
        %v2240 = vunpack.c.h.b16 %v689
        %v2241 = vunpack.c.l.b16 %v690
        %v2242 = vunpack.c.h.b16 %v690
        %v2243 = vunpack.c.l.b16 %v691
        %v2244 = vunpack.c.h.b16 %v691
        %v2245 = vunpack.c.l.b16 %v692
        %v2246 = vunpack.c.h.b16 %v692
        %v2247 = vunpack.c.l.b16 %v693
        %v2248 = vunpack.c.h.b16 %v693
        %v2249 = vunpack.c.l.b16 %v694
        %v2250 = vunpack.c.h.b16 %v694
        %v2251 = vunpack.c.l.b16 %v695
        %v2252 = vunpack.c.l.b16 %v696
        %v2253 = vunpack.c.h.b16 %v696
        %v2254 = vunpack.c.l.b16 %v697
        %v2255 = vunpack.c.h.b16 %v697
        %v2256 = vunpack.c.l.b16 %v698
        %v2257 = vunpack.c.h.b16 %v698
        %v2258 = vunpack.c.l.b16 %v699
        %v2259 = vunpack.c.h.b16 %v699
        %v2260 = vunpack.c.l.b16 %v700
        %v2261 = vunpack.c.h.b16 %v700
        %v2262 = vunpack.c.l.b16 %v701
        %v2263 = vunpack.c.h.b16 %v701
        %v2264 = vunpack.c.l.b16 %v702
        %v2265 = vunpack.c.h.b16 %v702
        %v2266 = vunpack.c.l.b16 %v703
        %v2267 = vunpack.c.l.b16 %v704
        %v2268 = vunpack.c.h.b16 %v704
        %v2269 = vunpack.c.l.b16 %v705
        %v2270 = vunpack.c.h.b16 %v705
        %v2271 = vunpack.c.l.b16 %v706
        %v2272 = vunpack.c.h.b16 %v706
        %v2273 = vunpack.c.l.b16 %v707
        %v2274 = vunpack.c.h.b16 %v707
        %v2275 = vunpack.c.l.b16 %v708
        %v2276 = vunpack.c.h.b16 %v708
        %v2277 = vunpack.c.l.b16 %v709
        %v2278 = vunpack.c.h.b16 %v709
        %v2279 = vunpack.c.l.b16 %v710
        %v2280 = vunpack.c.h.b16 %v710
        %v2281 = vunpack.c.l.b16 %v711
        %v2282 = vunpack.c.l.b16 %v712
        %v2283 = vunpack.c.h.b16 %v712
        %v2284 = vunpack.c.l.b16 %v713
        %v2285 = vunpack.c.h.b16 %v713
        %v2286 = vunpack.c.l.b16 %v714
        %v2287 = vunpack.c.h.b16 %v714
        %v2288 = vunpack.c.l.b16 %v715
        %v2289 = vunpack.c.h.b16 %v715
        %v2290 = vunpack.c.l.b16 %v716
        %v2291 = vunpack.c.h.b16 %v716
        %v2292 = vunpack.c.l.b16 %v717
        %v2293 = vunpack.c.h.b16 %v717
        %v2294 = vunpack.c.l.b16 %v718
        %v2295 = vunpack.c.h.b16 %v718
        %v2296 = vunpack.c.l.b16 %v719
        %v2297 = vunpack.c.l.b16 %v720
        %v2298 = vunpack.c.h.b16 %v720
        %v2299 = vunpack.c.l.b16 %v721
        %v2300 = vunpack.c.h.b16 %v721
        %v2301 = vunpack.c.l.b16 %v722
        %v2302 = vunpack.c.h.b16 %v722
        %v2303 = vunpack.c.l.b16 %v723
        %v2304 = vunpack.c.h.b16 %v723
        %v2305 = vunpack.c.l.b16 %v724
        %v2306 = vunpack.c.h.b16 %v724
        %v2307 = vunpack.c.l.b16 %v725
        %v2308 = vunpack.c.h.b16 %v725
        %v2309 = vunpack.c.l.b16 %v726
        %v2310 = vunpack.c.h.b16 %v726
        %v2311 = vunpack.c.l.b16 %v727
        %v2312 = vunpack.c.l.b16 %v728
        %v2313 = vunpack.c.h.b16 %v728
        %v2314 = vunpack.c.l.b16 %v729
        %v2315 = vunpack.c.h.b16 %v729
        %v2316 = vunpack.c.l.b16 %v730
        %v2317 = vunpack.c.h.b16 %v730
        %v2318 = vunpack.c.l.b16 %v731
        %v2319 = vunpack.c.h.b16 %v731
        %v2320 = vunpack.c.l.b16 %v732
        %v2321 = vunpack.c.h.b16 %v732
        %v2322 = vunpack.c.l.b16 %v733
        %v2323 = vunpack.c.h.b16 %v733
        %v2324 = vunpack.c.l.b16 %v734
        %v2325 = vunpack.c.h.b16 %v734
        %v2326 = vunpack.c.l.b16 %v735
        %v2327 = vunpack.c.l.b16 %v736
        %v2328 = vunpack.c.h.b16 %v736
        %v2329 = vunpack.c.l.b16 %v737
        %v2330 = vunpack.c.h.b16 %v737
        %v2331 = vunpack.c.l.b16 %v738
        %v2332 = vunpack.c.h.b16 %v738
        %v2333 = vunpack.c.l.b16 %v739
        %v2334 = vunpack.c.h.b16 %v739
        %v2335 = vunpack.c.l.b16 %v740
        %v2336 = vunpack.c.h.b16 %v740
        %v2337 = vunpack.c.l.b16 %v741
        %v2338 = vunpack.c.h.b16 %v741
        %v2339 = vunpack.c.l.b16 %v742
        %v2340 = vunpack.c.h.b16 %v742
        %v2341 = vunpack.c.l.b16 %v743
        %v2342 = vunpack.c.l.b16 %v744
        %v2343 = vunpack.c.h.b16 %v744
        %v2344 = vunpack.c.l.b16 %v745
        %v2345 = vunpack.c.h.b16 %v745
        %v2346 = vunpack.c.l.b16 %v746
        %v2347 = vunpack.c.h.b16 %v746
        %v2348 = vunpack.c.l.b16 %v747
        %v2349 = vunpack.c.h.b16 %v747
        %v2350 = vunpack.c.l.b16 %v748
        %v2351 = vunpack.c.h.b16 %v748
        %v2352 = vunpack.c.l.b16 %v749
        %v2353 = vunpack.c.h.b16 %v749
        %v2354 = vunpack.c.l.b16 %v750
        %v2355 = vunpack.c.h.b16 %v750
        %v2356 = vunpack.c.l.b16 %v751
        %v2357 = vunpack.c.l.b16 %v752
        %v2358 = vunpack.c.h.b16 %v752
        %v2359 = vunpack.c.l.b16 %v753
        %v2360 = vunpack.c.h.b16 %v753
        %v2361 = vunpack.c.l.b16 %v754
        %v2362 = vunpack.c.h.b16 %v754
        %v2363 = vunpack.c.l.b16 %v755
        %v2364 = vunpack.c.h.b16 %v755
        %v2365 = vunpack.c.l.b16 %v756
        %v2366 = vunpack.c.h.b16 %v756
        %v2367 = vunpack.c.l.b16 %v757
        %v2368 = vunpack.c.h.b16 %v757
        %v2369 = vunpack.c.l.b16 %v758
        %v2370 = vunpack.c.h.b16 %v758
        %v2371 = vunpack.c.l.b16 %v759
        %v2372 = vunpack.c.l.b16 %v760
        %v2373 = vunpack.c.h.b16 %v760
        %v2374 = vunpack.c.l.b16 %v761
        %v2375 = vunpack.c.h.b16 %v761
        %v2376 = vunpack.c.l.b16 %v762
        %v2377 = vunpack.c.h.b16 %v762
        %v2378 = vunpack.c.l.b16 %v763
        %v2379 = vunpack.c.h.b16 %v763
        %v2380 = vunpack.c.l.b16 %v764
        %v2381 = vunpack.c.h.b16 %v764
        %v2382 = vunpack.c.l.b16 %v765
        %v2383 = vunpack.c.h.b16 %v765
        %v2384 = vunpack.c.l.b16 %v766
        %v2385 = vunpack.c.h.b16 %v766
        %v2386 = vunpack.c.l.b16 %v767
        %v2387 = vunpack.c.l.b16 %v768
        %v2388 = vunpack.c.h.b16 %v768
        %v2389 = vunpack.c.l.b16 %v769
        %v2390 = vunpack.c.h.b16 %v769
        %v2391 = vunpack.c.l.b16 %v770
        %v2392 = vunpack.c.h.b16 %v770
        %v2393 = vunpack.c.l.b16 %v771
        %v2394 = vunpack.c.h.b16 %v771
        %v2395 = vunpack.c.l.b16 %v772
        %v2396 = vunpack.c.h.b16 %v772
        %v2397 = vunpack.c.l.b16 %v773
        %v2398 = vunpack.c.h.b16 %v773
        %v2399 = vunpack.c.l.b16 %v774
        %v2400 = vunpack.c.h.b16 %v774
        %v2401 = vunpack.c.l.b16 %v775
        %v2402 = vunpack.c.l.b16 %v776
        %v2403 = vunpack.c.h.b16 %v776
        %v2404 = vunpack.c.l.b16 %v777
        %v2405 = vunpack.c.h.b16 %v777
        %v2406 = vunpack.c.l.b16 %v778
        %v2407 = vunpack.c.h.b16 %v778
        %v2408 = vunpack.c.l.b16 %v779
        %v2409 = vunpack.c.h.b16 %v779
        %v2410 = vunpack.c.l.b16 %v780
        %v2411 = vunpack.c.h.b16 %v780
        %v2412 = vunpack.c.l.b16 %v781
        %v2413 = vunpack.c.h.b16 %v781
        %v2414 = vunpack.c.l.b16 %v782
        %v2415 = vunpack.c.h.b16 %v782
        %v2416 = vunpack.c.l.b16 %v783
        %v2417 = vunpack.c.l.b16 %v784
        %v2418 = vunpack.c.h.b16 %v784
        %v2419 = vunpack.c.l.b16 %v785
        %v2420 = vunpack.c.h.b16 %v785
        %v2421 = vunpack.c.l.b16 %v786
        %v2422 = vunpack.c.h.b16 %v786
        %v2423 = vunpack.c.l.b16 %v787
        %v2424 = vunpack.c.h.b16 %v787
        %v2425 = vunpack.c.l.b16 %v788
        %v2426 = vunpack.c.h.b16 %v788
        %v2427 = vunpack.c.l.b16 %v789
        %v2428 = vunpack.c.h.b16 %v789
        %v2429 = vunpack.c.l.b16 %v790
        %v2430 = vunpack.c.h.b16 %v790
        %v2431 = vunpack.c.l.b16 %v791
        %v2432 = vunpack.c.l.b16 %v792
        %v2433 = vunpack.c.h.b16 %v792
        %v2434 = vunpack.c.l.b16 %v793
        %v2435 = vunpack.c.h.b16 %v793
        %v2436 = vunpack.c.l.b16 %v794
        %v2437 = vunpack.c.h.b16 %v794
        %v2438 = vunpack.c.l.b16 %v795
        %v2439 = vunpack.c.h.b16 %v795
        %v2440 = vunpack.c.l.b16 %v796
        %v2441 = vunpack.c.h.b16 %v796
        %v2442 = vunpack.c.l.b16 %v797
        %v2443 = vunpack.c.h.b16 %v797
        %v2444 = vunpack.c.l.b16 %v798
        %v2445 = vunpack.c.h.b16 %v798
        %v2446 = vunpack.c.l.b16 %v799
        %v2447 = vunpack.c.l.b16 %v800
        %v2448 = vunpack.c.h.b16 %v800
        %v2449 = vunpack.c.l.b16 %v801
        %v2450 = vunpack.c.h.b16 %v801
        %v2451 = vunpack.c.l.b16 %v802
        %v2452 = vunpack.c.h.b16 %v802
        %v2453 = vunpack.c.l.b16 %v803
        %v2454 = vunpack.c.h.b16 %v803
        %v2455 = vunpack.c.l.b16 %v804
        %v2456 = vunpack.c.h.b16 %v804
        %v2457 = vunpack.c.l.b16 %v805
        %v2458 = vunpack.c.h.b16 %v805
        %v2459 = vunpack.c.l.b16 %v806
        %v2460 = vunpack.c.h.b16 %v806
        %v2461 = vunpack.c.l.b16 %v807
        %v2462 = vunpack.c.l.b16 %v808
        %v2463 = vunpack.c.h.b16 %v808
        %v2464 = vunpack.c.l.b16 %v809
        %v2465 = vunpack.c.h.b16 %v809
        %v2466 = vunpack.c.l.b16 %v810
        %v2467 = vunpack.c.h.b16 %v810
        %v2468 = vunpack.c.l.b16 %v811
        %v2469 = vunpack.c.h.b16 %v811
        %v2470 = vunpack.c.l.b16 %v812
        %v2471 = vunpack.c.h.b16 %v812
        %v2472 = vunpack.c.l.b16 %v813
        %v2473 = vunpack.c.h.b16 %v813
        %v2474 = vunpack.c.l.b16 %v814
        %v2475 = vunpack.c.h.b16 %v814
        %v2476 = vunpack.c.l.b16 %v815
        %v2477 = vunpack.c.l.b16 %v816
        %v2478 = vunpack.c.h.b16 %v816
        %v2479 = vunpack.c.l.b16 %v817
        %v2480 = vunpack.c.h.b16 %v817
        %v2481 = vunpack.c.l.b16 %v818
        %v2482 = vunpack.c.h.b16 %v818
        %v2483 = vunpack.c.l.b16 %v819
        %v2484 = vunpack.c.h.b16 %v819
        %v2485 = vunpack.c.l.b16 %v820
        %v2486 = vunpack.c.h.b16 %v820
        %v2487 = vunpack.c.l.b16 %v821
        %v2488 = vunpack.c.h.b16 %v821
        %v2489 = vunpack.c.l.b16 %v822
        %v2490 = vunpack.c.h.b16 %v822
        %v2491 = vunpack.c.l.b16 %v823
        %v2492 = vunpack.c.l.b16 %v824
        %v2493 = vunpack.c.h.b16 %v824
        %v2494 = vunpack.c.l.b16 %v825
        %v2495 = vunpack.c.h.b16 %v825
        %v2496 = vunpack.c.l.b16 %v826
        %v2497 = vunpack.c.h.b16 %v826
        %v2498 = vunpack.c.l.b16 %v827
        %v2499 = vunpack.c.h.b16 %v827
        %v2500 = vunpack.c.l.b16 %v828
        %v2501 = vunpack.c.h.b16 %v828
        %v2502 = vunpack.c.l.b16 %v829
        %v2503 = vunpack.c.h.b16 %v829
        %v2504 = vunpack.c.l.b16 %v830
        %v2505 = vunpack.c.h.b16 %v830
        %v2506 = vunpack.c.l.b16 %v831
        %v2507 = vunpack.c.l.b16 %v832
        %v2508 = vunpack.c.h.b16 %v832
        %v2509 = vunpack.c.l.b16 %v833
        %v2510 = vunpack.c.h.b16 %v833
        %v2511 = vunpack.c.l.b16 %v834
        %v2512 = vunpack.c.h.b16 %v834
        %v2513 = vunpack.c.l.b16 %v835
        %v2514 = vunpack.c.h.b16 %v835
        %v2515 = vunpack.c.l.b16 %v836
        %v2516 = vunpack.c.h.b16 %v836
        %v2517 = vunpack.c.l.b16 %v837
        %v2518 = vunpack.c.h.b16 %v837
        %v2519 = vunpack.c.l.b16 %v838
        %v2520 = vunpack.c.h.b16 %v838
        %v2521 = vunpack.c.l.b16 %v839
        %v2522 = vunpack.c.l.b16 %v840
        %v2523 = vunpack.c.h.b16 %v840
        %v2524 = vunpack.c.l.b16 %v841
        %v2525 = vunpack.c.h.b16 %v841
        %v2526 = vunpack.c.l.b16 %v842
        %v2527 = vunpack.c.h.b16 %v842
        %v2528 = vunpack.c.l.b16 %v843
        %v2529 = vunpack.c.h.b16 %v843
        %v2530 = vunpack.c.l.b16 %v844
        %v2531 = vunpack.c.h.b16 %v844
        %v2532 = vunpack.c.l.b16 %v845
        %v2533 = vunpack.c.h.b16 %v845
        %v2534 = vunpack.c.l.b16 %v846
        %v2535 = vunpack.c.h.b16 %v846
        %v2536 = vunpack.c.l.b16 %v847
        %v2537 = vunpack.c.l.b16 %v848
        %v2538 = vunpack.c.h.b16 %v848
        %v2539 = vunpack.c.l.b16 %v849
        %v2540 = vunpack.c.h.b16 %v849
        %v2541 = vunpack.c.l.b16 %v850
        %v2542 = vunpack.c.h.b16 %v850
        %v2543 = vunpack.c.l.b16 %v851
        %v2544 = vunpack.c.h.b16 %v851
        %v2545 = vunpack.c.l.b16 %v852
        %v2546 = vunpack.c.h.b16 %v852
        %v2547 = vunpack.c.l.b16 %v853
        %v2548 = vunpack.c.h.b16 %v853
        %v2549 = vunpack.c.l.b16 %v854
        %v2550 = vunpack.c.h.b16 %v854
        %v2551 = vunpack.c.l.b16 %v855
        %v2552 = vunpack.c.l.b16 %v856
        %v2553 = vunpack.c.h.b16 %v856
        %v2554 = vunpack.c.l.b16 %v857
        %v2555 = vunpack.c.h.b16 %v857
        %v2556 = vunpack.c.l.b16 %v858
        %v2557 = vunpack.c.h.b16 %v858
        %v2558 = vunpack.c.l.b16 %v859
        %v2559 = vunpack.c.h.b16 %v859
        %v2560 = vunpack.c.l.b16 %v860
        %v2561 = vunpack.c.h.b16 %v860
        %v2562 = vunpack.c.l.b16 %v861
        %v2563 = vunpack.c.h.b16 %v861
        %v2564 = vunpack.c.l.b16 %v862
        %v2565 = vunpack.c.h.b16 %v862
        %v2566 = vunpack.c.l.b16 %v863
        %v2567 = vunpack.c.l.b16 %v864
        %v2568 = vunpack.c.h.b16 %v864
        %v2569 = vunpack.c.l.b16 %v865
        %v2570 = vunpack.c.h.b16 %v865
        %v2571 = vunpack.c.l.b16 %v866
        %v2572 = vunpack.c.h.b16 %v866
        %v2573 = vunpack.c.l.b16 %v867
        %v2574 = vunpack.c.h.b16 %v867
        %v2575 = vunpack.c.l.b16 %v868
        %v2576 = vunpack.c.h.b16 %v868
        %v2577 = vunpack.c.l.b16 %v869
        %v2578 = vunpack.c.h.b16 %v869
        %v2579 = vunpack.c.l.b16 %v870
        %v2580 = vunpack.c.h.b16 %v870
        %v2581 = vunpack.c.l.b16 %v871
        %v2582 = vunpack.c.l.b16 %v872
        %v2583 = vunpack.c.h.b16 %v872
        %v2584 = vunpack.c.l.b16 %v873
        %v2585 = vunpack.c.h.b16 %v873
        %v2586 = vunpack.c.l.b16 %v874
        %v2587 = vunpack.c.h.b16 %v874
        %v2588 = vunpack.c.l.b16 %v875
        %v2589 = vunpack.c.h.b16 %v875
        %v2590 = vunpack.c.l.b16 %v876
        %v2591 = vunpack.c.h.b16 %v876
        %v2592 = vunpack.c.l.b16 %v877
        %v2593 = vunpack.c.h.b16 %v877
        %v2594 = vunpack.c.l.b16 %v878
        %v2595 = vunpack.c.h.b16 %v878
        %v2596 = vunpack.c.l.b16 %v879
        %v2597 = vunpack.c.l.b16 %v880
        %v2598 = vunpack.c.h.b16 %v880
        %v2599 = vunpack.c.l.b16 %v881
        %v2600 = vunpack.c.h.b16 %v881
        %v2601 = vunpack.c.l.b16 %v882
        %v2602 = vunpack.c.h.b16 %v882
        %v2603 = vunpack.c.l.b16 %v883
        %v2604 = vunpack.c.h.b16 %v883
        %v2605 = vunpack.c.l.b16 %v884
        %v2606 = vunpack.c.h.b16 %v884
        %v2607 = vunpack.c.l.b16 %v885
        %v2608 = vunpack.c.h.b16 %v885
        %v2609 = vunpack.c.l.b16 %v886
        %v2610 = vunpack.c.h.b16 %v886
        %v2611 = vunpack.c.l.b16 %v887
        %v2612 = vunpack.c.l.b16 %v888
        %v2613 = vunpack.c.h.b16 %v888
        %v2614 = vunpack.c.l.b16 %v889
        %v2615 = vunpack.c.h.b16 %v889
        %v2616 = vunpack.c.l.b16 %v890
        %v2617 = vunpack.c.h.b16 %v890
        %v2618 = vunpack.c.l.b16 %v891
        %v2619 = vunpack.c.h.b16 %v891
        %v2620 = vunpack.c.l.b16 %v892
        %v2621 = vunpack.c.h.b16 %v892
        %v2622 = vunpack.c.l.b16 %v893
        %v2623 = vunpack.c.h.b16 %v893
        %v2624 = vunpack.c.l.b16 %v894
        %v2625 = vunpack.c.h.b16 %v894
        %v2626 = vunpack.c.l.b16 %v895
        %v2627 = vunpack.c.l.b16 %v896
        %v2628 = vunpack.c.h.b16 %v896
        %v2629 = vunpack.c.l.b16 %v897
        %v2630 = vunpack.c.h.b16 %v897
        %v2631 = vunpack.c.l.b16 %v898
        %v2632 = vunpack.c.h.b16 %v898
        %v2633 = vunpack.c.l.b16 %v899
        %v2634 = vunpack.c.h.b16 %v899
        %v2635 = vunpack.c.l.b16 %v900
        %v2636 = vunpack.c.h.b16 %v900
        %v2637 = vunpack.c.l.b16 %v901
        %v2638 = vunpack.c.h.b16 %v901
        %v2639 = vunpack.c.l.b16 %v902
        %v2640 = vunpack.c.h.b16 %v902
        %v2641 = vunpack.c.l.b16 %v903
        %v2642 = vunpack.c.l.b16 %v904
        %v2643 = vunpack.c.h.b16 %v904
        %v2644 = vunpack.c.l.b16 %v905
        %v2645 = vunpack.c.h.b16 %v905
        %v2646 = vunpack.c.l.b16 %v906
        %v2647 = vunpack.c.h.b16 %v906
        %v2648 = vunpack.c.l.b16 %v907
        %v2649 = vunpack.c.h.b16 %v907
        %v2650 = vunpack.c.l.b16 %v908
        %v2651 = vunpack.c.h.b16 %v908
        %v2652 = vunpack.c.l.b16 %v909
        %v2653 = vunpack.c.h.b16 %v909
        %v2654 = vunpack.c.l.b16 %v910
        %v2655 = vunpack.c.h.b16 %v910
        %v2656 = vunpack.c.l.b16 %v911
        %v2657 = vunpack.c.l.b16 %v912
        %v2658 = vunpack.c.h.b16 %v912
        %v2659 = vunpack.c.l.b16 %v913
        %v2660 = vunpack.c.h.b16 %v913
        %v2661 = vunpack.c.l.b16 %v914
        %v2662 = vunpack.c.h.b16 %v914
        %v2663 = vunpack.c.l.b16 %v915
        %v2664 = vunpack.c.h.b16 %v915
        %v2665 = vunpack.c.l.b16 %v916
        %v2666 = vunpack.c.h.b16 %v916
        %v2667 = vunpack.c.l.b16 %v917
        %v2668 = vunpack.c.h.b16 %v917
        %v2669 = vunpack.c.l.b16 %v918
        %v2670 = vunpack.c.h.b16 %v918
        %v2671 = vunpack.c.l.b16 %v919
        %v2672 = vunpack.c.l.b16 %v920
        %v2673 = vunpack.c.h.b16 %v920
        %v2674 = vunpack.c.l.b16 %v921
        %v2675 = vunpack.c.h.b16 %v921
        %v2676 = vunpack.c.l.b16 %v922
        %v2677 = vunpack.c.h.b16 %v922
        %v2678 = vunpack.c.l.b16 %v923
        %v2679 = vunpack.c.h.b16 %v923
        %v2680 = vunpack.c.l.b16 %v924
        %v2681 = vunpack.c.h.b16 %v924
        %v2682 = vunpack.c.l.b16 %v925
        %v2683 = vunpack.c.h.b16 %v925
        %v2684 = vunpack.c.l.b16 %v926
        %v2685 = vunpack.c.h.b16 %v926
        %v2686 = vunpack.c.l.b16 %v927
        %v2687 = vunpack.c.l.b16 %v928
        %v2688 = vunpack.c.h.b16 %v928
        %v2689 = vunpack.c.l.b16 %v929
        %v2690 = vunpack.c.h.b16 %v929
        %v2691 = vunpack.c.l.b16 %v930
        %v2692 = vunpack.c.h.b16 %v930
        %v2693 = vunpack.c.l.b16 %v931
        %v2694 = vunpack.c.h.b16 %v931
        %v2695 = vunpack.c.l.b16 %v932
        %v2696 = vunpack.c.h.b16 %v932
        %v2697 = vunpack.c.l.b16 %v933
        %v2698 = vunpack.c.h.b16 %v933
        %v2699 = vunpack.c.l.b16 %v934
        %v2700 = vunpack.c.h.b16 %v934
        %v2701 = vunpack.c.l.b16 %v935
        %v2702 = vunpack.c.l.b16 %v936
        %v2703 = vunpack.c.h.b16 %v936
        %v2704 = vunpack.c.l.b16 %v937
        %v2705 = vunpack.c.h.b16 %v937
        %v2706 = vunpack.c.l.b16 %v938
        %v2707 = vunpack.c.h.b16 %v938
        %v2708 = vunpack.c.l.b16 %v939
        %v2709 = vunpack.c.h.b16 %v939
        %v2710 = vunpack.c.l.b16 %v940
        %v2711 = vunpack.c.h.b16 %v940
        %v2712 = vunpack.c.l.b16 %v941
        %v2713 = vunpack.c.h.b16 %v941
        %v2714 = vunpack.c.l.b16 %v942
        %v2715 = vunpack.c.h.b16 %v942
        %v2716 = vunpack.c.l.b16 %v943
        %v2717 = vunpack.c.l.b16 %v944
        %v2718 = vunpack.c.h.b16 %v944
        %v2719 = vunpack.c.l.b16 %v945
        %v2720 = vunpack.c.h.b16 %v945
        %v2721 = vunpack.c.l.b16 %v946
        %v2722 = vunpack.c.h.b16 %v946
        %v2723 = vunpack.c.l.b16 %v947
        %v2724 = vunpack.c.h.b16 %v947
        %v2725 = vunpack.c.l.b16 %v948
        %v2726 = vunpack.c.h.b16 %v948
        %v2727 = vunpack.c.l.b16 %v949
        %v2728 = vunpack.c.h.b16 %v949
        %v2729 = vunpack.c.l.b16 %v950
        %v2730 = vunpack.c.h.b16 %v950
        %v2731 = vunpack.c.l.b16 %v951
        %v2732 = vunpack.c.l.b16 %v952
        %v2733 = vunpack.c.h.b16 %v952
        %v2734 = vunpack.c.l.b16 %v953
        %v2735 = vunpack.c.h.b16 %v953
        %v2736 = vunpack.c.l.b16 %v954
        %v2737 = vunpack.c.h.b16 %v954
        %v2738 = vunpack.c.l.b16 %v955
        %v2739 = vunpack.c.h.b16 %v955
        %v2740 = vunpack.c.l.b16 %v956
        %v2741 = vunpack.c.h.b16 %v956
        %v2742 = vunpack.c.l.b16 %v957
        %v2743 = vunpack.c.h.b16 %v957
        %v2744 = vunpack.c.l.b16 %v958
        %v2745 = vunpack.c.h.b16 %v958
        %v2746 = vunpack.c.l.b16 %v959
        %v2747 = vunpack.c.l.b16 %v960
        %v2748 = vunpack.c.h.b16 %v960
        %v2749 = vunpack.c.l.b16 %v961
        %v2750 = vunpack.c.h.b16 %v961
        %v2751 = vunpack.c.l.b16 %v962
        %v2752 = vunpack.c.h.b16 %v962
        %v2753 = vunpack.c.l.b16 %v963
        %v2754 = vunpack.c.h.b16 %v963
        %v2755 = vunpack.c.l.b16 %v964
        %v2756 = vunpack.c.h.b16 %v964
        %v2757 = vunpack.c.l.b16 %v965
        %v2758 = vunpack.c.h.b16 %v965
        %v2759 = vunpack.c.l.b16 %v966
        %v2760 = vunpack.c.h.b16 %v966
        %v2761 = vunpack.c.l.b16 %v967
        %v2762 = vunpack.c.l.b16 %v968
        %v2763 = vunpack.c.h.b16 %v968
        %v2764 = vunpack.c.l.b16 %v969
        %v2765 = vunpack.c.h.b16 %v969
        %v2766 = vunpack.c.l.b16 %v970
        %v2767 = vunpack.c.h.b16 %v970
        %v2768 = vunpack.c.l.b16 %v971
        %v2769 = vunpack.c.h.b16 %v971
        %v2770 = vunpack.c.l.b16 %v972
        %v2771 = vunpack.c.h.b16 %v972
        %v2772 = vunpack.c.l.b16 %v973
        %v2773 = vunpack.c.h.b16 %v973
        %v2774 = vunpack.c.l.b16 %v974
        %v2775 = vunpack.c.h.b16 %v974
        %v2776 = vunpack.c.l.b16 %v975
        %v2777 = vunpack.c.l.b16 %v976
        %v2778 = vunpack.c.h.b16 %v976
        %v2779 = vunpack.c.l.b16 %v977
        %v2780 = vunpack.c.h.b16 %v977
        %v2781 = vunpack.c.l.b16 %v978
        %v2782 = vunpack.c.h.b16 %v978
        %v2783 = vunpack.c.l.b16 %v979
        %v2784 = vunpack.c.h.b16 %v979
        %v2785 = vunpack.c.l.b16 %v980
        %v2786 = vunpack.c.h.b16 %v980
        %v2787 = vunpack.c.l.b16 %v981
        %v2788 = vunpack.c.h.b16 %v981
        %v2789 = vunpack.c.l.b16 %v982
        %v2790 = vunpack.c.h.b16 %v982
        %v2791 = vunpack.c.l.b16 %v983
        %v2792 = vunpack.c.l.b16 %v984
        %v2793 = vunpack.c.h.b16 %v984
        %v2794 = vunpack.c.l.b16 %v985
        %v2795 = vunpack.c.h.b16 %v985
        %v2796 = vunpack.c.l.b16 %v986
        %v2797 = vunpack.c.h.b16 %v986
        %v2798 = vunpack.c.l.b16 %v987
        %v2799 = vunpack.c.h.b16 %v987
        %v2800 = vunpack.c.l.b16 %v988
        %v2801 = vunpack.c.h.b16 %v988
        %v2802 = vunpack.c.l.b16 %v989
        %v2803 = vunpack.c.h.b16 %v989
        %v2804 = vunpack.c.l.b16 %v990
        %v2805 = vunpack.c.h.b16 %v990
        %v2806 = vunpack.c.l.b16 %v991
        %v2807 = vunpack.c.l.b16 %v992
        %v2808 = vunpack.c.h.b16 %v992
        %v2809 = vunpack.c.l.b16 %v993
        %v2810 = vunpack.c.h.b16 %v993
        %v2811 = vunpack.c.l.b16 %v994
        %v2812 = vunpack.c.h.b16 %v994
        %v2813 = vunpack.c.l.b16 %v995
        %v2814 = vunpack.c.h.b16 %v995
        %v2815 = vunpack.c.l.b16 %v996
        %v2816 = vunpack.c.h.b16 %v996
        %v2817 = vunpack.c.l.b16 %v997
        %v2818 = vunpack.c.h.b16 %v997
        %v2819 = vunpack.c.l.b16 %v998
        %v2820 = vunpack.c.h.b16 %v998
        %v2821 = vunpack.c.l.b16 %v999
        %v2822 = vunpack.c.l.b16 %v1000
        %v2823 = vunpack.c.h.b16 %v1000
        %v2824 = vunpack.c.l.b16 %v1001
        %v2825 = vunpack.c.h.b16 %v1001
        %v2826 = vunpack.c.l.b16 %v1002
        %v2827 = vunpack.c.h.b16 %v1002
        %v2828 = vunpack.c.l.b16 %v1003
        %v2829 = vunpack.c.h.b16 %v1003
        %v2830 = vunpack.c.l.b16 %v1004
        %v2831 = vunpack.c.h.b16 %v1004
        %v2832 = vunpack.c.l.b16 %v1005
        %v2833 = vunpack.c.h.b16 %v1005
        %v2834 = vunpack.c.l.b16 %v1006
        %v2835 = vunpack.c.h.b16 %v1006
        %v2836 = vunpack.c.l.b16 %v1007
        %v2837 = vunpack.c.l.b16 %v1008
        %v2838 = vunpack.c.h.b16 %v1008
        %v2839 = vunpack.c.l.b16 %v1009
        %v2840 = vunpack.c.h.b16 %v1009
        %v2841 = vunpack.c.l.b16 %v1010
        %v2842 = vunpack.c.h.b16 %v1010
        %v2843 = vunpack.c.l.b16 %v1011
        %v2844 = vunpack.c.h.b16 %v1011
        %v2845 = vunpack.c.l.b16 %v1012
        %v2846 = vunpack.c.h.b16 %v1012
        %v2847 = vunpack.c.l.b16 %v1013
        %v2848 = vunpack.c.h.b16 %v1013
        %v2849 = vunpack.c.l.b16 %v1014
        %v2850 = vunpack.c.h.b16 %v1014
        %v2851 = vunpack.c.l.b16 %v1015
        %v2852 = vunpack.c.l.b16 %v1016
        %v2853 = vunpack.c.h.b16 %v1016
        %v2854 = vunpack.c.l.b16 %v1017
        %v2855 = vunpack.c.h.b16 %v1017
        %v2856 = vunpack.c.l.b16 %v1018
        %v2857 = vunpack.c.h.b16 %v1018
        %v2858 = vunpack.c.l.b16 %v1019
        %v2859 = vunpack.c.h.b16 %v1019
        %v2860 = vunpack.c.l.b16 %v1020
        %v2861 = vunpack.c.h.b16 %v1020
        %v2862 = vunpack.c.l.b16 %v1021
        %v2863 = vunpack.c.h.b16 %v1021
        %v2864 = vunpack.c.l.b16 %v1022
        %v2865 = vunpack.c.h.b16 %v1022
        %v2866 = vunpack.c.l.b16 %v1023
        %v2867 = vunpack.c.l.b16 %v1024
        %v2868 = vunpack.c.h.b16 %v1024
        %v2869 = vunpack.c.l.b16 %v1025
        %v2870 = vunpack.c.h.b16 %v1025
        %v2871 = vunpack.c.l.b16 %v1026
        %v2872 = vunpack.c.h.b16 %v1026
        %v2873 = vunpack.c.l.b16 %v1027
        %v2874 = vunpack.c.h.b16 %v1027
        %v2875 = vunpack.c.l.b16 %v1028
        %v2876 = vunpack.c.h.b16 %v1028
        %v2877 = vunpack.c.l.b16 %v1029
        %v2878 = vunpack.c.h.b16 %v1029
        %v2879 = vunpack.c.l.b16 %v1030
        %v2880 = vunpack.c.h.b16 %v1030
        %v2881 = vunpack.c.l.b16 %v1031
        %v2882 = vunpack.c.l.b16 %v1032
        %v2883 = vunpack.c.h.b16 %v1032
        %v2884 = vunpack.c.l.b16 %v1033
        %v2885 = vunpack.c.h.b16 %v1033
        %v2886 = vunpack.c.l.b16 %v1034
        %v2887 = vunpack.c.h.b16 %v1034
        %v2888 = vunpack.c.l.b16 %v1035
        %v2889 = vunpack.c.h.b16 %v1035
        %v2890 = vunpack.c.l.b16 %v1036
        %v2891 = vunpack.c.h.b16 %v1036
        %v2892 = vunpack.c.l.b16 %v1037
        %v2893 = vunpack.c.h.b16 %v1037
        %v2894 = vunpack.c.l.b16 %v1038
        %v2895 = vunpack.c.h.b16 %v1038
        %v2896 = vunpack.c.l.b16 %v1039
        %v2897 = vunpack.c.l.b16 %v1040
        %v2898 = vunpack.c.h.b16 %v1040
        %v2899 = vunpack.c.l.b16 %v1041
        %v2900 = vunpack.c.h.b16 %v1041
        %v2901 = vunpack.c.l.b16 %v1042
        %v2902 = vunpack.c.h.b16 %v1042
        %v2903 = vunpack.c.l.b16 %v1043
        %v2904 = vunpack.c.h.b16 %v1043
        %v2905 = vunpack.c.l.b16 %v1044
        %v2906 = vunpack.c.h.b16 %v1044
        %v2907 = vunpack.c.l.b16 %v1045
        %v2908 = vunpack.c.h.b16 %v1045
        %v2909 = vunpack.c.l.b16 %v1046
        %v2910 = vunpack.c.h.b16 %v1046
        %v2911 = vunpack.c.l.b16 %v1047
        %v2912 = vunpack.c.l.b16 %v1048
        %v2913 = vunpack.c.h.b16 %v1048
        %v2914 = vunpack.c.l.b16 %v1049
        %v2915 = vunpack.c.h.b16 %v1049
        %v2916 = vunpack.c.l.b16 %v1050
        %v2917 = vunpack.c.h.b16 %v1050
        %v2918 = vunpack.c.l.b16 %v1051
        %v2919 = vunpack.c.h.b16 %v1051
        %v2920 = vunpack.c.l.b16 %v1052
        %v2921 = vunpack.c.h.b16 %v1052
        %v2922 = vunpack.c.l.b16 %v1053
        %v2923 = vunpack.c.h.b16 %v1053
        %v2924 = vunpack.c.l.b16 %v1054
        %v2925 = vunpack.c.h.b16 %v1054
        %v2926 = vunpack.c.l.b16 %v1055
        %v2927 = vunpack.c.l.b16 %v1056
        %v2928 = vunpack.c.h.b16 %v1056
        %v2929 = vunpack.c.l.b16 %v1057
        %v2930 = vunpack.c.h.b16 %v1057
        %v2931 = vunpack.c.l.b16 %v1058
        %v2932 = vunpack.c.h.b16 %v1058
        %v2933 = vunpack.c.l.b16 %v1059
        %v2934 = vunpack.c.h.b16 %v1059
        %v2935 = vunpack.c.l.b16 %v1060
        %v2936 = vunpack.c.h.b16 %v1060
        %v2937 = vunpack.c.l.b16 %v1061
        %v2938 = vunpack.c.h.b16 %v1061
        %v2939 = vunpack.c.l.b16 %v1062
        %v2940 = vunpack.c.h.b16 %v1062
        %v2941 = vunpack.c.l.b16 %v1063
        %v2942 = vunpack.c.l.b16 %v1064
        %v2943 = vunpack.c.h.b16 %v1064
        %v2944 = vunpack.c.l.b16 %v1065
        %v2945 = vunpack.c.h.b16 %v1065
        %v2946 = vunpack.c.l.b16 %v1066
        %v2947 = vunpack.c.h.b16 %v1066
        %v2948 = vunpack.c.l.b16 %v1067
        %v2949 = vunpack.c.h.b16 %v1067
        %v2950 = vunpack.c.l.b16 %v1068
        %v2951 = vunpack.c.h.b16 %v1068
        %v2952 = vunpack.c.l.b16 %v1069
        %v2953 = vunpack.c.h.b16 %v1069
        %v2954 = vunpack.c.l.b16 %v1070
        %v2955 = vunpack.c.h.b16 %v1070
        %v2956 = vunpack.c.l.b16 %v1071
        %v2957 = vunpack.c.l.b16 %v1072
        %v2958 = vunpack.c.h.b16 %v1072
        %v2959 = vunpack.c.l.b16 %v1073
        %v2960 = vunpack.c.h.b16 %v1073
        %v2961 = vunpack.c.l.b16 %v1074
        %v2962 = vunpack.c.h.b16 %v1074
        %v2963 = vunpack.c.l.b16 %v1075
        %v2964 = vunpack.c.h.b16 %v1075
        %v2965 = vunpack.c.l.b16 %v1076
        %v2966 = vunpack.c.h.b16 %v1076
        %v2967 = vunpack.c.l.b16 %v1077
        %v2968 = vunpack.c.h.b16 %v1077
        %v2969 = vunpack.c.l.b16 %v1078
        %v2970 = vunpack.c.h.b16 %v1078
        %v2971 = vunpack.c.l.b16 %v1079
        %v2972 = vunpack.c.l.b16 %v1080
        %v2973 = vunpack.c.h.b16 %v1080
        %v2974 = vunpack.c.l.b16 %v1081
        %v2975 = vunpack.c.h.b16 %v1081
        %v2976 = vunpack.c.l.b16 %v1082
        %v2977 = vunpack.c.h.b16 %v1082
        %v2978 = vunpack.c.l.b16 %v1083
        %v2979 = vunpack.c.h.b16 %v1083
        %v2980 = vunpack.c.l.b16 %v1084
        %v2981 = vunpack.c.h.b16 %v1084
        %v2982 = vunpack.c.l.b16 %v1085
        %v2983 = vunpack.c.h.b16 %v1085
        %v2984 = vunpack.c.l.b16 %v1086
        %v2985 = vunpack.c.h.b16 %v1086
        %v2986 = vunpack.c.l.b16 %v1087
        %v2987 = vunpack.c.l.b16 %v1088
        %v2988 = vunpack.c.h.b16 %v1088
        %v2989 = vunpack.c.l.b16 %v1089
        %v2990 = vunpack.c.h.b16 %v1089
        %v2991 = vunpack.c.l.b16 %v1090
        %v2992 = vunpack.c.h.b16 %v1090
        %v2993 = vunpack.c.l.b16 %v1091
        %v2994 = vunpack.c.h.b16 %v1091
        %v2995 = vunpack.c.l.b16 %v1092
        %v2996 = vunpack.c.h.b16 %v1092
        %v2997 = vunpack.c.l.b16 %v1093
        %v2998 = vunpack.c.h.b16 %v1093
        %v2999 = vunpack.c.l.b16 %v1094
        %v3000 = vunpack.c.h.b16 %v1094
        %v3001 = vunpack.c.l.b16 %v1095
        %v3002 = vunpack.c.l.b16 %v1096
        %v3003 = vunpack.c.h.b16 %v1096
        %v3004 = vunpack.c.l.b16 %v1097
        %v3005 = vunpack.c.h.b16 %v1097
        %v3006 = vunpack.c.l.b16 %v1098
        %v3007 = vunpack.c.h.b16 %v1098
        %v3008 = vunpack.c.l.b16 %v1099
        %v3009 = vunpack.c.h.b16 %v1099
        %v3010 = vunpack.c.l.b16 %v1100
        %v3011 = vunpack.c.h.b16 %v1100
        %v3012 = vunpack.c.l.b16 %v1101
        %v3013 = vunpack.c.h.b16 %v1101
        %v3014 = vunpack.c.l.b16 %v1102
        %v3015 = vunpack.c.h.b16 %v1102
        %v3016 = vunpack.c.l.b16 %v1103
        %v3017 = vunpack.c.l.b16 %v1104
        %v3018 = vunpack.c.h.b16 %v1104
        %v3019 = vunpack.c.l.b16 %v1105
        %v3020 = vunpack.c.h.b16 %v1105
        %v3021 = vunpack.c.l.b16 %v1106
        %v3022 = vunpack.c.h.b16 %v1106
        %v3023 = vunpack.c.l.b16 %v1107
        %v3024 = vunpack.c.h.b16 %v1107
        %v3025 = vunpack.c.l.b16 %v1108
        %v3026 = vunpack.c.h.b16 %v1108
        %v3027 = vunpack.c.l.b16 %v1109
        %v3028 = vunpack.c.h.b16 %v1109
        %v3029 = vunpack.c.l.b16 %v1110
        %v3030 = vunpack.c.h.b16 %v1110
        %v3031 = vunpack.c.l.b16 %v1111
        %v3032 = vpack.c.b16 %v1847, %v1832
        %v3033 = vpack.c.b16 %v1848, %v1833
        %v3034 = vpack.c.b16 %v1849, %v1834
        %v3035 = vpack.c.b16 %v1850, %v1835
        %v3036 = vpack.c.b16 %v1851, %v1836
        %v3037 = vpack.c.b16 %v1852, %v1837
        %v3038 = vpack.c.b16 %v1853, %v1838
        %v3039 = vpack.c.b16 %v1854, %v1839
        %v3040 = vpack.c.b16 %v1855, %v1840
        %v3041 = vpack.c.b16 %v1856, %v1841
        %v3042 = vpack.c.b16 %v1857, %v1842
        %v3043 = vpack.c.b16 %v1858, %v1843
        %v3044 = vpack.c.b16 %v1859, %v1844
        %v3045 = vpack.c.b16 %v1860, %v1845
        %v3046 = vpack.c.b16 %v1861, %v1846
        %v3047 = vpack.c.b16 %v1877, %v1862
        %v3048 = vpack.c.b16 %v1878, %v1863
        %v3049 = vpack.c.b16 %v1879, %v1864
        %v3050 = vpack.c.b16 %v1880, %v1865
        %v3051 = vpack.c.b16 %v1881, %v1866
        %v3052 = vpack.c.b16 %v1882, %v1867
        %v3053 = vpack.c.b16 %v1883, %v1868
        %v3054 = vpack.c.b16 %v1884, %v1869
        %v3055 = vpack.c.b16 %v1885, %v1870
        %v3056 = vpack.c.b16 %v1886, %v1871
        %v3057 = vpack.c.b16 %v1887, %v1872
        %v3058 = vpack.c.b16 %v1888, %v1873
        %v3059 = vpack.c.b16 %v1889, %v1874
        %v3060 = vpack.c.b16 %v1890, %v1875
        %v3061 = vpack.c.b16 %v1891, %v1876
        %v3062 = vpack.c.b16 %v1907, %v1892
        %v3063 = vpack.c.b16 %v1908, %v1893
        %v3064 = vpack.c.b16 %v1909, %v1894
        %v3065 = vpack.c.b16 %v1910, %v1895
        %v3066 = vpack.c.b16 %v1911, %v1896
        %v3067 = vpack.c.b16 %v1912, %v1897
        %v3068 = vpack.c.b16 %v1913, %v1898
        %v3069 = vpack.c.b16 %v1914, %v1899
        %v3070 = vpack.c.b16 %v1915, %v1900
        %v3071 = vpack.c.b16 %v1916, %v1901
        %v3072 = vpack.c.b16 %v1917, %v1902
        %v3073 = vpack.c.b16 %v1918, %v1903
        %v3074 = vpack.c.b16 %v1919, %v1904
        %v3075 = vpack.c.b16 %v1920, %v1905
        %v3076 = vpack.c.b16 %v1921, %v1906
        %v3077 = vpack.c.b16 %v1937, %v1922
        %v3078 = vpack.c.b16 %v1938, %v1923
        %v3079 = vpack.c.b16 %v1939, %v1924
        %v3080 = vpack.c.b16 %v1940, %v1925
        %v3081 = vpack.c.b16 %v1941, %v1926
        %v3082 = vpack.c.b16 %v1942, %v1927
        %v3083 = vpack.c.b16 %v1943, %v1928
        %v3084 = vpack.c.b16 %v1944, %v1929
        %v3085 = vpack.c.b16 %v1945, %v1930
        %v3086 = vpack.c.b16 %v1946, %v1931
        %v3087 = vpack.c.b16 %v1947, %v1932
        %v3088 = vpack.c.b16 %v1948, %v1933
        %v3089 = vpack.c.b16 %v1949, %v1934
        %v3090 = vpack.c.b16 %v1950, %v1935
        %v3091 = vpack.c.b16 %v1951, %v1936
        %v3092 = vpack.c.b16 %v1967, %v1952
        %v3093 = vpack.c.b16 %v1968, %v1953
        %v3094 = vpack.c.b16 %v1969, %v1954
        %v3095 = vpack.c.b16 %v1970, %v1955
        %v3096 = vpack.c.b16 %v1971, %v1956
        %v3097 = vpack.c.b16 %v1972, %v1957
        %v3098 = vpack.c.b16 %v1973, %v1958
        %v3099 = vpack.c.b16 %v1974, %v1959
        %v3100 = vpack.c.b16 %v1975, %v1960
        %v3101 = vpack.c.b16 %v1976, %v1961
        %v3102 = vpack.c.b16 %v1977, %v1962
        %v3103 = vpack.c.b16 %v1978, %v1963
        %v3104 = vpack.c.b16 %v1979, %v1964
        %v3105 = vpack.c.b16 %v1980, %v1965
        %v3106 = vpack.c.b16 %v1981, %v1966
        %v3107 = vpack.c.b16 %v1997, %v1982
        %v3108 = vpack.c.b16 %v1998, %v1983
        %v3109 = vpack.c.b16 %v1999, %v1984
        %v3110 = vpack.c.b16 %v2000, %v1985
        %v3111 = vpack.c.b16 %v2001, %v1986
        %v3112 = vpack.c.b16 %v2002, %v1987
        %v3113 = vpack.c.b16 %v2003, %v1988
        %v3114 = vpack.c.b16 %v2004, %v1989
        %v3115 = vpack.c.b16 %v2005, %v1990
        %v3116 = vpack.c.b16 %v2006, %v1991
        %v3117 = vpack.c.b16 %v2007, %v1992
        %v3118 = vpack.c.b16 %v2008, %v1993
        %v3119 = vpack.c.b16 %v2009, %v1994
        %v3120 = vpack.c.b16 %v2010, %v1995
        %v3121 = vpack.c.b16 %v2011, %v1996
        %v3122 = vpack.c.b16 %v2027, %v2012
        %v3123 = vpack.c.b16 %v2028, %v2013
        %v3124 = vpack.c.b16 %v2029, %v2014
        %v3125 = vpack.c.b16 %v2030, %v2015
        %v3126 = vpack.c.b16 %v2031, %v2016
        %v3127 = vpack.c.b16 %v2032, %v2017
        %v3128 = vpack.c.b16 %v2033, %v2018
        %v3129 = vpack.c.b16 %v2034, %v2019
        %v3130 = vpack.c.b16 %v2035, %v2020
        %v3131 = vpack.c.b16 %v2036, %v2021
        %v3132 = vpack.c.b16 %v2037, %v2022
        %v3133 = vpack.c.b16 %v2038, %v2023
        %v3134 = vpack.c.b16 %v2039, %v2024
        %v3135 = vpack.c.b16 %v2040, %v2025
        %v3136 = vpack.c.b16 %v2041, %v2026
        %v3137 = vpack.c.b16 %v2057, %v2042
        %v3138 = vpack.c.b16 %v2058, %v2043
        %v3139 = vpack.c.b16 %v2059, %v2044
        %v3140 = vpack.c.b16 %v2060, %v2045
        %v3141 = vpack.c.b16 %v2061, %v2046
        %v3142 = vpack.c.b16 %v2062, %v2047
        %v3143 = vpack.c.b16 %v2063, %v2048
        %v3144 = vpack.c.b16 %v2064, %v2049
        %v3145 = vpack.c.b16 %v2065, %v2050
        %v3146 = vpack.c.b16 %v2066, %v2051
        %v3147 = vpack.c.b16 %v2067, %v2052
        %v3148 = vpack.c.b16 %v2068, %v2053
        %v3149 = vpack.c.b16 %v2069, %v2054
        %v3150 = vpack.c.b16 %v2070, %v2055
        %v3151 = vpack.c.b16 %v2071, %v2056
        %v3152 = vpack.c.b16 %v2087, %v2072
        %v3153 = vpack.c.b16 %v2088, %v2073
        %v3154 = vpack.c.b16 %v2089, %v2074
        %v3155 = vpack.c.b16 %v2090, %v2075
        %v3156 = vpack.c.b16 %v2091, %v2076
        %v3157 = vpack.c.b16 %v2092, %v2077
        %v3158 = vpack.c.b16 %v2093, %v2078
        %v3159 = vpack.c.b16 %v2094, %v2079
        %v3160 = vpack.c.b16 %v2095, %v2080
        %v3161 = vpack.c.b16 %v2096, %v2081
        %v3162 = vpack.c.b16 %v2097, %v2082
        %v3163 = vpack.c.b16 %v2098, %v2083
        %v3164 = vpack.c.b16 %v2099, %v2084
        %v3165 = vpack.c.b16 %v2100, %v2085
        %v3166 = vpack.c.b16 %v2101, %v2086
        %v3167 = vpack.c.b16 %v2117, %v2102
        %v3168 = vpack.c.b16 %v2118, %v2103
        %v3169 = vpack.c.b16 %v2119, %v2104
        %v3170 = vpack.c.b16 %v2120, %v2105
        %v3171 = vpack.c.b16 %v2121, %v2106
        %v3172 = vpack.c.b16 %v2122, %v2107
        %v3173 = vpack.c.b16 %v2123, %v2108
        %v3174 = vpack.c.b16 %v2124, %v2109
        %v3175 = vpack.c.b16 %v2125, %v2110
        %v3176 = vpack.c.b16 %v2126, %v2111
        %v3177 = vpack.c.b16 %v2127, %v2112
        %v3178 = vpack.c.b16 %v2128, %v2113
        %v3179 = vpack.c.b16 %v2129, %v2114
        %v3180 = vpack.c.b16 %v2130, %v2115
        %v3181 = vpack.c.b16 %v2131, %v2116
        %v3182 = vpack.c.b16 %v2147, %v2132
        %v3183 = vpack.c.b16 %v2148, %v2133
        %v3184 = vpack.c.b16 %v2149, %v2134
        %v3185 = vpack.c.b16 %v2150, %v2135
        %v3186 = vpack.c.b16 %v2151, %v2136
        %v3187 = vpack.c.b16 %v2152, %v2137
        %v3188 = vpack.c.b16 %v2153, %v2138
        %v3189 = vpack.c.b16 %v2154, %v2139
        %v3190 = vpack.c.b16 %v2155, %v2140
        %v3191 = vpack.c.b16 %v2156, %v2141
        %v3192 = vpack.c.b16 %v2157, %v2142
        %v3193 = vpack.c.b16 %v2158, %v2143
        %v3194 = vpack.c.b16 %v2159, %v2144
        %v3195 = vpack.c.b16 %v2160, %v2145
        %v3196 = vpack.c.b16 %v2161, %v2146
        %v3197 = vpack.c.b16 %v2177, %v2162
        %v3198 = vpack.c.b16 %v2178, %v2163
        %v3199 = vpack.c.b16 %v2179, %v2164
        %v3200 = vpack.c.b16 %v2180, %v2165
        %v3201 = vpack.c.b16 %v2181, %v2166
        %v3202 = vpack.c.b16 %v2182, %v2167
        %v3203 = vpack.c.b16 %v2183, %v2168
        %v3204 = vpack.c.b16 %v2184, %v2169
        %v3205 = vpack.c.b16 %v2185, %v2170
        %v3206 = vpack.c.b16 %v2186, %v2171
        %v3207 = vpack.c.b16 %v2187, %v2172
        %v3208 = vpack.c.b16 %v2188, %v2173
        %v3209 = vpack.c.b16 %v2189, %v2174
        %v3210 = vpack.c.b16 %v2190, %v2175
        %v3211 = vpack.c.b16 %v2191, %v2176
        %v3212 = vpack.c.b16 %v2207, %v2192
        %v3213 = vpack.c.b16 %v2208, %v2193
        %v3214 = vpack.c.b16 %v2209, %v2194
        %v3215 = vpack.c.b16 %v2210, %v2195
        %v3216 = vpack.c.b16 %v2211, %v2196
        %v3217 = vpack.c.b16 %v2212, %v2197
        %v3218 = vpack.c.b16 %v2213, %v2198
        %v3219 = vpack.c.b16 %v2214, %v2199
        %v3220 = vpack.c.b16 %v2215, %v2200
        %v3221 = vpack.c.b16 %v2216, %v2201
        %v3222 = vpack.c.b16 %v2217, %v2202
        %v3223 = vpack.c.b16 %v2218, %v2203
        %v3224 = vpack.c.b16 %v2219, %v2204
        %v3225 = vpack.c.b16 %v2220, %v2205
        %v3226 = vpack.c.b16 %v2221, %v2206
        %v3227 = vpack.c.b16 %v2237, %v2222
        %v3228 = vpack.c.b16 %v2238, %v2223
        %v3229 = vpack.c.b16 %v2239, %v2224
        %v3230 = vpack.c.b16 %v2240, %v2225
        %v3231 = vpack.c.b16 %v2241, %v2226
        %v3232 = vpack.c.b16 %v2242, %v2227
        %v3233 = vpack.c.b16 %v2243, %v2228
        %v3234 = vpack.c.b16 %v2244, %v2229
        %v3235 = vpack.c.b16 %v2245, %v2230
        %v3236 = vpack.c.b16 %v2246, %v2231
        %v3237 = vpack.c.b16 %v2247, %v2232
        %v3238 = vpack.c.b16 %v2248, %v2233
        %v3239 = vpack.c.b16 %v2249, %v2234
        %v3240 = vpack.c.b16 %v2250, %v2235
        %v3241 = vpack.c.b16 %v2251, %v2236
        %v3242 = vpack.c.b16 %v2267, %v2252
        %v3243 = vpack.c.b16 %v2268, %v2253
        %v3244 = vpack.c.b16 %v2269, %v2254
        %v3245 = vpack.c.b16 %v2270, %v2255
        %v3246 = vpack.c.b16 %v2271, %v2256
        %v3247 = vpack.c.b16 %v2272, %v2257
        %v3248 = vpack.c.b16 %v2273, %v2258
        %v3249 = vpack.c.b16 %v2274, %v2259
        %v3250 = vpack.c.b16 %v2275, %v2260
        %v3251 = vpack.c.b16 %v2276, %v2261
        %v3252 = vpack.c.b16 %v2277, %v2262
        %v3253 = vpack.c.b16 %v2278, %v2263
        %v3254 = vpack.c.b16 %v2279, %v2264
        %v3255 = vpack.c.b16 %v2280, %v2265
        %v3256 = vpack.c.b16 %v2281, %v2266
        %v3257 = vpack.c.b16 %v2297, %v2282
        %v3258 = vpack.c.b16 %v2298, %v2283
        %v3259 = vpack.c.b16 %v2299, %v2284
        %v3260 = vpack.c.b16 %v2300, %v2285
        %v3261 = vpack.c.b16 %v2301, %v2286
        %v3262 = vpack.c.b16 %v2302, %v2287
        %v3263 = vpack.c.b16 %v2303, %v2288
        %v3264 = vpack.c.b16 %v2304, %v2289
        %v3265 = vpack.c.b16 %v2305, %v2290
        %v3266 = vpack.c.b16 %v2306, %v2291
        %v3267 = vpack.c.b16 %v2307, %v2292
        %v3268 = vpack.c.b16 %v2308, %v2293
        %v3269 = vpack.c.b16 %v2309, %v2294
        %v3270 = vpack.c.b16 %v2310, %v2295
        %v3271 = vpack.c.b16 %v2311, %v2296
        %v3272 = vpack.c.b16 %v2327, %v2312
        %v3273 = vpack.c.b16 %v2328, %v2313
        %v3274 = vpack.c.b16 %v2329, %v2314
        %v3275 = vpack.c.b16 %v2330, %v2315
        %v3276 = vpack.c.b16 %v2331, %v2316
        %v3277 = vpack.c.b16 %v2332, %v2317
        %v3278 = vpack.c.b16 %v2333, %v2318
        %v3279 = vpack.c.b16 %v2334, %v2319
        %v3280 = vpack.c.b16 %v2335, %v2320
        %v3281 = vpack.c.b16 %v2336, %v2321
        %v3282 = vpack.c.b16 %v2337, %v2322
        %v3283 = vpack.c.b16 %v2338, %v2323
        %v3284 = vpack.c.b16 %v2339, %v2324
        %v3285 = vpack.c.b16 %v2340, %v2325
        %v3286 = vpack.c.b16 %v2341, %v2326
        %v3287 = vpack.c.b16 %v2357, %v2342
        %v3288 = vpack.c.b16 %v2358, %v2343
        %v3289 = vpack.c.b16 %v2359, %v2344
        %v3290 = vpack.c.b16 %v2360, %v2345
        %v3291 = vpack.c.b16 %v2361, %v2346
        %v3292 = vpack.c.b16 %v2362, %v2347
        %v3293 = vpack.c.b16 %v2363, %v2348
        %v3294 = vpack.c.b16 %v2364, %v2349
        %v3295 = vpack.c.b16 %v2365, %v2350
        %v3296 = vpack.c.b16 %v2366, %v2351
        %v3297 = vpack.c.b16 %v2367, %v2352
        %v3298 = vpack.c.b16 %v2368, %v2353
        %v3299 = vpack.c.b16 %v2369, %v2354
        %v3300 = vpack.c.b16 %v2370, %v2355
        %v3301 = vpack.c.b16 %v2371, %v2356
        %v3302 = vpack.c.b16 %v2387, %v2372
        %v3303 = vpack.c.b16 %v2388, %v2373
        %v3304 = vpack.c.b16 %v2389, %v2374
        %v3305 = vpack.c.b16 %v2390, %v2375
        %v3306 = vpack.c.b16 %v2391, %v2376
        %v3307 = vpack.c.b16 %v2392, %v2377
        %v3308 = vpack.c.b16 %v2393, %v2378
        %v3309 = vpack.c.b16 %v2394, %v2379
        %v3310 = vpack.c.b16 %v2395, %v2380
        %v3311 = vpack.c.b16 %v2396, %v2381
        %v3312 = vpack.c.b16 %v2397, %v2382
        %v3313 = vpack.c.b16 %v2398, %v2383
        %v3314 = vpack.c.b16 %v2399, %v2384
        %v3315 = vpack.c.b16 %v2400, %v2385
        %v3316 = vpack.c.b16 %v2401, %v2386
        %v3317 = vpack.c.b16 %v2417, %v2402
        %v3318 = vpack.c.b16 %v2418, %v2403
        %v3319 = vpack.c.b16 %v2419, %v2404
        %v3320 = vpack.c.b16 %v2420, %v2405
        %v3321 = vpack.c.b16 %v2421, %v2406
        %v3322 = vpack.c.b16 %v2422, %v2407
        %v3323 = vpack.c.b16 %v2423, %v2408
        %v3324 = vpack.c.b16 %v2424, %v2409
        %v3325 = vpack.c.b16 %v2425, %v2410
        %v3326 = vpack.c.b16 %v2426, %v2411
        %v3327 = vpack.c.b16 %v2427, %v2412
        %v3328 = vpack.c.b16 %v2428, %v2413
        %v3329 = vpack.c.b16 %v2429, %v2414
        %v3330 = vpack.c.b16 %v2430, %v2415
        %v3331 = vpack.c.b16 %v2431, %v2416
        %v3332 = vpack.c.b16 %v2447, %v2432
        %v3333 = vpack.c.b16 %v2448, %v2433
        %v3334 = vpack.c.b16 %v2449, %v2434
        %v3335 = vpack.c.b16 %v2450, %v2435
        %v3336 = vpack.c.b16 %v2451, %v2436
        %v3337 = vpack.c.b16 %v2452, %v2437
        %v3338 = vpack.c.b16 %v2453, %v2438
        %v3339 = vpack.c.b16 %v2454, %v2439
        %v3340 = vpack.c.b16 %v2455, %v2440
        %v3341 = vpack.c.b16 %v2456, %v2441
        %v3342 = vpack.c.b16 %v2457, %v2442
        %v3343 = vpack.c.b16 %v2458, %v2443
        %v3344 = vpack.c.b16 %v2459, %v2444
        %v3345 = vpack.c.b16 %v2460, %v2445
        %v3346 = vpack.c.b16 %v2461, %v2446
        %v3347 = vpack.c.b16 %v2477, %v2462
        %v3348 = vpack.c.b16 %v2478, %v2463
        %v3349 = vpack.c.b16 %v2479, %v2464
        %v3350 = vpack.c.b16 %v2480, %v2465
        %v3351 = vpack.c.b16 %v2481, %v2466
        %v3352 = vpack.c.b16 %v2482, %v2467
        %v3353 = vpack.c.b16 %v2483, %v2468
        %v3354 = vpack.c.b16 %v2484, %v2469
        %v3355 = vpack.c.b16 %v2485, %v2470
        %v3356 = vpack.c.b16 %v2486, %v2471
        %v3357 = vpack.c.b16 %v2487, %v2472
        %v3358 = vpack.c.b16 %v2488, %v2473
        %v3359 = vpack.c.b16 %v2489, %v2474
        %v3360 = vpack.c.b16 %v2490, %v2475
        %v3361 = vpack.c.b16 %v2491, %v2476
        %v3362 = vpack.c.b16 %v2507, %v2492
        %v3363 = vpack.c.b16 %v2508, %v2493
        %v3364 = vpack.c.b16 %v2509, %v2494
        %v3365 = vpack.c.b16 %v2510, %v2495
        %v3366 = vpack.c.b16 %v2511, %v2496
        %v3367 = vpack.c.b16 %v2512, %v2497
        %v3368 = vpack.c.b16 %v2513, %v2498
        %v3369 = vpack.c.b16 %v2514, %v2499
        %v3370 = vpack.c.b16 %v2515, %v2500
        %v3371 = vpack.c.b16 %v2516, %v2501
        %v3372 = vpack.c.b16 %v2517, %v2502
        %v3373 = vpack.c.b16 %v2518, %v2503
        %v3374 = vpack.c.b16 %v2519, %v2504
        %v3375 = vpack.c.b16 %v2520, %v2505
        %v3376 = vpack.c.b16 %v2521, %v2506
        %v3377 = vpack.c.b16 %v2537, %v2522
        %v3378 = vpack.c.b16 %v2538, %v2523
        %v3379 = vpack.c.b16 %v2539, %v2524
        %v3380 = vpack.c.b16 %v2540, %v2525
        %v3381 = vpack.c.b16 %v2541, %v2526
        %v3382 = vpack.c.b16 %v2542, %v2527
        %v3383 = vpack.c.b16 %v2543, %v2528
        %v3384 = vpack.c.b16 %v2544, %v2529
        %v3385 = vpack.c.b16 %v2545, %v2530
        %v3386 = vpack.c.b16 %v2546, %v2531
        %v3387 = vpack.c.b16 %v2547, %v2532
        %v3388 = vpack.c.b16 %v2548, %v2533
        %v3389 = vpack.c.b16 %v2549, %v2534
        %v3390 = vpack.c.b16 %v2550, %v2535
        %v3391 = vpack.c.b16 %v2551, %v2536
        %v3392 = vpack.c.b16 %v2567, %v2552
        %v3393 = vpack.c.b16 %v2568, %v2553
        %v3394 = vpack.c.b16 %v2569, %v2554
        %v3395 = vpack.c.b16 %v2570, %v2555
        %v3396 = vpack.c.b16 %v2571, %v2556
        %v3397 = vpack.c.b16 %v2572, %v2557
        %v3398 = vpack.c.b16 %v2573, %v2558
        %v3399 = vpack.c.b16 %v2574, %v2559
        %v3400 = vpack.c.b16 %v2575, %v2560
        %v3401 = vpack.c.b16 %v2576, %v2561
        %v3402 = vpack.c.b16 %v2577, %v2562
        %v3403 = vpack.c.b16 %v2578, %v2563
        %v3404 = vpack.c.b16 %v2579, %v2564
        %v3405 = vpack.c.b16 %v2580, %v2565
        %v3406 = vpack.c.b16 %v2581, %v2566
        %v3407 = vpack.c.b16 %v2597, %v2582
        %v3408 = vpack.c.b16 %v2598, %v2583
        %v3409 = vpack.c.b16 %v2599, %v2584
        %v3410 = vpack.c.b16 %v2600, %v2585
        %v3411 = vpack.c.b16 %v2601, %v2586
        %v3412 = vpack.c.b16 %v2602, %v2587
        %v3413 = vpack.c.b16 %v2603, %v2588
        %v3414 = vpack.c.b16 %v2604, %v2589
        %v3415 = vpack.c.b16 %v2605, %v2590
        %v3416 = vpack.c.b16 %v2606, %v2591
        %v3417 = vpack.c.b16 %v2607, %v2592
        %v3418 = vpack.c.b16 %v2608, %v2593
        %v3419 = vpack.c.b16 %v2609, %v2594
        %v3420 = vpack.c.b16 %v2610, %v2595
        %v3421 = vpack.c.b16 %v2611, %v2596
        %v3422 = vpack.c.b16 %v2627, %v2612
        %v3423 = vpack.c.b16 %v2628, %v2613
        %v3424 = vpack.c.b16 %v2629, %v2614
        %v3425 = vpack.c.b16 %v2630, %v2615
        %v3426 = vpack.c.b16 %v2631, %v2616
        %v3427 = vpack.c.b16 %v2632, %v2617
        %v3428 = vpack.c.b16 %v2633, %v2618
        %v3429 = vpack.c.b16 %v2634, %v2619
        %v3430 = vpack.c.b16 %v2635, %v2620
        %v3431 = vpack.c.b16 %v2636, %v2621
        %v3432 = vpack.c.b16 %v2637, %v2622
        %v3433 = vpack.c.b16 %v2638, %v2623
        %v3434 = vpack.c.b16 %v2639, %v2624
        %v3435 = vpack.c.b16 %v2640, %v2625
        %v3436 = vpack.c.b16 %v2641, %v2626
        %v3437 = vpack.c.b16 %v2657, %v2642
        %v3438 = vpack.c.b16 %v2658, %v2643
        %v3439 = vpack.c.b16 %v2659, %v2644
        %v3440 = vpack.c.b16 %v2660, %v2645
        %v3441 = vpack.c.b16 %v2661, %v2646
        %v3442 = vpack.c.b16 %v2662, %v2647
        %v3443 = vpack.c.b16 %v2663, %v2648
        %v3444 = vpack.c.b16 %v2664, %v2649
        %v3445 = vpack.c.b16 %v2665, %v2650
        %v3446 = vpack.c.b16 %v2666, %v2651
        %v3447 = vpack.c.b16 %v2667, %v2652
        %v3448 = vpack.c.b16 %v2668, %v2653
        %v3449 = vpack.c.b16 %v2669, %v2654
        %v3450 = vpack.c.b16 %v2670, %v2655
        %v3451 = vpack.c.b16 %v2671, %v2656
        %v3452 = vpack.c.b16 %v2687, %v2672
        %v3453 = vpack.c.b16 %v2688, %v2673
        %v3454 = vpack.c.b16 %v2689, %v2674
        %v3455 = vpack.c.b16 %v2690, %v2675
        %v3456 = vpack.c.b16 %v2691, %v2676
        %v3457 = vpack.c.b16 %v2692, %v2677
        %v3458 = vpack.c.b16 %v2693, %v2678
        %v3459 = vpack.c.b16 %v2694, %v2679
        %v3460 = vpack.c.b16 %v2695, %v2680
        %v3461 = vpack.c.b16 %v2696, %v2681
        %v3462 = vpack.c.b16 %v2697, %v2682
        %v3463 = vpack.c.b16 %v2698, %v2683
        %v3464 = vpack.c.b16 %v2699, %v2684
        %v3465 = vpack.c.b16 %v2700, %v2685
        %v3466 = vpack.c.b16 %v2701, %v2686
        %v3467 = vpack.c.b16 %v2717, %v2702
        %v3468 = vpack.c.b16 %v2718, %v2703
        %v3469 = vpack.c.b16 %v2719, %v2704
        %v3470 = vpack.c.b16 %v2720, %v2705
        %v3471 = vpack.c.b16 %v2721, %v2706
        %v3472 = vpack.c.b16 %v2722, %v2707
        %v3473 = vpack.c.b16 %v2723, %v2708
        %v3474 = vpack.c.b16 %v2724, %v2709
        %v3475 = vpack.c.b16 %v2725, %v2710
        %v3476 = vpack.c.b16 %v2726, %v2711
        %v3477 = vpack.c.b16 %v2727, %v2712
        %v3478 = vpack.c.b16 %v2728, %v2713
        %v3479 = vpack.c.b16 %v2729, %v2714
        %v3480 = vpack.c.b16 %v2730, %v2715
        %v3481 = vpack.c.b16 %v2731, %v2716
        %v3482 = vpack.c.b16 %v2747, %v2732
        %v3483 = vpack.c.b16 %v2748, %v2733
        %v3484 = vpack.c.b16 %v2749, %v2734
        %v3485 = vpack.c.b16 %v2750, %v2735
        %v3486 = vpack.c.b16 %v2751, %v2736
        %v3487 = vpack.c.b16 %v2752, %v2737
        %v3488 = vpack.c.b16 %v2753, %v2738
        %v3489 = vpack.c.b16 %v2754, %v2739
        %v3490 = vpack.c.b16 %v2755, %v2740
        %v3491 = vpack.c.b16 %v2756, %v2741
        %v3492 = vpack.c.b16 %v2757, %v2742
        %v3493 = vpack.c.b16 %v2758, %v2743
        %v3494 = vpack.c.b16 %v2759, %v2744
        %v3495 = vpack.c.b16 %v2760, %v2745
        %v3496 = vpack.c.b16 %v2761, %v2746
        %v3497 = vpack.c.b16 %v2777, %v2762
        %v3498 = vpack.c.b16 %v2778, %v2763
        %v3499 = vpack.c.b16 %v2779, %v2764
        %v3500 = vpack.c.b16 %v2780, %v2765
        %v3501 = vpack.c.b16 %v2781, %v2766
        %v3502 = vpack.c.b16 %v2782, %v2767
        %v3503 = vpack.c.b16 %v2783, %v2768
        %v3504 = vpack.c.b16 %v2784, %v2769
        %v3505 = vpack.c.b16 %v2785, %v2770
        %v3506 = vpack.c.b16 %v2786, %v2771
        %v3507 = vpack.c.b16 %v2787, %v2772
        %v3508 = vpack.c.b16 %v2788, %v2773
        %v3509 = vpack.c.b16 %v2789, %v2774
        %v3510 = vpack.c.b16 %v2790, %v2775
        %v3511 = vpack.c.b16 %v2791, %v2776
        %v3512 = vpack.c.b16 %v2807, %v2792
        %v3513 = vpack.c.b16 %v2808, %v2793
        %v3514 = vpack.c.b16 %v2809, %v2794
        %v3515 = vpack.c.b16 %v2810, %v2795
        %v3516 = vpack.c.b16 %v2811, %v2796
        %v3517 = vpack.c.b16 %v2812, %v2797
        %v3518 = vpack.c.b16 %v2813, %v2798
        %v3519 = vpack.c.b16 %v2814, %v2799
        %v3520 = vpack.c.b16 %v2815, %v2800
        %v3521 = vpack.c.b16 %v2816, %v2801
        %v3522 = vpack.c.b16 %v2817, %v2802
        %v3523 = vpack.c.b16 %v2818, %v2803
        %v3524 = vpack.c.b16 %v2819, %v2804
        %v3525 = vpack.c.b16 %v2820, %v2805
        %v3526 = vpack.c.b16 %v2821, %v2806
        %v3527 = vpack.c.b16 %v2837, %v2822
        %v3528 = vpack.c.b16 %v2838, %v2823
        %v3529 = vpack.c.b16 %v2839, %v2824
        %v3530 = vpack.c.b16 %v2840, %v2825
        %v3531 = vpack.c.b16 %v2841, %v2826
        %v3532 = vpack.c.b16 %v2842, %v2827
        %v3533 = vpack.c.b16 %v2843, %v2828
        %v3534 = vpack.c.b16 %v2844, %v2829
        %v3535 = vpack.c.b16 %v2845, %v2830
        %v3536 = vpack.c.b16 %v2846, %v2831
        %v3537 = vpack.c.b16 %v2847, %v2832
        %v3538 = vpack.c.b16 %v2848, %v2833
        %v3539 = vpack.c.b16 %v2849, %v2834
        %v3540 = vpack.c.b16 %v2850, %v2835
        %v3541 = vpack.c.b16 %v2851, %v2836
        %v3542 = vpack.c.b16 %v2867, %v2852
        %v3543 = vpack.c.b16 %v2868, %v2853
        %v3544 = vpack.c.b16 %v2869, %v2854
        %v3545 = vpack.c.b16 %v2870, %v2855
        %v3546 = vpack.c.b16 %v2871, %v2856
        %v3547 = vpack.c.b16 %v2872, %v2857
        %v3548 = vpack.c.b16 %v2873, %v2858
        %v3549 = vpack.c.b16 %v2874, %v2859
        %v3550 = vpack.c.b16 %v2875, %v2860
        %v3551 = vpack.c.b16 %v2876, %v2861
        %v3552 = vpack.c.b16 %v2877, %v2862
        %v3553 = vpack.c.b16 %v2878, %v2863
        %v3554 = vpack.c.b16 %v2879, %v2864
        %v3555 = vpack.c.b16 %v2880, %v2865
        %v3556 = vpack.c.b16 %v2881, %v2866
        %v3557 = vpack.c.b16 %v2897, %v2882
        %v3558 = vpack.c.b16 %v2898, %v2883
        %v3559 = vpack.c.b16 %v2899, %v2884
        %v3560 = vpack.c.b16 %v2900, %v2885
        %v3561 = vpack.c.b16 %v2901, %v2886
        %v3562 = vpack.c.b16 %v2902, %v2887
        %v3563 = vpack.c.b16 %v2903, %v2888
        %v3564 = vpack.c.b16 %v2904, %v2889
        %v3565 = vpack.c.b16 %v2905, %v2890
        %v3566 = vpack.c.b16 %v2906, %v2891
        %v3567 = vpack.c.b16 %v2907, %v2892
        %v3568 = vpack.c.b16 %v2908, %v2893
        %v3569 = vpack.c.b16 %v2909, %v2894
        %v3570 = vpack.c.b16 %v2910, %v2895
        %v3571 = vpack.c.b16 %v2911, %v2896
        %v3572 = vpack.c.b16 %v2927, %v2912
        %v3573 = vpack.c.b16 %v2928, %v2913
        %v3574 = vpack.c.b16 %v2929, %v2914
        %v3575 = vpack.c.b16 %v2930, %v2915
        %v3576 = vpack.c.b16 %v2931, %v2916
        %v3577 = vpack.c.b16 %v2932, %v2917
        %v3578 = vpack.c.b16 %v2933, %v2918
        %v3579 = vpack.c.b16 %v2934, %v2919
        %v3580 = vpack.c.b16 %v2935, %v2920
        %v3581 = vpack.c.b16 %v2936, %v2921
        %v3582 = vpack.c.b16 %v2937, %v2922
        %v3583 = vpack.c.b16 %v2938, %v2923
        %v3584 = vpack.c.b16 %v2939, %v2924
        %v3585 = vpack.c.b16 %v2940, %v2925
        %v3586 = vpack.c.b16 %v2941, %v2926
        %v3587 = vpack.c.b16 %v2957, %v2942
        %v3588 = vpack.c.b16 %v2958, %v2943
        %v3589 = vpack.c.b16 %v2959, %v2944
        %v3590 = vpack.c.b16 %v2960, %v2945
        %v3591 = vpack.c.b16 %v2961, %v2946
        %v3592 = vpack.c.b16 %v2962, %v2947
        %v3593 = vpack.c.b16 %v2963, %v2948
        %v3594 = vpack.c.b16 %v2964, %v2949
        %v3595 = vpack.c.b16 %v2965, %v2950
        %v3596 = vpack.c.b16 %v2966, %v2951
        %v3597 = vpack.c.b16 %v2967, %v2952
        %v3598 = vpack.c.b16 %v2968, %v2953
        %v3599 = vpack.c.b16 %v2969, %v2954
        %v3600 = vpack.c.b16 %v2970, %v2955
        %v3601 = vpack.c.b16 %v2971, %v2956
        %v3602 = vpack.c.b16 %v2987, %v2972
        %v3603 = vpack.c.b16 %v2988, %v2973
        %v3604 = vpack.c.b16 %v2989, %v2974
        %v3605 = vpack.c.b16 %v2990, %v2975
        %v3606 = vpack.c.b16 %v2991, %v2976
        %v3607 = vpack.c.b16 %v2992, %v2977
        %v3608 = vpack.c.b16 %v2993, %v2978
        %v3609 = vpack.c.b16 %v2994, %v2979
        %v3610 = vpack.c.b16 %v2995, %v2980
        %v3611 = vpack.c.b16 %v2996, %v2981
        %v3612 = vpack.c.b16 %v2997, %v2982
        %v3613 = vpack.c.b16 %v2998, %v2983
        %v3614 = vpack.c.b16 %v2999, %v2984
        %v3615 = vpack.c.b16 %v3000, %v2985
        %v3616 = vpack.c.b16 %v3001, %v2986
        %v3617 = vpack.c.b16 %v3017, %v3002
        %v3618 = vpack.c.b16 %v3018, %v3003
        %v3619 = vpack.c.b16 %v3019, %v3004
        %v3620 = vpack.c.b16 %v3020, %v3005
        %v3621 = vpack.c.b16 %v3021, %v3006
        %v3622 = vpack.c.b16 %v3022, %v3007
        %v3623 = vpack.c.b16 %v3023, %v3008
        %v3624 = vpack.c.b16 %v3024, %v3009
        %v3625 = vpack.c.b16 %v3025, %v3010
        %v3626 = vpack.c.b16 %v3026, %v3011
        %v3627 = vpack.c.b16 %v3027, %v3012
        %v3628 = vpack.c.b16 %v3028, %v3013
        %v3629 = vpack.c.b16 %v3029, %v3014
        %v3630 = vpack.c.b16 %v3030, %v3015
        %v3631 = vpack.c.b16 %v3031, %v3016
        %4232 = vmatprep.subr.bf16.mxu0 %v3033
        %4233 = vmatpush1.bf16.msra.mxu0 %v3032
        %4234 = vmatprep.subr.bf16.mxu0 %v3048
        %4235 = vmatpush1.bf16.msra.mxu0 %v3047
        %4236 = vmatprep.subr.bf16.mxu0 %v3063
        %4237 = vmatpush1.bf16.msra.mxu0 %v3062
        %4238 = vmatprep.subr.bf16.mxu0 %v3078
        %4239 = vmatpush1.bf16.msra.mxu0 %v3077
        %4240 = vmatprep.subr.bf16.mxu0 %v3093
        %4241 = vmatpush1.bf16.msra.mxu0 %v3092
        %4242 = vmatprep.subr.bf16.mxu0 %v3108
        %4243 = vmatpush1.bf16.msra.mxu0 %v3107
        %4244 = vmatprep.subr.bf16.mxu0 %v3123
        %4245 = vmatpush1.bf16.msra.mxu0 %v3122
        %4246 = vmatprep.subr.bf16.mxu0 %v3138
        %4247 = vmatpush1.bf16.msra.mxu0 %v3137
        %4248 = vmatprep.subr.bf16.mxu0 %v3153
        %4249 = vmatpush1.bf16.msra.mxu0 %v3152
        %4250 = vmatprep.subr.bf16.mxu0 %v3168
        %4251 = vmatpush1.bf16.msra.mxu0 %v3167
        %4252 = vmatprep.subr.bf16.mxu0 %v3183
        %4253 = vmatpush1.bf16.msra.mxu0 %v3182
        %4254 = vmatprep.subr.bf16.mxu0 %v3198
        %4255 = vmatpush1.bf16.msra.mxu0 %v3197
        %4256 = vmatprep.subr.bf16.mxu0 %v3213
        %4257 = vmatpush1.bf16.msra.mxu0 %v3212
        %4258 = vmatprep.subr.bf16.mxu0 %v3228
        %4259 = vmatpush1.bf16.msra.mxu0 %v3227
        %4260 = vmatprep.subr.bf16.mxu0 %v3243
        %4261 = vmatpush1.bf16.msra.mxu0 %v3242
        %4262 = vmatprep.subr.bf16.mxu0 %v3258
        %4263 = vmatpush1.bf16.msra.mxu0 %v3257
        %4264 = vmatprep.mubr.bf16.mxu0 %v1136
        %4265 = vmatmul.mubr.bf16.gmra.mrb[0].mxu0 %v1120
        %v4266 = vpop.f32.mrb[0].mxu0
        %v4267 = vadd.f32 0.0, %v4266
        %v4268 = vpop.f32.mrb[0].mxu0
        %v4269 = vadd.f32 0.0, %v4268
        %v4270 = vpop.f32.mrb[0].mxu0
        %v4271 = vadd.f32 0.0, %v4270
        %v4272 = vpop.f32.mrb[0].mxu0
        %v4273 = vadd.f32 0.0, %v4272
        %4274 = vmatprep.mubr.bf16.mxu0 %v1137
        %4275 = vmatmul.mubr.bf16.gmra.mrb[0].mxu0 %v1121
        %v4276 = vpop.f32.mrb[0].mxu0
        %v4277 = vadd.f32 0.0, %v4276
        %v4278 = vpop.f32.mrb[0].mxu0
        %v4279 = vadd.f32 0.0, %v4278
        %v4280 = vpop.f32.mrb[0].mxu0
        %v4281 = vadd.f32 0.0, %v4280
        %v4282 = vpop.f32.mrb[0].mxu0
        %v4283 = vadd.f32 0.0, %v4282
        %4284 = vmatprep.mubr.bf16.mxu0 %v1138
        %4285 = vmatmul.mubr.bf16.gmra.mrb[0].mxu0 %v1122
        %v4286 = vpop.f32.mrb[0].mxu0
        %v4287 = vadd.f32 0.0, %v4286
        %v4288 = vpop.f32.mrb[0].mxu0
        %v4289 = vadd.f32 0.0, %v4288
        %v4290 = vpop.f32.mrb[0].mxu0
        %v4291 = vadd.f32 0.0, %v4290
        %v4292 = vpop.f32.mrb[0].mxu0
        %v4293 = vadd.f32 0.0, %v4292
        %4294 = vmatprep.mubr.bf16.mxu0 %v1139
        %4295 = vmatmul.mubr.bf16.gmra.mrb[0].mxu0 %v1123
        %v4296 = vpop.f32.mrb[0].mxu0
        %v4297 = vadd.f32 0.0, %v4296
        %v4298 = vpop.f32.mrb[0].mxu0
        %v4299 = vadd.f32 0.0, %v4298
        %v4300 = vpop.f32.mrb[0].mxu0
        %v4301 = vpop.f32.mrb[0].mxu0
        %4302 = vdwg.mxu0
        %4303 = vmatprep.subr.bf16.mxu0 %v3273
        %4304 = vmatpush1.bf16.msra.mxu0 %v3272
        %4305 = vmatprep.subr.bf16.mxu0 %v3288
        %4306 = vmatpush1.bf16.msra.mxu0 %v3287
        %4307 = vmatprep.subr.bf16.mxu0 %v3303
        %4308 = vmatpush1.bf16.msra.mxu0 %v3302
        %4309 = vmatprep.subr.bf16.mxu0 %v3318
        %4310 = vmatpush1.bf16.msra.mxu0 %v3317
        %4311 = vmatprep.subr.bf16.mxu0 %v3333
        %4312 = vmatpush1.bf16.msra.mxu0 %v3332
        %4313 = vmatprep.subr.bf16.mxu0 %v3348
        %4314 = vmatpush1.bf16.msra.mxu0 %v3347
        %4315 = vmatprep.subr.bf16.mxu0 %v3363
        %4316 = vmatpush1.bf16.msra.mxu0 %v3362
        %4317 = vmatprep.subr.bf16.mxu0 %v3378
        %4318 = vmatpush1.bf16.msra.mxu0 %v3377
        %4319 = vmatprep.subr.bf16.mxu0 %v3393
        %4320 = vmatpush1.bf16.msra.mxu0 %v3392
        %4321 = vmatprep.subr.bf16.mxu0 %v3408
        %4322 = vmatpush1.bf16.msra.mxu0 %v3407
        %4323 = vmatprep.subr.bf16.mxu0 %v3423
        %4324 = vmatpush1.bf16.msra.mxu0 %v3422
        %4325 = vmatprep.subr.bf16.mxu0 %v3438
        %4326 = vmatpush1.bf16.msra.mxu0 %v3437
        %4327 = vmatprep.subr.bf16.mxu0 %v3453
        %4328 = vmatpush1.bf16.msra.mxu0 %v3452
        %4329 = vmatprep.subr.bf16.mxu0 %v3468
        %4330 = vmatpush1.bf16.msra.mxu0 %v3467
        %4331 = vmatprep.subr.bf16.mxu0 %v3483
        %4332 = vmatpush1.bf16.msra.mxu0 %v3482
        %4333 = vmatprep.subr.bf16.mxu0 %v3498
        %4334 = vmatpush1.bf16.msra.mxu0 %v3497
        %4335 = vmatprep.mubr.bf16.mxu0 %v1168
        %4336 = vmatmul.mubr.bf16.gmra.mrb[0].mxu0 %v1152
        %v4337 = vpop.f32.mrb[0].mxu0
        %v4338 = vadd.f32 %v4267, %v4337
        %v4339 = vpop.f32.mrb[0].mxu0
        %v4340 = vadd.f32 %v4269, %v4339
        %v4341 = vpop.f32.mrb[0].mxu0
        %v4342 = vadd.f32 %v4271, %v4341
        %v4343 = vpop.f32.mrb[0].mxu0
        %v4344 = vadd.f32 %v4273, %v4343
        %4345 = vmatprep.mubr.bf16.mxu0 %v1169
        %4346 = vmatmul.mubr.bf16.gmra.mrb[0].mxu0 %v1153
        %v4347 = vpop.f32.mrb[0].mxu0
        %v4348 = vadd.f32 %v4277, %v4347
        %v4349 = vpop.f32.mrb[0].mxu0
        %v4350 = vadd.f32 %v4279, %v4349
        %v4351 = vpop.f32.mrb[0].mxu0
        %v4352 = vadd.f32 %v4281, %v4351
        %v4353 = vpop.f32.mrb[0].mxu0
        %v4354 = vadd.f32 %v4283, %v4353
        %4355 = vmatprep.mubr.bf16.mxu0 %v1170
        %4356 = vmatmul.mubr.bf16.gmra.mrb[0].mxu0 %v1154
        %v4357 = vpop.f32.mrb[0].mxu0
        %v4358 = vadd.f32 %v4287, %v4357
        %v4359 = vpop.f32.mrb[0].mxu0
        %v4360 = vadd.f32 %v4289, %v4359
        %v4361 = vpop.f32.mrb[0].mxu0
        %v4362 = vadd.f32 %v4291, %v4361
        %v4363 = vpop.f32.mrb[0].mxu0
        %v4364 = vadd.f32 %v4293, %v4363
        %4365 = vmatprep.mubr.bf16.mxu0 %v1171
        %4366 = vmatmul.mubr.bf16.gmra.mrb[0].mxu0 %v1155
        %v4367 = vpop.f32.mrb[0].mxu0
        %v4368 = vadd.f32 %v4297, %v4367
        %v4369 = vpop.f32.mrb[0].mxu0
        %v4370 = vadd.f32 %v4299, %v4369
        %v4371 = vpop.f32.mrb[0].mxu0
        %v4372 = vpop.f32.mrb[0].mxu0
        %4373 = vdwg.mxu0
        %4374 = vmatprep.subr.bf16.mxu0 %v3513
        %4375 = vmatpush1.bf16.msra.mxu0 %v3512
        %4376 = vmatprep.subr.bf16.mxu0 %v3528
        %4377 = vmatpush1.bf16.msra.mxu0 %v3527
        %4378 = vmatprep.subr.bf16.mxu0 %v3543
        %4379 = vmatpush1.bf16.msra.mxu0 %v3542
        %4380 = vmatprep.subr.bf16.mxu0 %v3558
        %4381 = vmatpush1.bf16.msra.mxu0 %v3557
        %4382 = vmatprep.subr.bf16.mxu0 %v3573
        %4383 = vmatpush1.bf16.msra.mxu0 %v3572
        %4384 = vmatprep.subr.bf16.mxu0 %v3588
        %4385 = vmatpush1.bf16.msra.mxu0 %v3587
        %4386 = vmatprep.subr.bf16.mxu0 %v3603
        %4387 = vmatpush1.bf16.msra.mxu0 %v3602
        %4388 = vmatprep.subr.bf16.mxu0 %v3618
        %4389 = vmatpush1.bf16.msra.mxu0 %v3617
        %4390 = vmatprep.subr.bf16.mxu0 0
        %4391 = vmatpush1.bf16.msra.mxu0 0
        %4392 = vmatprep.subr.bf16.mxu0 0
        %4393 = vmatpush1.bf16.msra.mxu0 0
        %4394 = vmatprep.subr.bf16.mxu0 0
        %4395 = vmatpush1.bf16.msra.mxu0 0
        %4396 = vmatprep.subr.bf16.mxu0 0
        %4397 = vmatpush1.bf16.msra.mxu0 0
        %4398 = vmatprep.subr.bf16.mxu0 0
        %4399 = vmatpush1.bf16.msra.mxu0 0
        %4400 = vmatprep.subr.bf16.mxu0 0
        %4401 = vmatpush1.bf16.msra.mxu0 0
        %4402 = vmatprep.subr.bf16.mxu0 0
        %4403 = vmatpush1.bf16.msra.mxu0 0
        %4404 = vmatprep.subr.bf16.mxu0 0
        %4405 = vmatpush1.bf16.msra.mxu0 0
        %4406 = vmatprep.mubr.bf16.mxu0 0
        %4407 = vmatmul.mubr.bf16.gmra.mrb[0].mxu0 %v1184
        %v4408 = vpop.f32.mrb[0].mxu0
        %v4409 = vadd.f32 %v4338, %v4408
        %v4410 = vpop.f32.mrb[0].mxu0
        %v4411 = vadd.f32 %v4340, %v4410
        %v4412 = vpop.f32.mrb[0].mxu0
        %v4413 = vadd.f32 %v4342, %v4412
        %v4414 = vpop.f32.mrb[0].mxu0
        %v4415 = vadd.f32 %v4344, %v4414
        %4416 = vmatprep.mubr.bf16.mxu0 0
        %4417 = vmatmul.mubr.bf16.gmra.mrb[0].mxu0 %v1185
        %v4418 = vpop.f32.mrb[0].mxu0
        %v4419 = vadd.f32 %v4348, %v4418
        %v4420 = vpop.f32.mrb[0].mxu0
        %v4421 = vadd.f32 %v4350, %v4420
        %v4422 = vpop.f32.mrb[0].mxu0
        %v4423 = vadd.f32 %v4352, %v4422
        %v4424 = vpop.f32.mrb[0].mxu0
        %v4425 = vadd.f32 %v4354, %v4424
        %4426 = vmatprep.mubr.bf16.mxu0 0
        %4427 = vmatmul.mubr.bf16.gmra.mrb[0].mxu0 %v1186
        %v4428 = vpop.f32.mrb[0].mxu0
        %v4429 = vadd.f32 %v4358, %v4428
        %v4430 = vpop.f32.mrb[0].mxu0
        %v4431 = vadd.f32 %v4360, %v4430
        %v4432 = vpop.f32.mrb[0].mxu0
        %v4433 = vadd.f32 %v4362, %v4432
        %v4434 = vpop.f32.mrb[0].mxu0
        %v4435 = vadd.f32 %v4364, %v4434
        %4436 = vmatprep.mubr.bf16.mxu0 0
        %4437 = vmatmul.mubr.bf16.gmra.mrb[0].mxu0 %v1187
        %v4438 = vpop.f32.mrb[0].mxu0
        %v4439 = vadd.f32 %v4368, %v4438
        %v4440 = vpop.f32.mrb[0].mxu0
        %v4441 = vadd.f32 %v4370, %v4440
        %v4442 = vpop.f32.mrb[0].mxu0
        %v4443 = vpop.f32.mrb[0].mxu0
        %4444 = vdwg.mxu0
        %4445 = vmatprep.subr.bf16.mxu0 %v3035
        %4446 = vmatpush1.bf16.msra.mxu0 %v3034
        %4447 = vmatprep.subr.bf16.mxu0 %v3050
        %4448 = vmatpush1.bf16.msra.mxu0 %v3049
        %4449 = vmatprep.subr.bf16.mxu0 %v3065
        %4450 = vmatpush1.bf16.msra.mxu0 %v3064
        %4451 = vmatprep.subr.bf16.mxu0 %v3080
        %4452 = vmatpush1.bf16.msra.mxu0 %v3079
        %4453 = vmatprep.subr.bf16.mxu0 %v3095
        %4454 = vmatpush1.bf16.msra.mxu0 %v3094
        %4455 = vmatprep.subr.bf16.mxu0 %v3110
        %4456 = vmatpush1.bf16.msra.mxu0 %v3109
        %4457 = vmatprep.subr.bf16.mxu0 %v3125
        %4458 = vmatpush1.bf16.msra.mxu0 %v3124
        %4459 = vmatprep.subr.bf16.mxu0 %v3140
        %4460 = vmatpush1.bf16.msra.mxu0 %v3139
        %4461 = vmatprep.subr.bf16.mxu0 %v3155
        %4462 = vmatpush1.bf16.msra.mxu0 %v3154
        %4463 = vmatprep.subr.bf16.mxu0 %v3170
        %4464 = vmatpush1.bf16.msra.mxu0 %v3169
        %4465 = vmatprep.subr.bf16.mxu0 %v3185
        %4466 = vmatpush1.bf16.msra.mxu0 %v3184
        %4467 = vmatprep.subr.bf16.mxu0 %v3200
        %4468 = vmatpush1.bf16.msra.mxu0 %v3199
        %4469 = vmatprep.subr.bf16.mxu0 %v3215
        %4470 = vmatpush1.bf16.msra.mxu0 %v3214
        %4471 = vmatprep.subr.bf16.mxu0 %v3230
        %4472 = vmatpush1.bf16.msra.mxu0 %v3229
        %4473 = vmatprep.subr.bf16.mxu0 %v3245
        %4474 = vmatpush1.bf16.msra.mxu0 %v3244
        %4475 = vmatprep.subr.bf16.mxu0 %v3260
        %4476 = vmatpush1.bf16.msra.mxu0 %v3259
        %4477 = vmatprep.mubr.bf16.mxu0 %v1136
        %4478 = vmatmul.mubr.bf16.gmra.mrb[0].mxu0 %v1120
        %v4479 = vpop.f32.mrb[0].mxu0
        %v4480 = vadd.f32 0.0, %v4479
        %v4481 = vpop.f32.mrb[0].mxu0
        %v4482 = vadd.f32 0.0, %v4481
        %v4483 = vpop.f32.mrb[0].mxu0
        %v4484 = vadd.f32 0.0, %v4483
        %v4485 = vpop.f32.mrb[0].mxu0
        %v4486 = vadd.f32 0.0, %v4485
        %4487 = vmatprep.mubr.bf16.mxu0 %v1137
        %4488 = vmatmul.mubr.bf16.gmra.mrb[0].mxu0 %v1121
        %v4489 = vpop.f32.mrb[0].mxu0
        %v4490 = vadd.f32 0.0, %v4489
        %v4491 = vpop.f32.mrb[0].mxu0
        %v4492 = vadd.f32 0.0, %v4491
        %v4493 = vpop.f32.mrb[0].mxu0
        %v4494 = vadd.f32 0.0, %v4493
        %v4495 = vpop.f32.mrb[0].mxu0
        %v4496 = vadd.f32 0.0, %v4495
        %4497 = vmatprep.mubr.bf16.mxu0 %v1138
        %4498 = vmatmul.mubr.bf16.gmra.mrb[0].mxu0 %v1122
        %v4499 = vpop.f32.mrb[0].mxu0
        %v4500 = vadd.f32 0.0, %v4499
        %v4501 = vpop.f32.mrb[0].mxu0
        %v4502 = vadd.f32 0.0, %v4501
        %v4503 = vpop.f32.mrb[0].mxu0
        %v4504 = vadd.f32 0.0, %v4503
        %v4505 = vpop.f32.mrb[0].mxu0
        %v4506 = vadd.f32 0.0, %v4505
        %4507 = vmatprep.mubr.bf16.mxu0 %v1139
        %4508 = vmatmul.mubr.bf16.gmra.mrb[0].mxu0 %v1123
        %v4509 = vpop.f32.mrb[0].mxu0
        %v4510 = vadd.f32 0.0, %v4509
        %v4511 = vpop.f32.mrb[0].mxu0
        %v4512 = vadd.f32 0.0, %v4511
        %v4513 = vpop.f32.mrb[0].mxu0
        %v4514 = vpop.f32.mrb[0].mxu0
        %4515 = vdwg.mxu0
        %4516 = vmatprep.subr.bf16.mxu0 %v3275
        %4517 = vmatpush1.bf16.msra.mxu0 %v3274
        %4518 = vmatprep.subr.bf16.mxu0 %v3290
        %4519 = vmatpush1.bf16.msra.mxu0 %v3289
        %4520 = vmatprep.subr.bf16.mxu0 %v3305
        %4521 = vmatpush1.bf16.msra.mxu0 %v3304
        %4522 = vmatprep.subr.bf16.mxu0 %v3320
        %4523 = vmatpush1.bf16.msra.mxu0 %v3319
        %4524 = vmatprep.subr.bf16.mxu0 %v3335
        %4525 = vmatpush1.bf16.msra.mxu0 %v3334
        %4526 = vmatprep.subr.bf16.mxu0 %v3350
        %4527 = vmatpush1.bf16.msra.mxu0 %v3349
        %4528 = vmatprep.subr.bf16.mxu0 %v3365
        %4529 = vmatpush1.bf16.msra.mxu0 %v3364
        %4530 = vmatprep.subr.bf16.mxu0 %v3380
        %4531 = vmatpush1.bf16.msra.mxu0 %v3379
        %4532 = vmatprep.subr.bf16.mxu0 %v3395
        %4533 = vmatpush1.bf16.msra.mxu0 %v3394
        %4534 = vmatprep.subr.bf16.mxu0 %v3410
        %4535 = vmatpush1.bf16.msra.mxu0 %v3409
        %4536 = vmatprep.subr.bf16.mxu0 %v3425
        %4537 = vmatpush1.bf16.msra.mxu0 %v3424
        %4538 = vmatprep.subr.bf16.mxu0 %v3440
        %4539 = vmatpush1.bf16.msra.mxu0 %v3439
        %4540 = vmatprep.subr.bf16.mxu0 %v3455
        %4541 = vmatpush1.bf16.msra.mxu0 %v3454
        %4542 = vmatprep.subr.bf16.mxu0 %v3470
        %4543 = vmatpush1.bf16.msra.mxu0 %v3469
        %4544 = vmatprep.subr.bf16.mxu0 %v3485
        %4545 = vmatpush1.bf16.msra.mxu0 %v3484
        %4546 = vmatprep.subr.bf16.mxu0 %v3500
        %4547 = vmatpush1.bf16.msra.mxu0 %v3499
        %4548 = vmatprep.mubr.bf16.mxu0 %v1168
        %4549 = vmatmul.mubr.bf16.gmra.mrb[0].mxu0 %v1152
        %v4550 = vpop.f32.mrb[0].mxu0
        %v4551 = vadd.f32 %v4480, %v4550
        %v4552 = vpop.f32.mrb[0].mxu0
        %v4553 = vadd.f32 %v4482, %v4552
        %v4554 = vpop.f32.mrb[0].mxu0
        %v4555 = vadd.f32 %v4484, %v4554
        %v4556 = vpop.f32.mrb[0].mxu0
        %v4557 = vadd.f32 %v4486, %v4556
        %4558 = vmatprep.mubr.bf16.mxu0 %v1169
        %4559 = vmatmul.mubr.bf16.gmra.mrb[0].mxu0 %v1153
        %v4560 = vpop.f32.mrb[0].mxu0
        %v4561 = vadd.f32 %v4490, %v4560
        %v4562 = vpop.f32.mrb[0].mxu0
        %v4563 = vadd.f32 %v4492, %v4562
        %v4564 = vpop.f32.mrb[0].mxu0
        %v4565 = vadd.f32 %v4494, %v4564
        %v4566 = vpop.f32.mrb[0].mxu0
        %v4567 = vadd.f32 %v4496, %v4566
        %4568 = vmatprep.mubr.bf16.mxu0 %v1170
        %4569 = vmatmul.mubr.bf16.gmra.mrb[0].mxu0 %v1154
        %v4570 = vpop.f32.mrb[0].mxu0
        %v4571 = vadd.f32 %v4500, %v4570
        %v4572 = vpop.f32.mrb[0].mxu0
        %v4573 = vadd.f32 %v4502, %v4572
        %v4574 = vpop.f32.mrb[0].mxu0
        %v4575 = vadd.f32 %v4504, %v4574
        %v4576 = vpop.f32.mrb[0].mxu0
        %v4577 = vadd.f32 %v4506, %v4576
        %4578 = vmatprep.mubr.bf16.mxu0 %v1171
        %4579 = vmatmul.mubr.bf16.gmra.mrb[0].mxu0 %v1155
        %v4580 = vpop.f32.mrb[0].mxu0
        %v4581 = vadd.f32 %v4510, %v4580
        %v4582 = vpop.f32.mrb[0].mxu0
        %v4583 = vadd.f32 %v4512, %v4582
        %v4584 = vpop.f32.mrb[0].mxu0
        %v4585 = vpop.f32.mrb[0].mxu0
        %4586 = vdwg.mxu0
        %4587 = vmatprep.subr.bf16.mxu0 %v3515
        %4588 = vmatpush1.bf16.msra.mxu0 %v3514
        %4589 = vmatprep.subr.bf16.mxu0 %v3530
        %4590 = vmatpush1.bf16.msra.mxu0 %v3529
        %4591 = vmatprep.subr.bf16.mxu0 %v3545
        %4592 = vmatpush1.bf16.msra.mxu0 %v3544
        %4593 = vmatprep.subr.bf16.mxu0 %v3560
        %4594 = vmatpush1.bf16.msra.mxu0 %v3559
        %4595 = vmatprep.subr.bf16.mxu0 %v3575
        %4596 = vmatpush1.bf16.msra.mxu0 %v3574
        %4597 = vmatprep.subr.bf16.mxu0 %v3590
        %4598 = vmatpush1.bf16.msra.mxu0 %v3589
        %4599 = vmatprep.subr.bf16.mxu0 %v3605
        %4600 = vmatpush1.bf16.msra.mxu0 %v3604
        %4601 = vmatprep.subr.bf16.mxu0 %v3620
        %4602 = vmatpush1.bf16.msra.mxu0 %v3619
        %4603 = vmatprep.subr.bf16.mxu0 0
        %4604 = vmatpush1.bf16.msra.mxu0 0
        %4605 = vmatprep.subr.bf16.mxu0 0
        %4606 = vmatpush1.bf16.msra.mxu0 0
        %4607 = vmatprep.subr.bf16.mxu0 0
        %4608 = vmatpush1.bf16.msra.mxu0 0
        %4609 = vmatprep.subr.bf16.mxu0 0
        %4610 = vmatpush1.bf16.msra.mxu0 0
        %4611 = vmatprep.subr.bf16.mxu0 0
        %4612 = vmatpush1.bf16.msra.mxu0 0
        %4613 = vmatprep.subr.bf16.mxu0 0
        %4614 = vmatpush1.bf16.msra.mxu0 0
        %4615 = vmatprep.subr.bf16.mxu0 0
        %4616 = vmatpush1.bf16.msra.mxu0 0
        %4617 = vmatprep.subr.bf16.mxu0 0
        %4618 = vmatpush1.bf16.msra.mxu0 0
        %4619 = vmatprep.mubr.bf16.mxu0 0
        %4620 = vmatmul.mubr.bf16.gmra.mrb[0].mxu0 %v1184
        %v4621 = vpop.f32.mrb[0].mxu0
        %v4622 = vadd.f32 %v4551, %v4621
        %v4623 = vpop.f32.mrb[0].mxu0
        %v4624 = vadd.f32 %v4553, %v4623
        %v4625 = vpop.f32.mrb[0].mxu0
        %v4626 = vadd.f32 %v4555, %v4625
        %v4627 = vpop.f32.mrb[0].mxu0
        %v4628 = vadd.f32 %v4557, %v4627
        %4629 = vmatprep.mubr.bf16.mxu0 0
        %4630 = vmatmul.mubr.bf16.gmra.mrb[0].mxu0 %v1185
        %v4631 = vpop.f32.mrb[0].mxu0
        %v4632 = vadd.f32 %v4561, %v4631
        %v4633 = vpop.f32.mrb[0].mxu0
        %v4634 = vadd.f32 %v4563, %v4633
        %v4635 = vpop.f32.mrb[0].mxu0
        %v4636 = vadd.f32 %v4565, %v4635
        %v4637 = vpop.f32.mrb[0].mxu0
        %v4638 = vadd.f32 %v4567, %v4637
        %4639 = vmatprep.mubr.bf16.mxu0 0
        %4640 = vmatmul.mubr.bf16.gmra.mrb[0].mxu0 %v1186
        %v4641 = vpop.f32.mrb[0].mxu0
        %v4642 = vadd.f32 %v4571, %v4641
        %v4643 = vpop.f32.mrb[0].mxu0
        %v4644 = vadd.f32 %v4573, %v4643
        %v4645 = vpop.f32.mrb[0].mxu0
        %v4646 = vadd.f32 %v4575, %v4645
        %v4647 = vpop.f32.mrb[0].mxu0
        %v4648 = vadd.f32 %v4577, %v4647
        %4649 = vmatprep.mubr.bf16.mxu0 0
        %4650 = vmatmul.mubr.bf16.gmra.mrb[0].mxu0 %v1187
        %v4651 = vpop.f32.mrb[0].mxu0
        %v4652 = vadd.f32 %v4581, %v4651
        %v4653 = vpop.f32.mrb[0].mxu0
        %v4654 = vadd.f32 %v4583, %v4653
        %v4655 = vpop.f32.mrb[0].mxu0
        %v4656 = vpop.f32.mrb[0].mxu0
        %4657 = vdwg.mxu0
        %4658 = vmatprep.subr.bf16.mxu0 %v3037
        %4659 = vmatpush1.bf16.msra.mxu0 %v3036
        %4660 = vmatprep.subr.bf16.mxu0 %v3052
        %4661 = vmatpush1.bf16.msra.mxu0 %v3051
        %4662 = vmatprep.subr.bf16.mxu0 %v3067
        %4663 = vmatpush1.bf16.msra.mxu0 %v3066
        %4664 = vmatprep.subr.bf16.mxu0 %v3082
        %4665 = vmatpush1.bf16.msra.mxu0 %v3081
        %4666 = vmatprep.subr.bf16.mxu0 %v3097
        %4667 = vmatpush1.bf16.msra.mxu0 %v3096
        %4668 = vmatprep.subr.bf16.mxu0 %v3112
        %4669 = vmatpush1.bf16.msra.mxu0 %v3111
        %4670 = vmatprep.subr.bf16.mxu0 %v3127
        %4671 = vmatpush1.bf16.msra.mxu0 %v3126
        %4672 = vmatprep.subr.bf16.mxu0 %v3142
        %4673 = vmatpush1.bf16.msra.mxu0 %v3141
        %4674 = vmatprep.subr.bf16.mxu0 %v3157
        %4675 = vmatpush1.bf16.msra.mxu0 %v3156
        %4676 = vmatprep.subr.bf16.mxu0 %v3172
        %4677 = vmatpush1.bf16.msra.mxu0 %v3171
        %4678 = vmatprep.subr.bf16.mxu0 %v3187
        %4679 = vmatpush1.bf16.msra.mxu0 %v3186
        %4680 = vmatprep.subr.bf16.mxu0 %v3202
        %4681 = vmatpush1.bf16.msra.mxu0 %v3201
        %4682 = vmatprep.subr.bf16.mxu0 %v3217
        %4683 = vmatpush1.bf16.msra.mxu0 %v3216
        %4684 = vmatprep.subr.bf16.mxu0 %v3232
        %4685 = vmatpush1.bf16.msra.mxu0 %v3231
        %4686 = vmatprep.subr.bf16.mxu0 %v3247
        %4687 = vmatpush1.bf16.msra.mxu0 %v3246
        %4688 = vmatprep.subr.bf16.mxu0 %v3262
        %4689 = vmatpush1.bf16.msra.mxu0 %v3261
        %4690 = vmatprep.mubr.bf16.mxu0 %v1136
        %4691 = vmatmul.mubr.bf16.gmra.mrb[0].mxu0 %v1120
        %v4692 = vpop.f32.mrb[0].mxu0
        %v4693 = vadd.f32 0.0, %v4692
        %v4694 = vpop.f32.mrb[0].mxu0
        %v4695 = vadd.f32 0.0, %v4694
        %v4696 = vpop.f32.mrb[0].mxu0
        %v4697 = vadd.f32 0.0, %v4696
        %v4698 = vpop.f32.mrb[0].mxu0
        %v4699 = vadd.f32 0.0, %v4698
        %4700 = vmatprep.mubr.bf16.mxu0 %v1137
        %4701 = vmatmul.mubr.bf16.gmra.mrb[0].mxu0 %v1121
        %v4702 = vpop.f32.mrb[0].mxu0
        %v4703 = vadd.f32 0.0, %v4702
        %v4704 = vpop.f32.mrb[0].mxu0
        %v4705 = vadd.f32 0.0, %v4704
        %v4706 = vpop.f32.mrb[0].mxu0
        %v4707 = vadd.f32 0.0, %v4706
        %v4708 = vpop.f32.mrb[0].mxu0
        %v4709 = vadd.f32 0.0, %v4708
        %4710 = vmatprep.mubr.bf16.mxu0 %v1138
        %4711 = vmatmul.mubr.bf16.gmra.mrb[0].mxu0 %v1122
        %v4712 = vpop.f32.mrb[0].mxu0
        %v4713 = vadd.f32 0.0, %v4712
        %v4714 = vpop.f32.mrb[0].mxu0
        %v4715 = vadd.f32 0.0, %v4714
        %v4716 = vpop.f32.mrb[0].mxu0
        %v4717 = vadd.f32 0.0, %v4716
        %v4718 = vpop.f32.mrb[0].mxu0
        %v4719 = vadd.f32 0.0, %v4718
        %4720 = vmatprep.mubr.bf16.mxu0 %v1139
        %4721 = vmatmul.mubr.bf16.gmra.mrb[0].mxu0 %v1123
        %v4722 = vpop.f32.mrb[0].mxu0
        %v4723 = vadd.f32 0.0, %v4722
        %v4724 = vpop.f32.mrb[0].mxu0
        %v4725 = vadd.f32 0.0, %v4724
        %v4726 = vpop.f32.mrb[0].mxu0
        %v4727 = vpop.f32.mrb[0].mxu0
        %4728 = vdwg.mxu0
        %4729 = vmatprep.subr.bf16.mxu0 %v3277
        %4730 = vmatpush1.bf16.msra.mxu0 %v3276
        %4731 = vmatprep.subr.bf16.mxu0 %v3292
        %4732 = vmatpush1.bf16.msra.mxu0 %v3291
        %4733 = vmatprep.subr.bf16.mxu0 %v3307
        %4734 = vmatpush1.bf16.msra.mxu0 %v3306
        %4735 = vmatprep.subr.bf16.mxu0 %v3322
        %4736 = vmatpush1.bf16.msra.mxu0 %v3321
        %4737 = vmatprep.subr.bf16.mxu0 %v3337
        %4738 = vmatpush1.bf16.msra.mxu0 %v3336
        %4739 = vmatprep.subr.bf16.mxu0 %v3352
        %4740 = vmatpush1.bf16.msra.mxu0 %v3351
        %4741 = vmatprep.subr.bf16.mxu0 %v3367
        %4742 = vmatpush1.bf16.msra.mxu0 %v3366
        %4743 = vmatprep.subr.bf16.mxu0 %v3382
        %4744 = vmatpush1.bf16.msra.mxu0 %v3381
        %4745 = vmatprep.subr.bf16.mxu0 %v3397
        %4746 = vmatpush1.bf16.msra.mxu0 %v3396
        %4747 = vmatprep.subr.bf16.mxu0 %v3412
        %4748 = vmatpush1.bf16.msra.mxu0 %v3411
        %4749 = vmatprep.subr.bf16.mxu0 %v3427
        %4750 = vmatpush1.bf16.msra.mxu0 %v3426
        %4751 = vmatprep.subr.bf16.mxu0 %v3442
        %4752 = vmatpush1.bf16.msra.mxu0 %v3441
        %4753 = vmatprep.subr.bf16.mxu0 %v3457
        %4754 = vmatpush1.bf16.msra.mxu0 %v3456
        %4755 = vmatprep.subr.bf16.mxu0 %v3472
        %4756 = vmatpush1.bf16.msra.mxu0 %v3471
        %4757 = vmatprep.subr.bf16.mxu0 %v3487
        %4758 = vmatpush1.bf16.msra.mxu0 %v3486
        %4759 = vmatprep.subr.bf16.mxu0 %v3502
        %4760 = vmatpush1.bf16.msra.mxu0 %v3501
        %4761 = vmatprep.mubr.bf16.mxu0 %v1168
        %4762 = vmatmul.mubr.bf16.gmra.mrb[0].mxu0 %v1152
        %v4763 = vpop.f32.mrb[0].mxu0
        %v4764 = vadd.f32 %v4693, %v4763
        %v4765 = vpop.f32.mrb[0].mxu0
        %v4766 = vadd.f32 %v4695, %v4765
        %v4767 = vpop.f32.mrb[0].mxu0
        %v4768 = vadd.f32 %v4697, %v4767
        %v4769 = vpop.f32.mrb[0].mxu0
        %v4770 = vadd.f32 %v4699, %v4769
        %4771 = vmatprep.mubr.bf16.mxu0 %v1169
        %4772 = vmatmul.mubr.bf16.gmra.mrb[0].mxu0 %v1153
        %v4773 = vpop.f32.mrb[0].mxu0
        %v4774 = vadd.f32 %v4703, %v4773
        %v4775 = vpop.f32.mrb[0].mxu0
        %v4776 = vadd.f32 %v4705, %v4775
        %v4777 = vpop.f32.mrb[0].mxu0
        %v4778 = vadd.f32 %v4707, %v4777
        %v4779 = vpop.f32.mrb[0].mxu0
        %v4780 = vadd.f32 %v4709, %v4779
        %4781 = vmatprep.mubr.bf16.mxu0 %v1170
        %4782 = vmatmul.mubr.bf16.gmra.mrb[0].mxu0 %v1154
        %v4783 = vpop.f32.mrb[0].mxu0
        %v4784 = vadd.f32 %v4713, %v4783
        %v4785 = vpop.f32.mrb[0].mxu0
        %v4786 = vadd.f32 %v4715, %v4785
        %v4787 = vpop.f32.mrb[0].mxu0
        %v4788 = vadd.f32 %v4717, %v4787
        %v4789 = vpop.f32.mrb[0].mxu0
        %v4790 = vadd.f32 %v4719, %v4789
        %4791 = vmatprep.mubr.bf16.mxu0 %v1171
        %4792 = vmatmul.mubr.bf16.gmra.mrb[0].mxu0 %v1155
        %v4793 = vpop.f32.mrb[0].mxu0
        %v4794 = vadd.f32 %v4723, %v4793
        %v4795 = vpop.f32.mrb[0].mxu0
        %v4796 = vadd.f32 %v4725, %v4795
        %v4797 = vpop.f32.mrb[0].mxu0
        %v4798 = vpop.f32.mrb[0].mxu0
        %4799 = vdwg.mxu0
        %4800 = vmatprep.subr.bf16.mxu0 %v3517
        %4801 = vmatpush1.bf16.msra.mxu0 %v3516
        %4802 = vmatprep.subr.bf16.mxu0 %v3532
        %4803 = vmatpush1.bf16.msra.mxu0 %v3531
        %4804 = vmatprep.subr.bf16.mxu0 %v3547
        %4805 = vmatpush1.bf16.msra.mxu0 %v3546
        %4806 = vmatprep.subr.bf16.mxu0 %v3562
        %4807 = vmatpush1.bf16.msra.mxu0 %v3561
        %4808 = vmatprep.subr.bf16.mxu0 %v3577
        %4809 = vmatpush1.bf16.msra.mxu0 %v3576
        %4810 = vmatprep.subr.bf16.mxu0 %v3592
        %4811 = vmatpush1.bf16.msra.mxu0 %v3591
        %4812 = vmatprep.subr.bf16.mxu0 %v3607
        %4813 = vmatpush1.bf16.msra.mxu0 %v3606
        %4814 = vmatprep.subr.bf16.mxu0 %v3622
        %4815 = vmatpush1.bf16.msra.mxu0 %v3621
        %4816 = vmatprep.subr.bf16.mxu0 0
        %4817 = vmatpush1.bf16.msra.mxu0 0
        %4818 = vmatprep.subr.bf16.mxu0 0
        %4819 = vmatpush1.bf16.msra.mxu0 0
        %4820 = vmatprep.subr.bf16.mxu0 0
        %4821 = vmatpush1.bf16.msra.mxu0 0
        %4822 = vmatprep.subr.bf16.mxu0 0
        %4823 = vmatpush1.bf16.msra.mxu0 0
        %4824 = vmatprep.subr.bf16.mxu0 0
        %4825 = vmatpush1.bf16.msra.mxu0 0
        %4826 = vmatprep.subr.bf16.mxu0 0
        %4827 = vmatpush1.bf16.msra.mxu0 0
        %4828 = vmatprep.subr.bf16.mxu0 0
        %4829 = vmatpush1.bf16.msra.mxu0 0
        %4830 = vmatprep.subr.bf16.mxu0 0
        %4831 = vmatpush1.bf16.msra.mxu0 0
        %4832 = vmatprep.mubr.bf16.mxu0 0
        %4833 = vmatmul.mubr.bf16.gmra.mrb[0].mxu0 %v1184
        %v4834 = vpop.f32.mrb[0].mxu0
        %v4835 = vadd.f32 %v4764, %v4834
        %v4836 = vpop.f32.mrb[0].mxu0
        %v4837 = vadd.f32 %v4766, %v4836
        %v4838 = vpop.f32.mrb[0].mxu0
        %v4839 = vadd.f32 %v4768, %v4838
        %v4840 = vpop.f32.mrb[0].mxu0
        %v4841 = vadd.f32 %v4770, %v4840
        %4842 = vmatprep.mubr.bf16.mxu0 0
        %4843 = vmatmul.mubr.bf16.gmra.mrb[0].mxu0 %v1185
        %v4844 = vpop.f32.mrb[0].mxu0
        %v4845 = vadd.f32 %v4774, %v4844
        %v4846 = vpop.f32.mrb[0].mxu0
        %v4847 = vadd.f32 %v4776, %v4846
        %v4848 = vpop.f32.mrb[0].mxu0
        %v4849 = vadd.f32 %v4778, %v4848
        %v4850 = vpop.f32.mrb[0].mxu0
        %v4851 = vadd.f32 %v4780, %v4850
        %4852 = vmatprep.mubr.bf16.mxu0 0
        %4853 = vmatmul.mubr.bf16.gmra.mrb[0].mxu0 %v1186
        %v4854 = vpop.f32.mrb[0].mxu0
        %v4855 = vadd.f32 %v4784, %v4854
        %v4856 = vpop.f32.mrb[0].mxu0
        %v4857 = vadd.f32 %v4786, %v4856
        %v4858 = vpop.f32.mrb[0].mxu0
        %v4859 = vadd.f32 %v4788, %v4858
        %v4860 = vpop.f32.mrb[0].mxu0
        %v4861 = vadd.f32 %v4790, %v4860
        %4862 = vmatprep.mubr.bf16.mxu0 0
        %4863 = vmatmul.mubr.bf16.gmra.mrb[0].mxu0 %v1187
        %v4864 = vpop.f32.mrb[0].mxu0
        %v4865 = vadd.f32 %v4794, %v4864
        %v4866 = vpop.f32.mrb[0].mxu0
        %v4867 = vadd.f32 %v4796, %v4866
        %v4868 = vpop.f32.mrb[0].mxu0
        %v4869 = vpop.f32.mrb[0].mxu0
        %4870 = vdwg.mxu0
        %4871 = vmatprep.subr.bf16.mxu0 %v3039
        %4872 = vmatpush1.bf16.msra.mxu0 %v3038
        %4873 = vmatprep.subr.bf16.mxu0 %v3054
        %4874 = vmatpush1.bf16.msra.mxu0 %v3053
        %4875 = vmatprep.subr.bf16.mxu0 %v3069
        %4876 = vmatpush1.bf16.msra.mxu0 %v3068
        %4877 = vmatprep.subr.bf16.mxu0 %v3084
        %4878 = vmatpush1.bf16.msra.mxu0 %v3083
        %4879 = vmatprep.subr.bf16.mxu0 %v3099
        %4880 = vmatpush1.bf16.msra.mxu0 %v3098
        %4881 = vmatprep.subr.bf16.mxu0 %v3114
        %4882 = vmatpush1.bf16.msra.mxu0 %v3113
        %4883 = vmatprep.subr.bf16.mxu0 %v3129
        %4884 = vmatpush1.bf16.msra.mxu0 %v3128
        %4885 = vmatprep.subr.bf16.mxu0 %v3144
        %4886 = vmatpush1.bf16.msra.mxu0 %v3143
        %4887 = vmatprep.subr.bf16.mxu0 %v3159
        %4888 = vmatpush1.bf16.msra.mxu0 %v3158
        %4889 = vmatprep.subr.bf16.mxu0 %v3174
        %4890 = vmatpush1.bf16.msra.mxu0 %v3173
        %4891 = vmatprep.subr.bf16.mxu0 %v3189
        %4892 = vmatpush1.bf16.msra.mxu0 %v3188
        %4893 = vmatprep.subr.bf16.mxu0 %v3204
        %4894 = vmatpush1.bf16.msra.mxu0 %v3203
        %4895 = vmatprep.subr.bf16.mxu0 %v3219
        %4896 = vmatpush1.bf16.msra.mxu0 %v3218
        %4897 = vmatprep.subr.bf16.mxu0 %v3234
        %4898 = vmatpush1.bf16.msra.mxu0 %v3233
        %4899 = vmatprep.subr.bf16.mxu0 %v3249
        %4900 = vmatpush1.bf16.msra.mxu0 %v3248
        %4901 = vmatprep.subr.bf16.mxu0 %v3264
        %4902 = vmatpush1.bf16.msra.mxu0 %v3263
        %4903 = vmatprep.mubr.bf16.mxu0 %v1136
        %4904 = vmatmul.mubr.bf16.gmra.mrb[0].mxu0 %v1120
        %v4905 = vpop.f32.mrb[0].mxu0
        %v4906 = vadd.f32 0.0, %v4905
        %v4907 = vpop.f32.mrb[0].mxu0
        %v4908 = vadd.f32 0.0, %v4907
        %v4909 = vpop.f32.mrb[0].mxu0
        %v4910 = vadd.f32 0.0, %v4909
        %v4911 = vpop.f32.mrb[0].mxu0
        %v4912 = vadd.f32 0.0, %v4911
        %4913 = vmatprep.mubr.bf16.mxu0 %v1137
        %4914 = vmatmul.mubr.bf16.gmra.mrb[0].mxu0 %v1121
        %v4915 = vpop.f32.mrb[0].mxu0
        %v4916 = vadd.f32 0.0, %v4915
        %v4917 = vpop.f32.mrb[0].mxu0
        %v4918 = vadd.f32 0.0, %v4917
        %v4919 = vpop.f32.mrb[0].mxu0
        %v4920 = vadd.f32 0.0, %v4919
        %v4921 = vpop.f32.mrb[0].mxu0
        %v4922 = vadd.f32 0.0, %v4921
        %4923 = vmatprep.mubr.bf16.mxu0 %v1138
        %4924 = vmatmul.mubr.bf16.gmra.mrb[0].mxu0 %v1122
        %v4925 = vpop.f32.mrb[0].mxu0
        %v4926 = vadd.f32 0.0, %v4925
        %v4927 = vpop.f32.mrb[0].mxu0
        %v4928 = vadd.f32 0.0, %v4927
        %v4929 = vpop.f32.mrb[0].mxu0
        %v4930 = vadd.f32 0.0, %v4929
        %v4931 = vpop.f32.mrb[0].mxu0
        %v4932 = vadd.f32 0.0, %v4931
        %4933 = vmatprep.mubr.bf16.mxu0 %v1139
        %4934 = vmatmul.mubr.bf16.gmra.mrb[0].mxu0 %v1123
        %v4935 = vpop.f32.mrb[0].mxu0
        %v4936 = vadd.f32 0.0, %v4935
        %v4937 = vpop.f32.mrb[0].mxu0
        %v4938 = vadd.f32 0.0, %v4937
        %v4939 = vpop.f32.mrb[0].mxu0
        %v4940 = vpop.f32.mrb[0].mxu0
        %4941 = vdwg.mxu0
        %4942 = vmatprep.subr.bf16.mxu0 %v3279
        %4943 = vmatpush1.bf16.msra.mxu0 %v3278
        %4944 = vmatprep.subr.bf16.mxu0 %v3294
        %4945 = vmatpush1.bf16.msra.mxu0 %v3293
        %4946 = vmatprep.subr.bf16.mxu0 %v3309
        %4947 = vmatpush1.bf16.msra.mxu0 %v3308
        %4948 = vmatprep.subr.bf16.mxu0 %v3324
        %4949 = vmatpush1.bf16.msra.mxu0 %v3323
        %4950 = vmatprep.subr.bf16.mxu0 %v3339
        %4951 = vmatpush1.bf16.msra.mxu0 %v3338
        %4952 = vmatprep.subr.bf16.mxu0 %v3354
        %4953 = vmatpush1.bf16.msra.mxu0 %v3353
        %4954 = vmatprep.subr.bf16.mxu0 %v3369
        %4955 = vmatpush1.bf16.msra.mxu0 %v3368
        %4956 = vmatprep.subr.bf16.mxu0 %v3384
        %4957 = vmatpush1.bf16.msra.mxu0 %v3383
        %4958 = vmatprep.subr.bf16.mxu0 %v3399
        %4959 = vmatpush1.bf16.msra.mxu0 %v3398
        %4960 = vmatprep.subr.bf16.mxu0 %v3414
        %4961 = vmatpush1.bf16.msra.mxu0 %v3413
        %4962 = vmatprep.subr.bf16.mxu0 %v3429
        %4963 = vmatpush1.bf16.msra.mxu0 %v3428
        %4964 = vmatprep.subr.bf16.mxu0 %v3444
        %4965 = vmatpush1.bf16.msra.mxu0 %v3443
        %4966 = vmatprep.subr.bf16.mxu0 %v3459
        %4967 = vmatpush1.bf16.msra.mxu0 %v3458
        %4968 = vmatprep.subr.bf16.mxu0 %v3474
        %4969 = vmatpush1.bf16.msra.mxu0 %v3473
        %4970 = vmatprep.subr.bf16.mxu0 %v3489
        %4971 = vmatpush1.bf16.msra.mxu0 %v3488
        %4972 = vmatprep.subr.bf16.mxu0 %v3504
        %4973 = vmatpush1.bf16.msra.mxu0 %v3503
        %4974 = vmatprep.mubr.bf16.mxu0 %v1168
        %4975 = vmatmul.mubr.bf16.gmra.mrb[0].mxu0 %v1152
        %v4976 = vpop.f32.mrb[0].mxu0
        %v4977 = vadd.f32 %v4906, %v4976
        %v4978 = vpop.f32.mrb[0].mxu0
        %v4979 = vadd.f32 %v4908, %v4978
        %v4980 = vpop.f32.mrb[0].mxu0
        %v4981 = vadd.f32 %v4910, %v4980
        %v4982 = vpop.f32.mrb[0].mxu0
        %v4983 = vadd.f32 %v4912, %v4982
        %4984 = vmatprep.mubr.bf16.mxu0 %v1169
        %4985 = vmatmul.mubr.bf16.gmra.mrb[0].mxu0 %v1153
        %v4986 = vpop.f32.mrb[0].mxu0
        %v4987 = vadd.f32 %v4916, %v4986
        %v4988 = vpop.f32.mrb[0].mxu0
        %v4989 = vadd.f32 %v4918, %v4988
        %v4990 = vpop.f32.mrb[0].mxu0
        %v4991 = vadd.f32 %v4920, %v4990
        %v4992 = vpop.f32.mrb[0].mxu0
        %v4993 = vadd.f32 %v4922, %v4992
        %4994 = vmatprep.mubr.bf16.mxu0 %v1170
        %4995 = vmatmul.mubr.bf16.gmra.mrb[0].mxu0 %v1154
        %v4996 = vpop.f32.mrb[0].mxu0
        %v4997 = vadd.f32 %v4926, %v4996
        %v4998 = vpop.f32.mrb[0].mxu0
        %v4999 = vadd.f32 %v4928, %v4998
        %v5000 = vpop.f32.mrb[0].mxu0
        %v5001 = vadd.f32 %v4930, %v5000
        %v5002 = vpop.f32.mrb[0].mxu0
        %v5003 = vadd.f32 %v4932, %v5002
        %5004 = vmatprep.mubr.bf16.mxu0 %v1171
        %5005 = vmatmul.mubr.bf16.gmra.mrb[0].mxu0 %v1155
        %v5006 = vpop.f32.mrb[0].mxu0
        %v5007 = vadd.f32 %v4936, %v5006
        %v5008 = vpop.f32.mrb[0].mxu0
        %v5009 = vadd.f32 %v4938, %v5008
        %v5010 = vpop.f32.mrb[0].mxu0
        %v5011 = vpop.f32.mrb[0].mxu0
        %5012 = vdwg.mxu0
        %5013 = vmatprep.subr.bf16.mxu0 %v3519
        %5014 = vmatpush1.bf16.msra.mxu0 %v3518
        %5015 = vmatprep.subr.bf16.mxu0 %v3534
        %5016 = vmatpush1.bf16.msra.mxu0 %v3533
        %5017 = vmatprep.subr.bf16.mxu0 %v3549
        %5018 = vmatpush1.bf16.msra.mxu0 %v3548
        %5019 = vmatprep.subr.bf16.mxu0 %v3564
        %5020 = vmatpush1.bf16.msra.mxu0 %v3563
        %5021 = vmatprep.subr.bf16.mxu0 %v3579
        %5022 = vmatpush1.bf16.msra.mxu0 %v3578
        %5023 = vmatprep.subr.bf16.mxu0 %v3594
        %5024 = vmatpush1.bf16.msra.mxu0 %v3593
        %5025 = vmatprep.subr.bf16.mxu0 %v3609
        %5026 = vmatpush1.bf16.msra.mxu0 %v3608
        %5027 = vmatprep.subr.bf16.mxu0 %v3624
        %5028 = vmatpush1.bf16.msra.mxu0 %v3623
        %5029 = vmatprep.subr.bf16.mxu0 0
        %5030 = vmatpush1.bf16.msra.mxu0 0
        %5031 = vmatprep.subr.bf16.mxu0 0
        %5032 = vmatpush1.bf16.msra.mxu0 0
        %5033 = vmatprep.subr.bf16.mxu0 0
        %5034 = vmatpush1.bf16.msra.mxu0 0
        %5035 = vmatprep.subr.bf16.mxu0 0
        %5036 = vmatpush1.bf16.msra.mxu0 0
        %5037 = vmatprep.subr.bf16.mxu0 0
        %5038 = vmatpush1.bf16.msra.mxu0 0
        %5039 = vmatprep.subr.bf16.mxu0 0
        %5040 = vmatpush1.bf16.msra.mxu0 0
        %5041 = vmatprep.subr.bf16.mxu0 0
        %5042 = vmatpush1.bf16.msra.mxu0 0
        %5043 = vmatprep.subr.bf16.mxu0 0
        %5044 = vmatpush1.bf16.msra.mxu0 0
        %5045 = vmatprep.mubr.bf16.mxu0 0
        %5046 = vmatmul.mubr.bf16.gmra.mrb[0].mxu0 %v1184
        %v5047 = vpop.f32.mrb[0].mxu0
        %v5048 = vadd.f32 %v4977, %v5047
        %v5049 = vpop.f32.mrb[0].mxu0
        %v5050 = vadd.f32 %v4979, %v5049
        %v5051 = vpop.f32.mrb[0].mxu0
        %v5052 = vadd.f32 %v4981, %v5051
        %v5053 = vpop.f32.mrb[0].mxu0
        %v5054 = vadd.f32 %v4983, %v5053
        %5055 = vmatprep.mubr.bf16.mxu0 0
        %5056 = vmatmul.mubr.bf16.gmra.mrb[0].mxu0 %v1185
        %v5057 = vpop.f32.mrb[0].mxu0
        %v5058 = vadd.f32 %v4987, %v5057
        %v5059 = vpop.f32.mrb[0].mxu0
        %v5060 = vadd.f32 %v4989, %v5059
        %v5061 = vpop.f32.mrb[0].mxu0
        %v5062 = vadd.f32 %v4991, %v5061
        %v5063 = vpop.f32.mrb[0].mxu0
        %v5064 = vadd.f32 %v4993, %v5063
        %5065 = vmatprep.mubr.bf16.mxu0 0
        %5066 = vmatmul.mubr.bf16.gmra.mrb[0].mxu0 %v1186
        %v5067 = vpop.f32.mrb[0].mxu0
        %v5068 = vadd.f32 %v4997, %v5067
        %v5069 = vpop.f32.mrb[0].mxu0
        %v5070 = vadd.f32 %v4999, %v5069
        %v5071 = vpop.f32.mrb[0].mxu0
        %v5072 = vadd.f32 %v5001, %v5071
        %v5073 = vpop.f32.mrb[0].mxu0
        %v5074 = vadd.f32 %v5003, %v5073
        %5075 = vmatprep.mubr.bf16.mxu0 0
        %5076 = vmatmul.mubr.bf16.gmra.mrb[0].mxu0 %v1187
        %v5077 = vpop.f32.mrb[0].mxu0
        %v5078 = vadd.f32 %v5007, %v5077
        %v5079 = vpop.f32.mrb[0].mxu0
        %v5080 = vadd.f32 %v5009, %v5079
        %v5081 = vpop.f32.mrb[0].mxu0
        %v5082 = vpop.f32.mrb[0].mxu0
        %5083 = vdwg.mxu0
        %5084 = vmatprep.subr.bf16.mxu0 %v3041
        %5085 = vmatpush1.bf16.msra.mxu0 %v3040
        %5086 = vmatprep.subr.bf16.mxu0 %v3056
        %5087 = vmatpush1.bf16.msra.mxu0 %v3055
        %5088 = vmatprep.subr.bf16.mxu0 %v3071
        %5089 = vmatpush1.bf16.msra.mxu0 %v3070
        %5090 = vmatprep.subr.bf16.mxu0 %v3086
        %5091 = vmatpush1.bf16.msra.mxu0 %v3085
        %5092 = vmatprep.subr.bf16.mxu0 %v3101
        %5093 = vmatpush1.bf16.msra.mxu0 %v3100
        %5094 = vmatprep.subr.bf16.mxu0 %v3116
        %5095 = vmatpush1.bf16.msra.mxu0 %v3115
        %5096 = vmatprep.subr.bf16.mxu0 %v3131
        %5097 = vmatpush1.bf16.msra.mxu0 %v3130
        %5098 = vmatprep.subr.bf16.mxu0 %v3146
        %5099 = vmatpush1.bf16.msra.mxu0 %v3145
        %5100 = vmatprep.subr.bf16.mxu0 %v3161
        %5101 = vmatpush1.bf16.msra.mxu0 %v3160
        %5102 = vmatprep.subr.bf16.mxu0 %v3176
        %5103 = vmatpush1.bf16.msra.mxu0 %v3175
        %5104 = vmatprep.subr.bf16.mxu0 %v3191
        %5105 = vmatpush1.bf16.msra.mxu0 %v3190
        %5106 = vmatprep.subr.bf16.mxu0 %v3206
        %5107 = vmatpush1.bf16.msra.mxu0 %v3205
        %5108 = vmatprep.subr.bf16.mxu0 %v3221
        %5109 = vmatpush1.bf16.msra.mxu0 %v3220
        %5110 = vmatprep.subr.bf16.mxu0 %v3236
        %5111 = vmatpush1.bf16.msra.mxu0 %v3235
        %5112 = vmatprep.subr.bf16.mxu0 %v3251
        %5113 = vmatpush1.bf16.msra.mxu0 %v3250
        %5114 = vmatprep.subr.bf16.mxu0 %v3266
        %5115 = vmatpush1.bf16.msra.mxu0 %v3265
        %5116 = vmatprep.mubr.bf16.mxu0 %v1136
        %5117 = vmatmul.mubr.bf16.gmra.mrb[0].mxu0 %v1120
        %v5118 = vpop.f32.mrb[0].mxu0
        %v5119 = vadd.f32 0.0, %v5118
        %v5120 = vpop.f32.mrb[0].mxu0
        %v5121 = vadd.f32 0.0, %v5120
        %v5122 = vpop.f32.mrb[0].mxu0
        %v5123 = vadd.f32 0.0, %v5122
        %v5124 = vpop.f32.mrb[0].mxu0
        %v5125 = vadd.f32 0.0, %v5124
        %5126 = vmatprep.mubr.bf16.mxu0 %v1137
        %5127 = vmatmul.mubr.bf16.gmra.mrb[0].mxu0 %v1121
        %v5128 = vpop.f32.mrb[0].mxu0
        %v5129 = vadd.f32 0.0, %v5128
        %v5130 = vpop.f32.mrb[0].mxu0
        %v5131 = vadd.f32 0.0, %v5130
        %v5132 = vpop.f32.mrb[0].mxu0
        %v5133 = vadd.f32 0.0, %v5132
        %v5134 = vpop.f32.mrb[0].mxu0
        %v5135 = vadd.f32 0.0, %v5134
        %5136 = vmatprep.mubr.bf16.mxu0 %v1138
        %5137 = vmatmul.mubr.bf16.gmra.mrb[0].mxu0 %v1122
        %v5138 = vpop.f32.mrb[0].mxu0
        %v5139 = vadd.f32 0.0, %v5138
        %v5140 = vpop.f32.mrb[0].mxu0
        %v5141 = vadd.f32 0.0, %v5140
        %v5142 = vpop.f32.mrb[0].mxu0
        %v5143 = vadd.f32 0.0, %v5142
        %v5144 = vpop.f32.mrb[0].mxu0
        %v5145 = vadd.f32 0.0, %v5144
        %5146 = vmatprep.mubr.bf16.mxu0 %v1139
        %5147 = vmatmul.mubr.bf16.gmra.mrb[0].mxu0 %v1123
        %v5148 = vpop.f32.mrb[0].mxu0
        %v5149 = vadd.f32 0.0, %v5148
        %v5150 = vpop.f32.mrb[0].mxu0
        %v5151 = vadd.f32 0.0, %v5150
        %v5152 = vpop.f32.mrb[0].mxu0
        %v5153 = vpop.f32.mrb[0].mxu0
        %5154 = vdwg.mxu0
        %5155 = vmatprep.subr.bf16.mxu0 %v3281
        %5156 = vmatpush1.bf16.msra.mxu0 %v3280
        %5157 = vmatprep.subr.bf16.mxu0 %v3296
        %5158 = vmatpush1.bf16.msra.mxu0 %v3295
        %5159 = vmatprep.subr.bf16.mxu0 %v3311
        %5160 = vmatpush1.bf16.msra.mxu0 %v3310
        %5161 = vmatprep.subr.bf16.mxu0 %v3326
        %5162 = vmatpush1.bf16.msra.mxu0 %v3325
        %5163 = vmatprep.subr.bf16.mxu0 %v3341
        %5164 = vmatpush1.bf16.msra.mxu0 %v3340
        %5165 = vmatprep.subr.bf16.mxu0 %v3356
        %5166 = vmatpush1.bf16.msra.mxu0 %v3355
        %5167 = vmatprep.subr.bf16.mxu0 %v3371
        %5168 = vmatpush1.bf16.msra.mxu0 %v3370
        %5169 = vmatprep.subr.bf16.mxu0 %v3386
        %5170 = vmatpush1.bf16.msra.mxu0 %v3385
        %5171 = vmatprep.subr.bf16.mxu0 %v3401
        %5172 = vmatpush1.bf16.msra.mxu0 %v3400
        %5173 = vmatprep.subr.bf16.mxu0 %v3416
        %5174 = vmatpush1.bf16.msra.mxu0 %v3415
        %5175 = vmatprep.subr.bf16.mxu0 %v3431
        %5176 = vmatpush1.bf16.msra.mxu0 %v3430
        %5177 = vmatprep.subr.bf16.mxu0 %v3446
        %5178 = vmatpush1.bf16.msra.mxu0 %v3445
        %5179 = vmatprep.subr.bf16.mxu0 %v3461
        %5180 = vmatpush1.bf16.msra.mxu0 %v3460
        %5181 = vmatprep.subr.bf16.mxu0 %v3476
        %5182 = vmatpush1.bf16.msra.mxu0 %v3475
        %5183 = vmatprep.subr.bf16.mxu0 %v3491
        %5184 = vmatpush1.bf16.msra.mxu0 %v3490
        %5185 = vmatprep.subr.bf16.mxu0 %v3506
        %5186 = vmatpush1.bf16.msra.mxu0 %v3505
        %5187 = vmatprep.mubr.bf16.mxu0 %v1168
        %5188 = vmatmul.mubr.bf16.gmra.mrb[0].mxu0 %v1152
        %v5189 = vpop.f32.mrb[0].mxu0
        %v5190 = vadd.f32 %v5119, %v5189
        %v5191 = vpop.f32.mrb[0].mxu0
        %v5192 = vadd.f32 %v5121, %v5191
        %v5193 = vpop.f32.mrb[0].mxu0
        %v5194 = vadd.f32 %v5123, %v5193
        %v5195 = vpop.f32.mrb[0].mxu0
        %v5196 = vadd.f32 %v5125, %v5195
        %5197 = vmatprep.mubr.bf16.mxu0 %v1169
        %5198 = vmatmul.mubr.bf16.gmra.mrb[0].mxu0 %v1153
        %v5199 = vpop.f32.mrb[0].mxu0
        %v5200 = vadd.f32 %v5129, %v5199
        %v5201 = vpop.f32.mrb[0].mxu0
        %v5202 = vadd.f32 %v5131, %v5201
        %v5203 = vpop.f32.mrb[0].mxu0
        %v5204 = vadd.f32 %v5133, %v5203
        %v5205 = vpop.f32.mrb[0].mxu0
        %v5206 = vadd.f32 %v5135, %v5205
        %5207 = vmatprep.mubr.bf16.mxu0 %v1170
        %5208 = vmatmul.mubr.bf16.gmra.mrb[0].mxu0 %v1154
        %v5209 = vpop.f32.mrb[0].mxu0
        %v5210 = vadd.f32 %v5139, %v5209
        %v5211 = vpop.f32.mrb[0].mxu0
        %v5212 = vadd.f32 %v5141, %v5211
        %v5213 = vpop.f32.mrb[0].mxu0
        %v5214 = vadd.f32 %v5143, %v5213
        %v5215 = vpop.f32.mrb[0].mxu0
        %v5216 = vadd.f32 %v5145, %v5215
        %5217 = vmatprep.mubr.bf16.mxu0 %v1171
        %5218 = vmatmul.mubr.bf16.gmra.mrb[0].mxu0 %v1155
        %v5219 = vpop.f32.mrb[0].mxu0
        %v5220 = vadd.f32 %v5149, %v5219
        %v5221 = vpop.f32.mrb[0].mxu0
        %v5222 = vadd.f32 %v5151, %v5221
        %v5223 = vpop.f32.mrb[0].mxu0
        %v5224 = vpop.f32.mrb[0].mxu0
        %5225 = vdwg.mxu0
        %5226 = vmatprep.subr.bf16.mxu0 %v3521
        %5227 = vmatpush1.bf16.msra.mxu0 %v3520
        %5228 = vmatprep.subr.bf16.mxu0 %v3536
        %5229 = vmatpush1.bf16.msra.mxu0 %v3535
        %5230 = vmatprep.subr.bf16.mxu0 %v3551
        %5231 = vmatpush1.bf16.msra.mxu0 %v3550
        %5232 = vmatprep.subr.bf16.mxu0 %v3566
        %5233 = vmatpush1.bf16.msra.mxu0 %v3565
        %5234 = vmatprep.subr.bf16.mxu0 %v3581
        %5235 = vmatpush1.bf16.msra.mxu0 %v3580
        %5236 = vmatprep.subr.bf16.mxu0 %v3596
        %5237 = vmatpush1.bf16.msra.mxu0 %v3595
        %5238 = vmatprep.subr.bf16.mxu0 %v3611
        %5239 = vmatpush1.bf16.msra.mxu0 %v3610
        %5240 = vmatprep.subr.bf16.mxu0 %v3626
        %5241 = vmatpush1.bf16.msra.mxu0 %v3625
        %5242 = vmatprep.subr.bf16.mxu0 0
        %5243 = vmatpush1.bf16.msra.mxu0 0
        %5244 = vmatprep.subr.bf16.mxu0 0
        %5245 = vmatpush1.bf16.msra.mxu0 0
        %5246 = vmatprep.subr.bf16.mxu0 0
        %5247 = vmatpush1.bf16.msra.mxu0 0
        %5248 = vmatprep.subr.bf16.mxu0 0
        %5249 = vmatpush1.bf16.msra.mxu0 0
        %5250 = vmatprep.subr.bf16.mxu0 0
        %5251 = vmatpush1.bf16.msra.mxu0 0
        %5252 = vmatprep.subr.bf16.mxu0 0
        %5253 = vmatpush1.bf16.msra.mxu0 0
        %5254 = vmatprep.subr.bf16.mxu0 0
        %5255 = vmatpush1.bf16.msra.mxu0 0
        %5256 = vmatprep.subr.bf16.mxu0 0
        %5257 = vmatpush1.bf16.msra.mxu0 0
        %5258 = vmatprep.mubr.bf16.mxu0 0
        %5259 = vmatmul.mubr.bf16.gmra.mrb[0].mxu0 %v1184
        %v5260 = vpop.f32.mrb[0].mxu0
        %v5261 = vadd.f32 %v5190, %v5260
        %v5262 = vpop.f32.mrb[0].mxu0
        %v5263 = vadd.f32 %v5192, %v5262
        %v5264 = vpop.f32.mrb[0].mxu0
        %v5265 = vadd.f32 %v5194, %v5264
        %v5266 = vpop.f32.mrb[0].mxu0
        %v5267 = vadd.f32 %v5196, %v5266
        %5268 = vmatprep.mubr.bf16.mxu0 0
        %5269 = vmatmul.mubr.bf16.gmra.mrb[0].mxu0 %v1185
        %v5270 = vpop.f32.mrb[0].mxu0
        %v5271 = vadd.f32 %v5200, %v5270
        %v5272 = vpop.f32.mrb[0].mxu0
        %v5273 = vadd.f32 %v5202, %v5272
        %v5274 = vpop.f32.mrb[0].mxu0
        %v5275 = vadd.f32 %v5204, %v5274
        %v5276 = vpop.f32.mrb[0].mxu0
        %v5277 = vadd.f32 %v5206, %v5276
        %5278 = vmatprep.mubr.bf16.mxu0 0
        %5279 = vmatmul.mubr.bf16.gmra.mrb[0].mxu0 %v1186
        %v5280 = vpop.f32.mrb[0].mxu0
        %v5281 = vadd.f32 %v5210, %v5280
        %v5282 = vpop.f32.mrb[0].mxu0
        %v5283 = vadd.f32 %v5212, %v5282
        %v5284 = vpop.f32.mrb[0].mxu0
        %v5285 = vadd.f32 %v5214, %v5284
        %v5286 = vpop.f32.mrb[0].mxu0
        %v5287 = vadd.f32 %v5216, %v5286
        %5288 = vmatprep.mubr.bf16.mxu0 0
        %5289 = vmatmul.mubr.bf16.gmra.mrb[0].mxu0 %v1187
        %v5290 = vpop.f32.mrb[0].mxu0
        %v5291 = vadd.f32 %v5220, %v5290
        %v5292 = vpop.f32.mrb[0].mxu0
        %v5293 = vadd.f32 %v5222, %v5292
        %v5294 = vpop.f32.mrb[0].mxu0
        %v5295 = vpop.f32.mrb[0].mxu0
        %5296 = vdwg.mxu0
        %5297 = vmatprep.subr.bf16.mxu0 %v3043
        %5298 = vmatpush1.bf16.msra.mxu0 %v3042
        %5299 = vmatprep.subr.bf16.mxu0 %v3058
        %5300 = vmatpush1.bf16.msra.mxu0 %v3057
        %5301 = vmatprep.subr.bf16.mxu0 %v3073
        %5302 = vmatpush1.bf16.msra.mxu0 %v3072
        %5303 = vmatprep.subr.bf16.mxu0 %v3088
        %5304 = vmatpush1.bf16.msra.mxu0 %v3087
        %5305 = vmatprep.subr.bf16.mxu0 %v3103
        %5306 = vmatpush1.bf16.msra.mxu0 %v3102
        %5307 = vmatprep.subr.bf16.mxu0 %v3118
        %5308 = vmatpush1.bf16.msra.mxu0 %v3117
        %5309 = vmatprep.subr.bf16.mxu0 %v3133
        %5310 = vmatpush1.bf16.msra.mxu0 %v3132
        %5311 = vmatprep.subr.bf16.mxu0 %v3148
        %5312 = vmatpush1.bf16.msra.mxu0 %v3147
        %5313 = vmatprep.subr.bf16.mxu0 %v3163
        %5314 = vmatpush1.bf16.msra.mxu0 %v3162
        %5315 = vmatprep.subr.bf16.mxu0 %v3178
        %5316 = vmatpush1.bf16.msra.mxu0 %v3177
        %5317 = vmatprep.subr.bf16.mxu0 %v3193
        %5318 = vmatpush1.bf16.msra.mxu0 %v3192
        %5319 = vmatprep.subr.bf16.mxu0 %v3208
        %5320 = vmatpush1.bf16.msra.mxu0 %v3207
        %5321 = vmatprep.subr.bf16.mxu0 %v3223
        %5322 = vmatpush1.bf16.msra.mxu0 %v3222
        %5323 = vmatprep.subr.bf16.mxu0 %v3238
        %5324 = vmatpush1.bf16.msra.mxu0 %v3237
        %5325 = vmatprep.subr.bf16.mxu0 %v3253
        %5326 = vmatpush1.bf16.msra.mxu0 %v3252
        %5327 = vmatprep.subr.bf16.mxu0 %v3268
        %5328 = vmatpush1.bf16.msra.mxu0 %v3267
        %5329 = vmatprep.mubr.bf16.mxu0 %v1136
        %5330 = vmatmul.mubr.bf16.gmra.mrb[0].mxu0 %v1120
        %v5331 = vpop.f32.mrb[0].mxu0
        %v5332 = vadd.f32 0.0, %v5331
        %v5333 = vpop.f32.mrb[0].mxu0
        %v5334 = vadd.f32 0.0, %v5333
        %v5335 = vpop.f32.mrb[0].mxu0
        %v5336 = vadd.f32 0.0, %v5335
        %v5337 = vpop.f32.mrb[0].mxu0
        %v5338 = vadd.f32 0.0, %v5337
        %5339 = vmatprep.mubr.bf16.mxu0 %v1137
        %5340 = vmatmul.mubr.bf16.gmra.mrb[0].mxu0 %v1121
        %v5341 = vpop.f32.mrb[0].mxu0
        %v5342 = vadd.f32 0.0, %v5341
        %v5343 = vpop.f32.mrb[0].mxu0
        %v5344 = vadd.f32 0.0, %v5343
        %v5345 = vpop.f32.mrb[0].mxu0
        %v5346 = vadd.f32 0.0, %v5345
        %v5347 = vpop.f32.mrb[0].mxu0
        %v5348 = vadd.f32 0.0, %v5347
        %5349 = vmatprep.mubr.bf16.mxu0 %v1138
        %5350 = vmatmul.mubr.bf16.gmra.mrb[0].mxu0 %v1122
        %v5351 = vpop.f32.mrb[0].mxu0
        %v5352 = vadd.f32 0.0, %v5351
        %v5353 = vpop.f32.mrb[0].mxu0
        %v5354 = vadd.f32 0.0, %v5353
        %v5355 = vpop.f32.mrb[0].mxu0
        %v5356 = vadd.f32 0.0, %v5355
        %v5357 = vpop.f32.mrb[0].mxu0
        %v5358 = vadd.f32 0.0, %v5357
        %5359 = vmatprep.mubr.bf16.mxu0 %v1139
        %5360 = vmatmul.mubr.bf16.gmra.mrb[0].mxu0 %v1123
        %v5361 = vpop.f32.mrb[0].mxu0
        %v5362 = vadd.f32 0.0, %v5361
        %v5363 = vpop.f32.mrb[0].mxu0
        %v5364 = vadd.f32 0.0, %v5363
        %v5365 = vpop.f32.mrb[0].mxu0
        %v5366 = vpop.f32.mrb[0].mxu0
        %5367 = vdwg.mxu0
        %5368 = vmatprep.subr.bf16.mxu0 %v3283
        %5369 = vmatpush1.bf16.msra.mxu0 %v3282
        %5370 = vmatprep.subr.bf16.mxu0 %v3298
        %5371 = vmatpush1.bf16.msra.mxu0 %v3297
        %5372 = vmatprep.subr.bf16.mxu0 %v3313
        %5373 = vmatpush1.bf16.msra.mxu0 %v3312
        %5374 = vmatprep.subr.bf16.mxu0 %v3328
        %5375 = vmatpush1.bf16.msra.mxu0 %v3327
        %5376 = vmatprep.subr.bf16.mxu0 %v3343
        %5377 = vmatpush1.bf16.msra.mxu0 %v3342
        %5378 = vmatprep.subr.bf16.mxu0 %v3358
        %5379 = vmatpush1.bf16.msra.mxu0 %v3357
        %5380 = vmatprep.subr.bf16.mxu0 %v3373
        %5381 = vmatpush1.bf16.msra.mxu0 %v3372
        %5382 = vmatprep.subr.bf16.mxu0 %v3388
        %5383 = vmatpush1.bf16.msra.mxu0 %v3387
        %5384 = vmatprep.subr.bf16.mxu0 %v3403
        %5385 = vmatpush1.bf16.msra.mxu0 %v3402
        %5386 = vmatprep.subr.bf16.mxu0 %v3418
        %5387 = vmatpush1.bf16.msra.mxu0 %v3417
        %5388 = vmatprep.subr.bf16.mxu0 %v3433
        %5389 = vmatpush1.bf16.msra.mxu0 %v3432
        %5390 = vmatprep.subr.bf16.mxu0 %v3448
        %5391 = vmatpush1.bf16.msra.mxu0 %v3447
        %5392 = vmatprep.subr.bf16.mxu0 %v3463
        %5393 = vmatpush1.bf16.msra.mxu0 %v3462
        %5394 = vmatprep.subr.bf16.mxu0 %v3478
        %5395 = vmatpush1.bf16.msra.mxu0 %v3477
        %5396 = vmatprep.subr.bf16.mxu0 %v3493
        %5397 = vmatpush1.bf16.msra.mxu0 %v3492
        %5398 = vmatprep.subr.bf16.mxu0 %v3508
        %5399 = vmatpush1.bf16.msra.mxu0 %v3507
        %5400 = vmatprep.mubr.bf16.mxu0 %v1168
        %5401 = vmatmul.mubr.bf16.gmra.mrb[0].mxu0 %v1152
        %v5402 = vpop.f32.mrb[0].mxu0
        %v5403 = vadd.f32 %v5332, %v5402
        %v5404 = vpop.f32.mrb[0].mxu0
        %v5405 = vadd.f32 %v5334, %v5404
        %v5406 = vpop.f32.mrb[0].mxu0
        %v5407 = vadd.f32 %v5336, %v5406
        %v5408 = vpop.f32.mrb[0].mxu0
        %v5409 = vadd.f32 %v5338, %v5408
        %5410 = vmatprep.mubr.bf16.mxu0 %v1169
        %5411 = vmatmul.mubr.bf16.gmra.mrb[0].mxu0 %v1153
        %v5412 = vpop.f32.mrb[0].mxu0
        %v5413 = vadd.f32 %v5342, %v5412
        %v5414 = vpop.f32.mrb[0].mxu0
        %v5415 = vadd.f32 %v5344, %v5414
        %v5416 = vpop.f32.mrb[0].mxu0
        %v5417 = vadd.f32 %v5346, %v5416
        %v5418 = vpop.f32.mrb[0].mxu0
        %v5419 = vadd.f32 %v5348, %v5418
        %5420 = vmatprep.mubr.bf16.mxu0 %v1170
        %5421 = vmatmul.mubr.bf16.gmra.mrb[0].mxu0 %v1154
        %v5422 = vpop.f32.mrb[0].mxu0
        %v5423 = vadd.f32 %v5352, %v5422
        %v5424 = vpop.f32.mrb[0].mxu0
        %v5425 = vadd.f32 %v5354, %v5424
        %v5426 = vpop.f32.mrb[0].mxu0
        %v5427 = vadd.f32 %v5356, %v5426
        %v5428 = vpop.f32.mrb[0].mxu0
        %v5429 = vadd.f32 %v5358, %v5428
        %5430 = vmatprep.mubr.bf16.mxu0 %v1171
        %5431 = vmatmul.mubr.bf16.gmra.mrb[0].mxu0 %v1155
        %v5432 = vpop.f32.mrb[0].mxu0
        %v5433 = vadd.f32 %v5362, %v5432
        %v5434 = vpop.f32.mrb[0].mxu0
        %v5435 = vadd.f32 %v5364, %v5434
        %v5436 = vpop.f32.mrb[0].mxu0
        %v5437 = vpop.f32.mrb[0].mxu0
        %5438 = vdwg.mxu0
        %5439 = vmatprep.subr.bf16.mxu0 %v3523
        %5440 = vmatpush1.bf16.msra.mxu0 %v3522
        %5441 = vmatprep.subr.bf16.mxu0 %v3538
        %5442 = vmatpush1.bf16.msra.mxu0 %v3537
        %5443 = vmatprep.subr.bf16.mxu0 %v3553
        %5444 = vmatpush1.bf16.msra.mxu0 %v3552
        %5445 = vmatprep.subr.bf16.mxu0 %v3568
        %5446 = vmatpush1.bf16.msra.mxu0 %v3567
        %5447 = vmatprep.subr.bf16.mxu0 %v3583
        %5448 = vmatpush1.bf16.msra.mxu0 %v3582
        %5449 = vmatprep.subr.bf16.mxu0 %v3598
        %5450 = vmatpush1.bf16.msra.mxu0 %v3597
        %5451 = vmatprep.subr.bf16.mxu0 %v3613
        %5452 = vmatpush1.bf16.msra.mxu0 %v3612
        %5453 = vmatprep.subr.bf16.mxu0 %v3628
        %5454 = vmatpush1.bf16.msra.mxu0 %v3627
        %5455 = vmatprep.subr.bf16.mxu0 0
        %5456 = vmatpush1.bf16.msra.mxu0 0
        %5457 = vmatprep.subr.bf16.mxu0 0
        %5458 = vmatpush1.bf16.msra.mxu0 0
        %5459 = vmatprep.subr.bf16.mxu0 0
        %5460 = vmatpush1.bf16.msra.mxu0 0
        %5461 = vmatprep.subr.bf16.mxu0 0
        %5462 = vmatpush1.bf16.msra.mxu0 0
        %5463 = vmatprep.subr.bf16.mxu0 0
        %5464 = vmatpush1.bf16.msra.mxu0 0
        %5465 = vmatprep.subr.bf16.mxu0 0
        %5466 = vmatpush1.bf16.msra.mxu0 0
        %5467 = vmatprep.subr.bf16.mxu0 0
        %5468 = vmatpush1.bf16.msra.mxu0 0
        %5469 = vmatprep.subr.bf16.mxu0 0
        %5470 = vmatpush1.bf16.msra.mxu0 0
        %5471 = vmatprep.mubr.bf16.mxu0 0
        %5472 = vmatmul.mubr.bf16.gmra.mrb[0].mxu0 %v1184
        %v5473 = vpop.f32.mrb[0].mxu0
        %v5474 = vadd.f32 %v5403, %v5473
        %v5475 = vpop.f32.mrb[0].mxu0
        %v5476 = vadd.f32 %v5405, %v5475
        %v5477 = vpop.f32.mrb[0].mxu0
        %v5478 = vadd.f32 %v5407, %v5477
        %v5479 = vpop.f32.mrb[0].mxu0
        %v5480 = vadd.f32 %v5409, %v5479
        %5481 = vmatprep.mubr.bf16.mxu0 0
        %5482 = vmatmul.mubr.bf16.gmra.mrb[0].mxu0 %v1185
        %v5483 = vpop.f32.mrb[0].mxu0
        %v5484 = vadd.f32 %v5413, %v5483
        %v5485 = vpop.f32.mrb[0].mxu0
        %v5486 = vadd.f32 %v5415, %v5485
        %v5487 = vpop.f32.mrb[0].mxu0
        %v5488 = vadd.f32 %v5417, %v5487
        %v5489 = vpop.f32.mrb[0].mxu0
        %v5490 = vadd.f32 %v5419, %v5489
        %5491 = vmatprep.mubr.bf16.mxu0 0
        %5492 = vmatmul.mubr.bf16.gmra.mrb[0].mxu0 %v1186
        %v5493 = vpop.f32.mrb[0].mxu0
        %v5494 = vadd.f32 %v5423, %v5493
        %v5495 = vpop.f32.mrb[0].mxu0
        %v5496 = vadd.f32 %v5425, %v5495
        %v5497 = vpop.f32.mrb[0].mxu0
        %v5498 = vadd.f32 %v5427, %v5497
        %v5499 = vpop.f32.mrb[0].mxu0
        %v5500 = vadd.f32 %v5429, %v5499
        %5501 = vmatprep.mubr.bf16.mxu0 0
        %5502 = vmatmul.mubr.bf16.gmra.mrb[0].mxu0 %v1187
        %v5503 = vpop.f32.mrb[0].mxu0
        %v5504 = vadd.f32 %v5433, %v5503
        %v5505 = vpop.f32.mrb[0].mxu0
        %v5506 = vadd.f32 %v5435, %v5505
        %v5507 = vpop.f32.mrb[0].mxu0
        %v5508 = vpop.f32.mrb[0].mxu0
        %5509 = vdwg.mxu0
        %5510 = vmatprep.subr.bf16.mxu0 %v3045
        %5511 = vmatpush1.bf16.msra.mxu0 %v3044
        %5512 = vmatprep.subr.bf16.mxu0 %v3060
        %5513 = vmatpush1.bf16.msra.mxu0 %v3059
        %5514 = vmatprep.subr.bf16.mxu0 %v3075
        %5515 = vmatpush1.bf16.msra.mxu0 %v3074
        %5516 = vmatprep.subr.bf16.mxu0 %v3090
        %5517 = vmatpush1.bf16.msra.mxu0 %v3089
        %5518 = vmatprep.subr.bf16.mxu0 %v3105
        %5519 = vmatpush1.bf16.msra.mxu0 %v3104
        %5520 = vmatprep.subr.bf16.mxu0 %v3120
        %5521 = vmatpush1.bf16.msra.mxu0 %v3119
        %5522 = vmatprep.subr.bf16.mxu0 %v3135
        %5523 = vmatpush1.bf16.msra.mxu0 %v3134
        %5524 = vmatprep.subr.bf16.mxu0 %v3150
        %5525 = vmatpush1.bf16.msra.mxu0 %v3149
        %5526 = vmatprep.subr.bf16.mxu0 %v3165
        %5527 = vmatpush1.bf16.msra.mxu0 %v3164
        %5528 = vmatprep.subr.bf16.mxu0 %v3180
        %5529 = vmatpush1.bf16.msra.mxu0 %v3179
        %5530 = vmatprep.subr.bf16.mxu0 %v3195
        %5531 = vmatpush1.bf16.msra.mxu0 %v3194
        %5532 = vmatprep.subr.bf16.mxu0 %v3210
        %5533 = vmatpush1.bf16.msra.mxu0 %v3209
        %5534 = vmatprep.subr.bf16.mxu0 %v3225
        %5535 = vmatpush1.bf16.msra.mxu0 %v3224
        %5536 = vmatprep.subr.bf16.mxu0 %v3240
        %5537 = vmatpush1.bf16.msra.mxu0 %v3239
        %5538 = vmatprep.subr.bf16.mxu0 %v3255
        %5539 = vmatpush1.bf16.msra.mxu0 %v3254
        %5540 = vmatprep.subr.bf16.mxu0 %v3270
        %5541 = vmatpush1.bf16.msra.mxu0 %v3269
        %5542 = vmatprep.mubr.bf16.mxu0 %v1136
        %5543 = vmatmul.mubr.bf16.gmra.mrb[0].mxu0 %v1120
        %v5544 = vpop.f32.mrb[0].mxu0
        %v5545 = vadd.f32 0.0, %v5544
        %v5546 = vpop.f32.mrb[0].mxu0
        %v5547 = vadd.f32 0.0, %v5546
        %v5548 = vpop.f32.mrb[0].mxu0
        %v5549 = vadd.f32 0.0, %v5548
        %v5550 = vpop.f32.mrb[0].mxu0
        %v5551 = vadd.f32 0.0, %v5550
        %5552 = vmatprep.mubr.bf16.mxu0 %v1137
        %5553 = vmatmul.mubr.bf16.gmra.mrb[0].mxu0 %v1121
        %v5554 = vpop.f32.mrb[0].mxu0
        %v5555 = vadd.f32 0.0, %v5554
        %v5556 = vpop.f32.mrb[0].mxu0
        %v5557 = vadd.f32 0.0, %v5556
        %v5558 = vpop.f32.mrb[0].mxu0
        %v5559 = vadd.f32 0.0, %v5558
        %v5560 = vpop.f32.mrb[0].mxu0
        %v5561 = vadd.f32 0.0, %v5560
        %5562 = vmatprep.mubr.bf16.mxu0 %v1138
        %5563 = vmatmul.mubr.bf16.gmra.mrb[0].mxu0 %v1122
        %v5564 = vpop.f32.mrb[0].mxu0
        %v5565 = vadd.f32 0.0, %v5564
        %v5566 = vpop.f32.mrb[0].mxu0
        %v5567 = vadd.f32 0.0, %v5566
        %v5568 = vpop.f32.mrb[0].mxu0
        %v5569 = vadd.f32 0.0, %v5568
        %v5570 = vpop.f32.mrb[0].mxu0
        %v5571 = vadd.f32 0.0, %v5570
        %5572 = vmatprep.mubr.bf16.mxu0 %v1139
        %5573 = vmatmul.mubr.bf16.gmra.mrb[0].mxu0 %v1123
        %v5574 = vpop.f32.mrb[0].mxu0
        %v5575 = vadd.f32 0.0, %v5574
        %v5576 = vpop.f32.mrb[0].mxu0
        %v5577 = vadd.f32 0.0, %v5576
        %v5578 = vpop.f32.mrb[0].mxu0
        %v5579 = vpop.f32.mrb[0].mxu0
        %5580 = vdwg.mxu0
        %5581 = vmatprep.subr.bf16.mxu0 %v3285
        %5582 = vmatpush1.bf16.msra.mxu0 %v3284
        %5583 = vmatprep.subr.bf16.mxu0 %v3300
        %5584 = vmatpush1.bf16.msra.mxu0 %v3299
        %5585 = vmatprep.subr.bf16.mxu0 %v3315
        %5586 = vmatpush1.bf16.msra.mxu0 %v3314
        %5587 = vmatprep.subr.bf16.mxu0 %v3330
        %5588 = vmatpush1.bf16.msra.mxu0 %v3329
        %5589 = vmatprep.subr.bf16.mxu0 %v3345
        %5590 = vmatpush1.bf16.msra.mxu0 %v3344
        %5591 = vmatprep.subr.bf16.mxu0 %v3360
        %5592 = vmatpush1.bf16.msra.mxu0 %v3359
        %5593 = vmatprep.subr.bf16.mxu0 %v3375
        %5594 = vmatpush1.bf16.msra.mxu0 %v3374
        %5595 = vmatprep.subr.bf16.mxu0 %v3390
        %5596 = vmatpush1.bf16.msra.mxu0 %v3389
        %5597 = vmatprep.subr.bf16.mxu0 %v3405
        %5598 = vmatpush1.bf16.msra.mxu0 %v3404
        %5599 = vmatprep.subr.bf16.mxu0 %v3420
        %5600 = vmatpush1.bf16.msra.mxu0 %v3419
        %5601 = vmatprep.subr.bf16.mxu0 %v3435
        %5602 = vmatpush1.bf16.msra.mxu0 %v3434
        %5603 = vmatprep.subr.bf16.mxu0 %v3450
        %5604 = vmatpush1.bf16.msra.mxu0 %v3449
        %5605 = vmatprep.subr.bf16.mxu0 %v3465
        %5606 = vmatpush1.bf16.msra.mxu0 %v3464
        %5607 = vmatprep.subr.bf16.mxu0 %v3480
        %5608 = vmatpush1.bf16.msra.mxu0 %v3479
        %5609 = vmatprep.subr.bf16.mxu0 %v3495
        %5610 = vmatpush1.bf16.msra.mxu0 %v3494
        %5611 = vmatprep.subr.bf16.mxu0 %v3510
        %5612 = vmatpush1.bf16.msra.mxu0 %v3509
        %5613 = vmatprep.mubr.bf16.mxu0 %v1168
        %5614 = vmatmul.mubr.bf16.gmra.mrb[0].mxu0 %v1152
        %v5615 = vpop.f32.mrb[0].mxu0
        %v5616 = vadd.f32 %v5545, %v5615
        %v5617 = vpop.f32.mrb[0].mxu0
        %v5618 = vadd.f32 %v5547, %v5617
        %v5619 = vpop.f32.mrb[0].mxu0
        %v5620 = vadd.f32 %v5549, %v5619
        %v5621 = vpop.f32.mrb[0].mxu0
        %v5622 = vadd.f32 %v5551, %v5621
        %5623 = vmatprep.mubr.bf16.mxu0 %v1169
        %5624 = vmatmul.mubr.bf16.gmra.mrb[0].mxu0 %v1153
        %v5625 = vpop.f32.mrb[0].mxu0
        %v5626 = vadd.f32 %v5555, %v5625
        %v5627 = vpop.f32.mrb[0].mxu0
        %v5628 = vadd.f32 %v5557, %v5627
        %v5629 = vpop.f32.mrb[0].mxu0
        %v5630 = vadd.f32 %v5559, %v5629
        %v5631 = vpop.f32.mrb[0].mxu0
        %v5632 = vadd.f32 %v5561, %v5631
        %5633 = vmatprep.mubr.bf16.mxu0 %v1170
        %5634 = vmatmul.mubr.bf16.gmra.mrb[0].mxu0 %v1154
        %v5635 = vpop.f32.mrb[0].mxu0
        %v5636 = vadd.f32 %v5565, %v5635
        %v5637 = vpop.f32.mrb[0].mxu0
        %v5638 = vadd.f32 %v5567, %v5637
        %v5639 = vpop.f32.mrb[0].mxu0
        %v5640 = vadd.f32 %v5569, %v5639
        %v5641 = vpop.f32.mrb[0].mxu0
        %v5642 = vadd.f32 %v5571, %v5641
        %5643 = vmatprep.mubr.bf16.mxu0 %v1171
        %5644 = vmatmul.mubr.bf16.gmra.mrb[0].mxu0 %v1155
        %v5645 = vpop.f32.mrb[0].mxu0
        %v5646 = vadd.f32 %v5575, %v5645
        %v5647 = vpop.f32.mrb[0].mxu0
        %v5648 = vadd.f32 %v5577, %v5647
        %v5649 = vpop.f32.mrb[0].mxu0
        %v5650 = vpop.f32.mrb[0].mxu0
        %5651 = vdwg.mxu0
        %5652 = vmatprep.subr.bf16.mxu0 %v3525
        %5653 = vmatpush1.bf16.msra.mxu0 %v3524
        %5654 = vmatprep.subr.bf16.mxu0 %v3540
        %5655 = vmatpush1.bf16.msra.mxu0 %v3539
        %5656 = vmatprep.subr.bf16.mxu0 %v3555
        %5657 = vmatpush1.bf16.msra.mxu0 %v3554
        %5658 = vmatprep.subr.bf16.mxu0 %v3570
        %5659 = vmatpush1.bf16.msra.mxu0 %v3569
        %5660 = vmatprep.subr.bf16.mxu0 %v3585
        %5661 = vmatpush1.bf16.msra.mxu0 %v3584
        %5662 = vmatprep.subr.bf16.mxu0 %v3600
        %5663 = vmatpush1.bf16.msra.mxu0 %v3599
        %5664 = vmatprep.subr.bf16.mxu0 %v3615
        %5665 = vmatpush1.bf16.msra.mxu0 %v3614
        %5666 = vmatprep.subr.bf16.mxu0 %v3630
        %5667 = vmatpush1.bf16.msra.mxu0 %v3629
        %5668 = vmatprep.subr.bf16.mxu0 0
        %5669 = vmatpush1.bf16.msra.mxu0 0
        %5670 = vmatprep.subr.bf16.mxu0 0
        %5671 = vmatpush1.bf16.msra.mxu0 0
        %5672 = vmatprep.subr.bf16.mxu0 0
        %5673 = vmatpush1.bf16.msra.mxu0 0
        %5674 = vmatprep.subr.bf16.mxu0 0
        %5675 = vmatpush1.bf16.msra.mxu0 0
        %5676 = vmatprep.subr.bf16.mxu0 0
        %5677 = vmatpush1.bf16.msra.mxu0 0
        %5678 = vmatprep.subr.bf16.mxu0 0
        %5679 = vmatpush1.bf16.msra.mxu0 0
        %5680 = vmatprep.subr.bf16.mxu0 0
        %5681 = vmatpush1.bf16.msra.mxu0 0
        %5682 = vmatprep.subr.bf16.mxu0 0
        %5683 = vmatpush1.bf16.msra.mxu0 0
        %5684 = vmatprep.mubr.bf16.mxu0 0
        %5685 = vmatmul.mubr.bf16.gmra.mrb[0].mxu0 %v1184
        %v5686 = vpop.f32.mrb[0].mxu0
        %v5687 = vadd.f32 %v5616, %v5686
        %v5688 = vpop.f32.mrb[0].mxu0
        %v5689 = vadd.f32 %v5618, %v5688
        %v5690 = vpop.f32.mrb[0].mxu0
        %v5691 = vadd.f32 %v5620, %v5690
        %v5692 = vpop.f32.mrb[0].mxu0
        %v5693 = vadd.f32 %v5622, %v5692
        %5694 = vmatprep.mubr.bf16.mxu0 0
        %5695 = vmatmul.mubr.bf16.gmra.mrb[0].mxu0 %v1185
        %v5696 = vpop.f32.mrb[0].mxu0
        %v5697 = vadd.f32 %v5626, %v5696
        %v5698 = vpop.f32.mrb[0].mxu0
        %v5699 = vadd.f32 %v5628, %v5698
        %v5700 = vpop.f32.mrb[0].mxu0
        %v5701 = vadd.f32 %v5630, %v5700
        %v5702 = vpop.f32.mrb[0].mxu0
        %v5703 = vadd.f32 %v5632, %v5702
        %5704 = vmatprep.mubr.bf16.mxu0 0
        %5705 = vmatmul.mubr.bf16.gmra.mrb[0].mxu0 %v1186
        %v5706 = vpop.f32.mrb[0].mxu0
        %v5707 = vadd.f32 %v5636, %v5706
        %v5708 = vpop.f32.mrb[0].mxu0
        %v5709 = vadd.f32 %v5638, %v5708
        %v5710 = vpop.f32.mrb[0].mxu0
        %v5711 = vadd.f32 %v5640, %v5710
        %v5712 = vpop.f32.mrb[0].mxu0
        %v5713 = vadd.f32 %v5642, %v5712
        %5714 = vmatprep.mubr.bf16.mxu0 0
        %5715 = vmatmul.mubr.bf16.gmra.mrb[0].mxu0 %v1187
        %v5716 = vpop.f32.mrb[0].mxu0
        %v5717 = vadd.f32 %v5646, %v5716
        %v5718 = vpop.f32.mrb[0].mxu0
        %v5719 = vadd.f32 %v5648, %v5718
        %v5720 = vpop.f32.mrb[0].mxu0
        %v5721 = vpop.f32.mrb[0].mxu0
        %5722 = vdwg.mxu0
        %5723 = vmatprep.subr.bf16.mxu0 0
        %5724 = vmatpush1.bf16.msra.mxu0 %v3046
        %5725 = vmatprep.subr.bf16.mxu0 0
        %5726 = vmatpush1.bf16.msra.mxu0 %v3061
        %5727 = vmatprep.subr.bf16.mxu0 0
        %5728 = vmatpush1.bf16.msra.mxu0 %v3076
        %5729 = vmatprep.subr.bf16.mxu0 0
        %5730 = vmatpush1.bf16.msra.mxu0 %v3091
        %5731 = vmatprep.subr.bf16.mxu0 0
        %5732 = vmatpush1.bf16.msra.mxu0 %v3106
        %5733 = vmatprep.subr.bf16.mxu0 0
        %5734 = vmatpush1.bf16.msra.mxu0 %v3121
        %5735 = vmatprep.subr.bf16.mxu0 0
        %5736 = vmatpush1.bf16.msra.mxu0 %v3136
        %5737 = vmatprep.subr.bf16.mxu0 0
        %5738 = vmatpush1.bf16.msra.mxu0 %v3151
        %5739 = vmatprep.subr.bf16.mxu0 0
        %5740 = vmatpush1.bf16.msra.mxu0 %v3166
        %5741 = vmatprep.subr.bf16.mxu0 0
        %5742 = vmatpush1.bf16.msra.mxu0 %v3181
        %5743 = vmatprep.subr.bf16.mxu0 0
        %5744 = vmatpush1.bf16.msra.mxu0 %v3196
        %5745 = vmatprep.subr.bf16.mxu0 0
        %5746 = vmatpush1.bf16.msra.mxu0 %v3211
        %5747 = vmatprep.subr.bf16.mxu0 0
        %5748 = vmatpush1.bf16.msra.mxu0 %v3226
        %5749 = vmatprep.subr.bf16.mxu0 0
        %5750 = vmatpush1.bf16.msra.mxu0 %v3241
        %5751 = vmatprep.subr.bf16.mxu0 0
        %5752 = vmatpush1.bf16.msra.mxu0 %v3256
        %5753 = vmatprep.subr.bf16.mxu0 0
        %5754 = vmatpush1.bf16.msra.mxu0 %v3271
        %5755 = vmatprep.mubr.bf16.mxu0 %v1136
        %5756 = vmatmul.mubr.bf16.gmra.mrb[0].mxu0 %v1120
        %v5757 = vpop.f32.mrb[0].mxu0
        %v5758 = vadd.f32 0.0, %v5757
        %v5759 = vpop.f32.mrb[0].mxu0
        %v5760 = vpop.f32.mrb[0].mxu0
        %v5761 = vadd.f32 0.0, %v5760
        %v5762 = vpop.f32.mrb[0].mxu0
        %5763 = vmatprep.mubr.bf16.mxu0 %v1137
        %5764 = vmatmul.mubr.bf16.gmra.mrb[0].mxu0 %v1121
        %v5765 = vpop.f32.mrb[0].mxu0
        %v5766 = vadd.f32 0.0, %v5765
        %v5767 = vpop.f32.mrb[0].mxu0
        %v5768 = vpop.f32.mrb[0].mxu0
        %v5769 = vadd.f32 0.0, %v5768
        %v5770 = vpop.f32.mrb[0].mxu0
        %5771 = vmatprep.mubr.bf16.mxu0 %v1138
        %5772 = vmatmul.mubr.bf16.gmra.mrb[0].mxu0 %v1122
        %v5773 = vpop.f32.mrb[0].mxu0
        %v5774 = vadd.f32 0.0, %v5773
        %v5775 = vpop.f32.mrb[0].mxu0
        %v5776 = vpop.f32.mrb[0].mxu0
        %v5777 = vadd.f32 0.0, %v5776
        %v5778 = vpop.f32.mrb[0].mxu0
        %5779 = vmatprep.mubr.bf16.mxu0 %v1139
        %5780 = vmatmul.mubr.bf16.gmra.mrb[0].mxu0 %v1123
        %v5781 = vpop.f32.mrb[0].mxu0
        %v5782 = vadd.f32 0.0, %v5781
        %v5783 = vpop.f32.mrb[0].mxu0
        %v5784 = vpop.f32.mrb[0].mxu0
        %v5785 = vpop.f32.mrb[0].mxu0
        %5786 = vdwg.mxu0
        %5787 = vmatprep.subr.bf16.mxu0 0
        %5788 = vmatpush1.bf16.msra.mxu0 %v3286
        %5789 = vmatprep.subr.bf16.mxu0 0
        %5790 = vmatpush1.bf16.msra.mxu0 %v3301
        %5791 = vmatprep.subr.bf16.mxu0 0
        %5792 = vmatpush1.bf16.msra.mxu0 %v3316
        %5793 = vmatprep.subr.bf16.mxu0 0
        %5794 = vmatpush1.bf16.msra.mxu0 %v3331
        %5795 = vmatprep.subr.bf16.mxu0 0
        %5796 = vmatpush1.bf16.msra.mxu0 %v3346
        %5797 = vmatprep.subr.bf16.mxu0 0
        %5798 = vmatpush1.bf16.msra.mxu0 %v3361
        %5799 = vmatprep.subr.bf16.mxu0 0
        %5800 = vmatpush1.bf16.msra.mxu0 %v3376
        %5801 = vmatprep.subr.bf16.mxu0 0
        %5802 = vmatpush1.bf16.msra.mxu0 %v3391
        %5803 = vmatprep.subr.bf16.mxu0 0
        %5804 = vmatpush1.bf16.msra.mxu0 %v3406
        %5805 = vmatprep.subr.bf16.mxu0 0
        %5806 = vmatpush1.bf16.msra.mxu0 %v3421
        %5807 = vmatprep.subr.bf16.mxu0 0
        %5808 = vmatpush1.bf16.msra.mxu0 %v3436
        %5809 = vmatprep.subr.bf16.mxu0 0
        %5810 = vmatpush1.bf16.msra.mxu0 %v3451
        %5811 = vmatprep.subr.bf16.mxu0 0
        %5812 = vmatpush1.bf16.msra.mxu0 %v3466
        %5813 = vmatprep.subr.bf16.mxu0 0
        %5814 = vmatpush1.bf16.msra.mxu0 %v3481
        %5815 = vmatprep.subr.bf16.mxu0 0
        %5816 = vmatpush1.bf16.msra.mxu0 %v3496
        %5817 = vmatprep.subr.bf16.mxu0 0
        %5818 = vmatpush1.bf16.msra.mxu0 %v3511
        %5819 = vmatprep.mubr.bf16.mxu0 %v1168
        %5820 = vmatmul.mubr.bf16.gmra.mrb[0].mxu0 %v1152
        %v5821 = vpop.f32.mrb[0].mxu0
        %v5822 = vadd.f32 %v5758, %v5821
        %v5823 = vpop.f32.mrb[0].mxu0
        %v5824 = vpop.f32.mrb[0].mxu0
        %v5825 = vadd.f32 %v5761, %v5824
        %v5826 = vpop.f32.mrb[0].mxu0
        %5827 = vmatprep.mubr.bf16.mxu0 %v1169
        %5828 = vmatmul.mubr.bf16.gmra.mrb[0].mxu0 %v1153
        %v5829 = vpop.f32.mrb[0].mxu0
        %v5830 = vadd.f32 %v5766, %v5829
        %v5831 = vpop.f32.mrb[0].mxu0
        %v5832 = vpop.f32.mrb[0].mxu0
        %v5833 = vadd.f32 %v5769, %v5832
        %v5834 = vpop.f32.mrb[0].mxu0
        %5835 = vmatprep.mubr.bf16.mxu0 %v1170
        %5836 = vmatmul.mubr.bf16.gmra.mrb[0].mxu0 %v1154
        %v5837 = vpop.f32.mrb[0].mxu0
        %v5838 = vadd.f32 %v5774, %v5837
        %v5839 = vpop.f32.mrb[0].mxu0
        %v5840 = vpop.f32.mrb[0].mxu0
        %v5841 = vadd.f32 %v5777, %v5840
        %v5842 = vpop.f32.mrb[0].mxu0
        %5843 = vmatprep.mubr.bf16.mxu0 %v1171
        %5844 = vmatmul.mubr.bf16.gmra.mrb[0].mxu0 %v1155
        %v5845 = vpop.f32.mrb[0].mxu0
        %v5846 = vadd.f32 %v5782, %v5845
        %v5847 = vpop.f32.mrb[0].mxu0
        %v5848 = vpop.f32.mrb[0].mxu0
        %v5849 = vpop.f32.mrb[0].mxu0
        %5850 = vdwg.mxu0
        %5851 = vmatprep.subr.bf16.mxu0 0
        %5852 = vmatpush1.bf16.msra.mxu0 %v3526
        %5853 = vmatprep.subr.bf16.mxu0 0
        %5854 = vmatpush1.bf16.msra.mxu0 %v3541
        %5855 = vmatprep.subr.bf16.mxu0 0
        %5856 = vmatpush1.bf16.msra.mxu0 %v3556
        %5857 = vmatprep.subr.bf16.mxu0 0
        %5858 = vmatpush1.bf16.msra.mxu0 %v3571
        %5859 = vmatprep.subr.bf16.mxu0 0
        %5860 = vmatpush1.bf16.msra.mxu0 %v3586
        %5861 = vmatprep.subr.bf16.mxu0 0
        %5862 = vmatpush1.bf16.msra.mxu0 %v3601
        %5863 = vmatprep.subr.bf16.mxu0 0
        %5864 = vmatpush1.bf16.msra.mxu0 %v3616
        %5865 = vmatprep.subr.bf16.mxu0 0
        %5866 = vmatpush1.bf16.msra.mxu0 %v3631
        %5867 = vmatprep.subr.bf16.mxu0 0
        %5868 = vmatpush1.bf16.msra.mxu0 0
        %5869 = vmatprep.subr.bf16.mxu0 0
        %5870 = vmatpush1.bf16.msra.mxu0 0
        %5871 = vmatprep.subr.bf16.mxu0 0
        %5872 = vmatpush1.bf16.msra.mxu0 0
        %5873 = vmatprep.subr.bf16.mxu0 0
        %5874 = vmatpush1.bf16.msra.mxu0 0
        %5875 = vmatprep.subr.bf16.mxu0 0
        %5876 = vmatpush1.bf16.msra.mxu0 0
        %5877 = vmatprep.subr.bf16.mxu0 0
        %5878 = vmatpush1.bf16.msra.mxu0 0
        %5879 = vmatprep.subr.bf16.mxu0 0
        %5880 = vmatpush1.bf16.msra.mxu0 0
        %5881 = vmatprep.subr.bf16.mxu0 0
        %5882 = vmatpush1.bf16.msra.mxu0 0
        %5883 = vmatprep.mubr.bf16.mxu0 0
        %5884 = vmatmul.mubr.bf16.gmra.mrb[0].mxu0 %v1184
        %v5885 = vpop.f32.mrb[0].mxu0
        %v5886 = vadd.f32 %v5822, %v5885
        %v5887 = vpop.f32.mrb[0].mxu0
        %v5888 = vpop.f32.mrb[0].mxu0
        %v5889 = vadd.f32 %v5825, %v5888
        %v5890 = vpop.f32.mrb[0].mxu0
        %5891 = vmatprep.mubr.bf16.mxu0 0
        %5892 = vmatmul.mubr.bf16.gmra.mrb[0].mxu0 %v1185
        %v5893 = vpop.f32.mrb[0].mxu0
        %v5894 = vadd.f32 %v5830, %v5893
        %v5895 = vpop.f32.mrb[0].mxu0
        %v5896 = vpop.f32.mrb[0].mxu0
        %v5897 = vadd.f32 %v5833, %v5896
        %v5898 = vpop.f32.mrb[0].mxu0
        %5899 = vmatprep.mubr.bf16.mxu0 0
        %5900 = vmatmul.mubr.bf16.gmra.mrb[0].mxu0 %v1186
        %v5901 = vpop.f32.mrb[0].mxu0
        %v5902 = vadd.f32 %v5838, %v5901
        %v5903 = vpop.f32.mrb[0].mxu0
        %v5904 = vpop.f32.mrb[0].mxu0
        %v5905 = vadd.f32 %v5841, %v5904
        %v5906 = vpop.f32.mrb[0].mxu0
        %5907 = vmatprep.mubr.bf16.mxu0 0
        %5908 = vmatmul.mubr.bf16.gmra.mrb[0].mxu0 %v1187
        %v5909 = vpop.f32.mrb[0].mxu0
        %v5910 = vadd.f32 %v5846, %v5909
        %v5911 = vpop.f32.mrb[0].mxu0
        %v5912 = vpop.f32.mrb[0].mxu0
        %v5913 = vpop.f32.mrb[0].mxu0
        %5914 = vdwg.mxu0
        %5915 = vst [vmem:[%s188] sm:$0xff] %v4409
        %5916 = vst [vmem:[%s188 + $0x8] sm:$0xff] %v4411
        %5917 = vst [vmem:[%s188 + $0x10] sm:$0xff] %v4622
        %5918 = vst [vmem:[%s188 + $0x18] sm:$0xff] %v4624
        %5919 = vst [vmem:[%s188 + $0x20] sm:$0xff] %v4835
        %5920 = vst [vmem:[%s188 + $0x28] sm:$0xff] %v4837
        %5921 = vst [vmem:[%s188 + $0x30] sm:$0xff] %v5048
        %5922 = vst [vmem:[%s188 + $0x38] sm:$0xff] %v5050
        %5923 = vst [vmem:[%s188 + $0x40] sm:$0xff] %v5261
        %5924 = vst [vmem:[%s188 + $0x48] sm:$0xff] %v5263
        %5925 = vst [vmem:[%s188 + $0x50] sm:$0xff] %v5474
        %5926 = vst [vmem:[%s188 + $0x58] sm:$0xff] %v5476
        %5927 = vst [vmem:[%s188 + $0x60] sm:$0xff] %v5687
        %5928 = vst [vmem:[%s188 + $0x68] sm:$0xff] %v5689
        %5929 = vst [vmem:[%s188 + $0x70] sm:$0xff] %v5886
        %5930 = vst [vmem:[%s188 + $0x78] sm:$0xff] %v4413
        %5931 = vst [vmem:[%s188 + $0x80] sm:$0xff] %v4415
        %5932 = vst [vmem:[%s188 + $0x88] sm:$0xff] %v4626
        %5933 = vst [vmem:[%s188 + $0x90] sm:$0xff] %v4628
        %5934 = vst [vmem:[%s188 + $0x98] sm:$0xff] %v4839
        %5935 = vst [vmem:[%s188 + $0xa0] sm:$0xff] %v4841
        %5936 = vst [vmem:[%s188 + $0xa8] sm:$0xff] %v5052
        %5937 = vst [vmem:[%s188 + $0xb0] sm:$0xff] %v5054
        %5938 = vst [vmem:[%s188 + $0xb8] sm:$0xff] %v5265
        %5939 = vst [vmem:[%s188 + $0xc0] sm:$0xff] %v5267
        %5940 = vst [vmem:[%s188 + $0xc8] sm:$0xff] %v5478
        %5941 = vst [vmem:[%s188 + $0xd0] sm:$0xff] %v5480
        %5942 = vst [vmem:[%s188 + $0xd8] sm:$0xff] %v5691
        %5943 = vst [vmem:[%s188 + $0xe0] sm:$0xff] %v5693
        %5944 = vst [vmem:[%s188 + $0xe8] sm:$0xff] %v5889
        %5945 = vst [vmem:[%s188 + $0xf0] sm:$0xff] %v4419
        %5946 = vst [vmem:[%s188 + $0xf8] sm:$0xff] %v4421
        %5947 = vst [vmem:[%s188 + $0x100] sm:$0xff] %v4632
        %5948 = vst [vmem:[%s188 + $0x108] sm:$0xff] %v4634
        %5949 = vst [vmem:[%s188 + $0x110] sm:$0xff] %v4845
        %5950 = vst [vmem:[%s188 + $0x118] sm:$0xff] %v4847
        %5951 = vst [vmem:[%s188 + $0x120] sm:$0xff] %v5058
        %5952 = vst [vmem:[%s188 + $0x128] sm:$0xff] %v5060
        %5953 = vst [vmem:[%s188 + $0x130] sm:$0xff] %v5271
        %5954 = vst [vmem:[%s188 + $0x138] sm:$0xff] %v5273
        %5955 = vst [vmem:[%s188 + $0x140] sm:$0xff] %v5484
        %5956 = vst [vmem:[%s188 + $0x148] sm:$0xff] %v5486
        %5957 = vst [vmem:[%s188 + $0x150] sm:$0xff] %v5697
        %5958 = vst [vmem:[%s188 + $0x158] sm:$0xff] %v5699
        %5959 = vst [vmem:[%s188 + $0x160] sm:$0xff] %v5894
        %5960 = vst [vmem:[%s188 + $0x168] sm:$0xff] %v4423
        %5961 = vst [vmem:[%s188 + $0x170] sm:$0xff] %v4425
        %5962 = vst [vmem:[%s188 + $0x178] sm:$0xff] %v4636
        %5963 = vst [vmem:[%s188 + $0x180] sm:$0xff] %v4638
        %5964 = vst [vmem:[%s188 + $0x188] sm:$0xff] %v4849
        %5965 = vst [vmem:[%s188 + $0x190] sm:$0xff] %v4851
        %5966 = vst [vmem:[%s188 + $0x198] sm:$0xff] %v5062
        %5967 = vst [vmem:[%s188 + $0x1a0] sm:$0xff] %v5064
        %5968 = vst [vmem:[%s188 + $0x1a8] sm:$0xff] %v5275
        %5969 = vst [vmem:[%s188 + $0x1b0] sm:$0xff] %v5277
        %5970 = vst [vmem:[%s188 + $0x1b8] sm:$0xff] %v5488
        %5971 = vst [vmem:[%s188 + $0x1c0] sm:$0xff] %v5490
        %5972 = vst [vmem:[%s188 + $0x1c8] sm:$0xff] %v5701
        %5973 = vst [vmem:[%s188 + $0x1d0] sm:$0xff] %v5703
        %5974 = vst [vmem:[%s188 + $0x1d8] sm:$0xff] %v5897
        %5975 = vst [vmem:[%s188 + $0x1e0] sm:$0xff] %v4429
        %5976 = vst [vmem:[%s188 + $0x1e8] sm:$0xff] %v4431
        %5977 = vst [vmem:[%s188 + $0x1f0] sm:$0xff] %v4642
        %5978 = vst [vmem:[%s188 + $0x1f8] sm:$0xff] %v4644
        %5979 = vst [vmem:[%s188 + $0x200] sm:$0xff] %v4855
        %5980 = vst [vmem:[%s188 + $0x208] sm:$0xff] %v4857
        %5981 = vst [vmem:[%s188 + $0x210] sm:$0xff] %v5068
        %5982 = vst [vmem:[%s188 + $0x218] sm:$0xff] %v5070
        %5983 = vst [vmem:[%s188 + $0x220] sm:$0xff] %v5281
        %5984 = vst [vmem:[%s188 + $0x228] sm:$0xff] %v5283
        %5985 = vst [vmem:[%s188 + $0x230] sm:$0xff] %v5494
        %5986 = vst [vmem:[%s188 + $0x238] sm:$0xff] %v5496
        %5987 = vst [vmem:[%s188 + $0x240] sm:$0xff] %v5707
        %5988 = vst [vmem:[%s188 + $0x248] sm:$0xff] %v5709
        %5989 = vst [vmem:[%s188 + $0x250] sm:$0xff] %v5902
        %5990 = vst [vmem:[%s188 + $0x258] sm:$0xff] %v4433
        %5991 = vst [vmem:[%s188 + $0x260] sm:$0xff] %v4435
        %5992 = vst [vmem:[%s188 + $0x268] sm:$0xff] %v4646
        %5993 = vst [vmem:[%s188 + $0x270] sm:$0xff] %v4648
        %5994 = vst [vmem:[%s188 + $0x278] sm:$0xff] %v4859
        %5995 = vst [vmem:[%s188 + $0x280] sm:$0xff] %v4861
        %5996 = vst [vmem:[%s188 + $0x288] sm:$0xff] %v5072
        %5997 = vst [vmem:[%s188 + $0x290] sm:$0xff] %v5074
        %5998 = vst [vmem:[%s188 + $0x298] sm:$0xff] %v5285
        %5999 = vst [vmem:[%s188 + $0x2a0] sm:$0xff] %v5287
        %6000 = vst [vmem:[%s188 + $0x2a8] sm:$0xff] %v5498
        %6001 = vst [vmem:[%s188 + $0x2b0] sm:$0xff] %v5500
        %6002 = vst [vmem:[%s188 + $0x2b8] sm:$0xff] %v5711
        %6003 = vst [vmem:[%s188 + $0x2c0] sm:$0xff] %v5713
        %6004 = vst [vmem:[%s188 + $0x2c8] sm:$0xff] %v5905
        %6005 = vst [vmem:[%s188 + $0x2d0] sm:$0x1] %v4439
        %6006 = vst [vmem:[%s188 + $0x2d8] sm:$0x1] %v4441
        %6007 = vst [vmem:[%s188 + $0x2e0] sm:$0x1] %v4652
        %6008 = vst [vmem:[%s188 + $0x2e8] sm:$0x1] %v4654
        %6009 = vst [vmem:[%s188 + $0x2f0] sm:$0x1] %v4865
        %6010 = vst [vmem:[%s188 + $0x2f8] sm:$0x1] %v4867
        %6011 = vst [vmem:[%s188 + $0x300] sm:$0x1] %v5078
        %6012 = vst [vmem:[%s188 + $0x308] sm:$0x1] %v5080
        %6013 = vst [vmem:[%s188 + $0x310] sm:$0x1] %v5291
        %6014 = vst [vmem:[%s188 + $0x318] sm:$0x1] %v5293
        %6015 = vst [vmem:[%s188 + $0x320] sm:$0x1] %v5504
        %6016 = vst [vmem:[%s188 + $0x328] sm:$0x1] %v5506
        %6017 = vst [vmem:[%s188 + $0x330] sm:$0x1] %v5717
        %6018 = vst [vmem:[%s188 + $0x338] sm:$0x1] %v5719
        %6019 = vst [vmem:[%s188 + $0x340] sm:$0x1] %v5910
        %s6020 = sand.u32 %s96, 1
        %s6021 = scalar_lea.sflag [#allocation4], %s6020
        %s6022 = sand.u32 %s96, 1
        %s6023 = smul.addr %s6022, 840
        %s6024 = scalar_lea.vmem [#allocation5], %s6023
        // Predicated region
        $region37: #{tpu_custom_call.1} parent=31 // pred_check
          %p6025 = pneg %p106
        $region38: #{tpu_custom_call.1} parent=31 // pred_check_branch
          %6027 = sbr.rel (%p6025) target = $region40
        $region39: #{tpu_custom_call.1} parent=31 // pred_region
          %s6028 = smul.u32 15, %s20
          %s6030 = ssub.s32 13440, 13440
          %6031 = vsyncadd %s6021, %s6030
          %s6032 = smul.addr %s6028, 128
          %s6033 = scalar_lea.hbm %s3, %s6032
          %s6034 = sshll.u32 %s6024, 4
          %s6035 = int_to_ptr.vmem [resolvable:$true] %s6034
          %6040 = dma.vmem_to_hbm [thread:$0]  %s6035, 13440, %s6033, %s6021, 1920, 3840, 120
        $region40: #{tpu_custom_call.1} parent=31 // pred_fallthru
          _
      $region32: #{tpu_custom_call.1} parent=5 // pred_fallthru
        _
      %p6041 = scmp.le.s32.totalorder 2, %s15
      // Predicated region
      $region41: #{tpu_custom_call.1} parent=5 // pred_check
        %p6042 = pneg %p6041
      $region42: #{tpu_custom_call.1} parent=5 // pred_check_branch
        %6044 = sbr.rel (%p6042) target = $region44
      $region43: #{tpu_custom_call.1} parent=5 // pred_region
        %s6045 = ssub.s32 %s15, 2
        // Predicated region
        $region45: #{tpu_custom_call.1} parent=43 // pred_check
          %p6046 = pneg %p112
        $region46: #{tpu_custom_call.1} parent=43 // pred_check_branch
          %6048 = sbr.rel (%p6046) target = $region48
        $region47: #{tpu_custom_call.1} parent=43 // pred_region
          %s6049 = sand.u32 %s97, 1
          %s6050 = scalar_lea.sflag [#allocation4], %s6049
          %s6051 = sand.u32 %s97, 1
          %s6052 = smul.addr %s6051, 840
          %s6053 = scalar_lea.vmem [#allocation5], %s6052
          %6054 = dma.done %s6050, 13440
        $region48: #{tpu_custom_call.1} parent=43 // pred_fallthru
          _
      $region44: #{tpu_custom_call.1} parent=5 // pred_fallthru
        _
    $region6: #{tpu_custom_call.1} parent=1 // loop_footer
      %s19 = sadd.s32 1, %s15
    $region7: #{tpu_custom_call.1} parent=1 // loop_footer_branch
      %14 = sbr.rel target = $region3
    $region8: #{tpu_custom_call.1} parent=1 // loop_exit
      _
    %6055 = vsyncpa [#allocation3], 1
    %s6056 = scalar_lea.sflag [#allocation3], 1
    %6057 = vsyncpa %s6056, 1
    %6058 = vsyncpa [#allocation4], 1
    %s6059 = scalar_lea.sflag [#allocation4], 1
    %6060 = vsyncpa %s6059, 1

</llo_original>
